<compile_context>
chip_gen: v7x
topology: tpu7x:2x2x1
jax: 0.10.0
libtpu: 0.0.40
codegen_flags: <defaults>
</compile_context>

<pallas_src>
import functools
import math

import jax
import jax.numpy as jnp
from jax.experimental import pallas as pl
from jax.experimental.pallas import tpu as pltpu

EPS = 1e-5  # nn.LayerNorm default


# ----------------------------------------------------------------------------- in-kernel helpers
def _layernorm(x, w, b):
    mu = jnp.mean(x, axis=-1, keepdims=True)
    xc = x - mu
    var = jnp.mean(xc * xc, axis=-1, keepdims=True)
    return xc * jax.lax.rsqrt(var + EPS) * w + b


def _gelu(x):
    # TODO(synk): nn.GELU() default is the exact erf GELU; tanh approximation used because
    #             erf lowering in Mosaic is not guaranteed (~1e-3 deviation).
    return 0.5 * x * (1.0 + jnp.tanh(0.7978845608028654 * (x + 0.044715 * x * x * x)))


def _mlp(x, w1, b1, w2, b2):
    # w1/w2 stored bf16; f32 accumulation on the MXU; elementwise math stays f32.
    h = jnp.dot(x.astype(jnp.bfloat16), w1, preferred_element_type=jnp.float32) + b1
    h = _gelu(h)
    return jnp.dot(h.astype(jnp.bfloat16), w2, preferred_element_type=jnp.float32) + b2


def _silu(x):
    return x * jax.nn.sigmoid(x)


def _softplus(x):
    return jnp.maximum(x, 0.0) + jnp.log(1.0 + jnp.exp(-jnp.abs(x)))


# ----------------------------------------------------------------------------- Attention-mixer Block kernel
def attn_block_kernel(x_ref, ln1w, ln1b, w_qkv, w_proj, b_proj, head_mask,
                      ln2w, ln2b, w1, b1, w2, b2, o_ref, *, num_heads):
    x = x_ref[...]                                   # (N, C) f32
    N, C = x.shape
    hd = C // num_heads
    scale = 1.0 / math.sqrt(hd)

    h = _layernorm(x, ln1w[...], ln1b[...])
    qkv = jnp.dot(h.astype(jnp.bfloat16), w_qkv[...],
                  preferred_element_type=jnp.float32)            # (N, 3C) f32
    q = qkv[:, 0:C]                                  # f32 (cast to bf16 only at dot sites)
    k = qkv[:, C:2 * C].astype(jnp.bfloat16)
    v = qkv[:, 2 * C:3 * C]
    masks = head_mask[...]                           # (H, C) f32 one-hot head membership

    # Per-head attention via head-masked full-width matmuls: no head split/stack/concat
    # relayouts, contraction depth C (not head_dim) on the MXU, and each head's PV product
    # lands directly (zero-padded) in the lane-dense (N, C) output slab.
    attn = jnp.zeros((N, C), jnp.float32)
    for hh in range(num_heads):
        m = masks[hh:hh + 1, :]                                       # (1, C)
        qm = (q * m).astype(jnp.bfloat16)                             # zeros outside this head
        s = jnp.einsum('qc,kc->qk', qm, k,
                       preferred_element_type=jnp.float32) * scale    # (N, N) f32
        s = s - jnp.max(s, axis=-1, keepdims=True)
        p = jnp.exp(s)
        p = p / jnp.sum(p, axis=-1, keepdims=True)                    # exact softmax
        vm = (v * m).astype(jnp.bfloat16)                             # only this head's columns
        attn = attn + jnp.dot(p.astype(jnp.bfloat16), vm,
                              preferred_element_type=jnp.float32)
    attn = jnp.dot(attn.astype(jnp.bfloat16), w_proj[...],
                   preferred_element_type=jnp.float32) + b_proj[...]

    x1 = x + attn                                    # residual (gamma_1 == 1, DropPath == id)
    h2 = _layernorm(x1, ln2w[...], ln2b[...])
    o_ref[...] = x1 + _mlp(h2, w1[...], b1[...], w2[...], b2[...])


# ----------------------------------------------------------------------------- MambaVisionMixer Block kernel
def mamba_block_kernel(x_ref, ln1w, ln1b, w_in_x, w_in_z, convx_w, convz_w,
                       w_x_dt, w_dt_full, b_dt_full, A_log_flat,
                       w_x_bfull, w_x_cfull, tile_x, reduce_n, d_row,
                       w_out_y, w_out_z, ln2w, ln2b, w1, b1, w2, b2, o_ref):
    x = x_ref[...]                                   # (N, C) f32
    N = x.shape[0]

    h = _layernorm(x, ln1w[...], ln1b[...])
    hb = h.astype(jnp.bfloat16)
    xs = jnp.dot(hb, w_in_x[...], preferred_element_type=jnp.float32)   # (N, d_half)
    zs = jnp.dot(hb, w_in_z[...], preferred_element_type=jnp.float32)   # (N, d_half)

    def dwconv_silu(inp, w):
        # depthwise conv1d over tokens, kernel 3, 'same' zero padding, no bias.
        n = inp.shape[0]
        row = jax.lax.broadcasted_iota(jnp.int32, inp.shape, 0)
        prev = jnp.where(row >= 1, pltpu.roll(inp, shift=1, axis=0), 0.0)          # x[l-1]
        nxt = jnp.where(row <= n - 2, pltpu.roll(inp, shift=n - 1, axis=0), 0.0)    # x[l+1]
        out = prev * w[0:1, :] + inp * w[1:2, :] + nxt * w[2:3, :]
        return _silu(out)

    xa = dwconv_silu(xs, convx_w[...])               # (N, d_half) f32
    za = dwconv_silu(zs, convz_w[...])               # (N, d_half) f32

    # x_proj / dt_proj with everything produced directly in the lane-dense flattened
    # layout (flat index f = n*d_half + d, width nflat = d_state*d_half = 128):
    #   * dt_proj weight/bias pre-tiled across d_state  -> delta already tiled
    #   * B/C column-expansion selectors folded into the x_proj weights in the wrapper
    #   * u tiled across d_state via a 0/1 selector matmul (MXU is idle here)
    dt_lr = jnp.dot(xa, w_x_dt[...], preferred_element_type=jnp.float32)            # (N, dt_rank)
    dt_full = jnp.dot(dt_lr, w_dt_full[...],
                      preferred_element_type=jnp.float32) + b_dt_full[...]           # (N, nflat)
    # Reference applies dt_proj WITH its bias and ALSO passes delta_bias=dt_proj.bias to
    # selective_scan_fn (which adds it again before softplus) -> bias added twice on purpose.
    delta = _softplus(dt_full + b_dt_full[...])                                       # (N, nflat)

    a_flat = -jnp.exp(A_log_flat[...])                                                # (1, nflat)
    b_full = jnp.dot(xa, w_x_bfull[...], preferred_element_type=jnp.float32)          # (N, nflat)
    c_full = jnp.dot(xa, w_x_cfull[...], preferred_element_type=jnp.float32)          # (N, nflat)
    xa_full = jnp.dot(xa, tile_x[...], preferred_element_type=jnp.float32)            # (N, nflat)

    # ---- selective scan: Hillis-Steele parallel prefix over tokens, lane-dense state ----
    # recurrence  h_l = a_l * h_{l-1} + s_l, with a_l in (0, 1]  (numerically safe)
    a = jnp.exp(delta * a_flat)                      # (N, nflat)
    s = delta * xa_full * b_full                     # (N, nflat)
    row = jax.lax.broadcasted_iota(jnp.int32, a.shape, 0)
    off = 1
    while off < N:                                   # ceil(log2(N)) vectorized rounds
        keep = row >= off
        a_prev = jnp.where(keep, pltpu.roll(a, shift=off, axis=0), 1.0)
        s_prev = jnp.where(keep, pltpu.roll(s, shift=off, axis=0), 0.0)
        s = a * s_prev + s                           # uses OLD a
        a = a * a_prev
        off *= 2
    # s now holds h_l in the flattened layout.

    # y_l[d] = sum_n h_l[n,d] * C_l[n]  + D[d] * u_l[d]   (d_state contraction = selector matmul)
    y = jnp.dot(s * c_full, reduce_n[...],
                preferred_element_type=jnp.float32) + d_row[...] * xa                 # (N, d_half)

    out = jnp.dot(y.astype(jnp.bfloat16), w_out_y[...], preferred_element_type=jnp.float32) \
        + jnp.dot(za.astype(jnp.bfloat16), w_out_z[...], preferred_element_type=jnp.float32)

    x1 = x + out                                     # residual (gamma_1 == 1, DropPath == id)
    h2 = _layernorm(x1, ln2w[...], ln2b[...])
    o_ref[...] = x1 + _mlp(h2, w1[...], b1[...], w2[...], b2[...])


# ----------------------------------------------------------------------------- wrappers
def _x_spec(N, C):
    return pl.BlockSpec((None, N, C), lambda b: (b, 0, 0))


def _weight_spec(arr):
    nd = arr.ndim
    # Constant index map across the batch grid -> single-buffered (no double-buffer VMEM cost).
    return pl.BlockSpec(arr.shape, lambda b, _nd=nd: (0,) * _nd,
                        pipeline_mode=pl.Buffered(1))


_COMPILER_PARAMS = pltpu.CompilerParams(
    dimension_semantics=("parallel",),       # batch -> 2 TCs on v7x; serial loop on v5e/v6e
    vmem_limit_bytes=32 * 1024 * 1024,       # explicit VMEM budget (fits v7x's 64 MiB)
)

# Projection weights fed to the MXU as bf16 (f32 accumulation); LayerNorm params, biases and
# scan parameters stay f32.
def _attn_kernel_params(p, num_heads):
    dim = p["ln1_w"].shape[-1]
    hd = dim // num_heads
    head_ids = jnp.arange(dim) // hd
    head_mask = (head_ids[None, :] == jnp.arange(num_heads)[:, None]).astype(jnp.float32)
    bf = jnp.bfloat16
    return [
        p["ln1_w"], p["ln1_b"],
        p["w_qkv"].astype(bf), p["w_proj"].astype(bf), p["b_proj"], head_mask,
        p["ln2_w"], p["ln2_b"],
        p["w_fc1"].astype(bf), p["b_fc1"], p["w_fc2"].astype(bf), p["b_fc2"],
    ]


def _mamba_kernel_params(p, d_state, dt_rank):
    d_half = p["w_dt"].shape[1]
    nflat = d_state * d_half
    # flat index f = n * d_half + d
    f_n = jnp.repeat(jnp.arange(d_state), d_half)                  # (nflat,)
    f_d = jnp.tile(jnp.arange(d_half), d_state)                    # (nflat,)
    expand_n = (jnp.arange(d_state)[:, None] == f_n[None, :]).astype(jnp.float32)   # (d_state, nflat)
    tile_x = (jnp.arange(d_half)[:, None] == f_d[None, :]).astype(jnp.float32)      # (d_half, nflat)
    reduce_n = tile_x.T                                            # (nflat, d_half)

    w_xproj = p["w_xproj"]
    w_x_dt = w_xproj[:, :dt_rank]
    w_x_bfull = w_xproj[:, dt_rank:dt_rank + d_state] @ expand_n              # (d_half, nflat)
    w_x_cfull = w_xproj[:, dt_rank + d_state:dt_rank + 2 * d_state] @ expand_n
    w_dt_full = jnp.tile(p["w_dt"], (1, d_state))                             # (dt_rank, nflat)
    b_dt_full = jnp.tile(p["b_dt"], (1, d_state))                             # (1, nflat)
    a_log_flat = p["A_log_t"].reshape(1, nflat)

    w_in, w_out = p["w_in"], p["w_out"]
    bf = jnp.bfloat16
    return [
        p["ln1_w"], p["ln1_b"],
        w_in[:, :d_half].astype(bf), w_in[:, d_half:].astype(bf),
        p["conv_x_w"], p["conv_z_w"],
        w_x_dt, w_dt_full, b_dt_full, a_log_flat,
        w_x_bfull, w_x_cfull, tile_x, reduce_n, p["D"],
        w_out[:d_half, :].astype(bf), w_out[d_half:, :].astype(bf),
        p["ln2_w"], p["ln2_b"],
        p["w_fc1"].astype(bf), p["b_fc1"], p["w_fc2"].astype(bf), p["b_fc2"],
    ]


def attention_block_forward(x, p, num_heads):
    B, N, C = x.shape
    params = _attn_kernel_params(p, num_heads)
    return pl.pallas_call(
        functools.partial(attn_block_kernel, num_heads=num_heads),
        out_shape=jax.ShapeDtypeStruct((B, N, C), jnp.float32),
        grid=(B,),
        in_specs=[_x_spec(N, C)] + [_weight_spec(a) for a in params],
        out_specs=_x_spec(N, C),
        compiler_params=_COMPILER_PARAMS,
    )(x, *params)


def mamba_block_forward(x, p, d_state, dt_rank):
    B, N, C = x.shape
    params = _mamba_kernel_params(p, d_state, dt_rank)
    return pl.pallas_call(
        mamba_block_kernel,
        out_shape=jax.ShapeDtypeStruct((B, N, C), jnp.float32),
        grid=(B,),
        in_specs=[_x_spec(N, C)] + [_weight_spec(a) for a in params],
        out_specs=_x_spec(N, C),
        compiler_params=_COMPILER_PARAMS,
    )(x, *params)


# ----------------------------------------------------------------------------- parameter init (deterministic, synthetic)
def _norm(key, shape, scale=0.05):
    return (scale * jax.random.normal(key, shape)).astype(jnp.float32)


def init_attention_block_params(key, dim, mlp_hidden):
    ks = jax.random.split(key, 4)
    return {
        "ln1_w": jnp.ones((1, dim), jnp.float32), "ln1_b": jnp.zeros((1, dim), jnp.float32),
        "w_qkv": _norm(ks[0], (dim, 3 * dim)),                  # qkv_bias=False
        "w_proj": _norm(ks[1], (dim, dim)), "b_proj": jnp.zeros((1, dim), jnp.float32),
        "ln2_w": jnp.ones((1, dim), jnp.float32), "ln2_b": jnp.zeros((1, dim), jnp.float32),
        "w_fc1": _norm(ks[2], (dim, mlp_hidden)), "b_fc1": jnp.zeros((1, mlp_hidden), jnp.float32),
        "w_fc2": _norm(ks[3], (mlp_hidden, dim)), "b_fc2": jnp.zeros((1, dim), jnp.float32),
    }


def init_mamba_block_params(key, dim, d_state, d_conv, expand, mlp_hidden):
    d_inner = int(expand * dim)
    d_half = d_inner // 2
    dt_rank = math.ceil(dim / 16)
    ks = jax.random.split(key, 8)
    dt_init_std = dt_rank ** (-0.5)
    w_dt = jax.random.uniform(ks[4], (dt_rank, d_half),
                              minval=-dt_init_std, maxval=dt_init_std).astype(jnp.float32)
    dt = jnp.exp(jax.random.uniform(ks[5], (d_half,)) *
                 (math.log(0.1) - math.log(0.001)) + math.log(0.001))
    dt = jnp.maximum(dt, 1e-4)
    inv_dt = dt + jnp.log(-jnp.expm1(-dt))
    # A_log stored transposed (d_state, d_half) to match the flattened f = n*d_half+d layout
    A_log_t = jnp.log(jnp.broadcast_to(
        jnp.arange(1, d_state + 1, dtype=jnp.float32)[:, None], (d_state, d_half)))
    return {
        "ln1_w": jnp.ones((1, dim), jnp.float32), "ln1_b": jnp.zeros((1, dim), jnp.float32),
        "w_in": _norm(ks[0], (dim, d_inner)),                   # in_proj, bias=False
        "conv_x_w": _norm(ks[1], (d_conv, d_half), 0.2),        # conv bias = True//2 = 0 -> none
        "conv_z_w": _norm(ks[2], (d_conv, d_half), 0.2),
        "w_xproj": _norm(ks[3], (d_half, dt_rank + 2 * d_state)),
        "w_dt": w_dt, "b_dt": inv_dt.reshape(1, d_half).astype(jnp.float32),
        "A_log_t": A_log_t.astype(jnp.float32),
        "D": jnp.ones((1, d_half), jnp.float32),
        "w_out": _norm(ks[6], (d_inner, dim)),                  # out_proj, bias=False
        "ln2_w": jnp.ones((1, dim), jnp.float32), "ln2_b": jnp.zeros((1, dim), jnp.float32),
        "w_fc1": _norm(ks[7], (dim, mlp_hidden)), "b_fc1": jnp.zeros((1, mlp_hidden), jnp.float32),
        "w_fc2": _norm(jax.random.fold_in(key, 99), (mlp_hidden, dim)),
        "b_fc2": jnp.zeros((1, dim), jnp.float32),
    }


class BlockPallas:
    """JAX/Pallas equivalent of MambaVision `Block` (drop/drop_path=0, layer_scale=None)."""

    def __init__(self, dim, num_heads, counter, transformer_blocks, mlp_ratio=4.0, key=None):
        key = jax.random.PRNGKey(0) if key is None else key
        mlp_hidden = int(dim * mlp_ratio)
        self.num_heads = num_heads
        self.is_attention = counter in transformer_blocks
        if self.is_attention:
            self.params = init_attention_block_params(key, dim, mlp_hidden)
        else:
            self.d_state, self.d_conv, self.expand = 8, 3, 1
            self.dt_rank = math.ceil(dim / 16)
            self.params = init_mamba_block_params(key, dim, self.d_state, self.d_conv,
                                                  self.expand, mlp_hidden)

    def __call__(self, x):
        if self.is_attention:
            return attention_block_forward(x, self.params, self.num_heads)
        return mamba_block_forward(x, self.params, self.d_state, self.dt_rank)


# ----------------------------------------------------------------------------- main
if __name__ == "__main__":
    dim, num_heads = 32, 8
    B, N = 2, 64            # 2 images, 8x8 tokens flattened
    key = jax.random.PRNGKey(0)
    kx, k0, k1 = jax.random.split(key, 3)
    x = jax.random.normal(kx, (B, N, dim), dtype=jnp.float32)

    # counter 0 -> MambaVisionMixer path, counter 1 -> Attention path (as in the depth schedule)
    block_mamba = BlockPallas(dim, num_heads, counter=0, transformer_blocks=[1], key=k0)
    block_attn = BlockPallas(dim, num_heads, counter=1, transformer_blocks=[1], key=k1)

    y = block_mamba(x)
    y = block_attn(y)
    y = jax.block_until_ready(y)

    assert y.shape == (B, N, dim)
    assert bool(jnp.all(jnp.isfinite(y)))
    print("KERNEL_OK")
</pallas_src>

<mosaic_0001>
module attributes {stable_mosaic.version = 11 : i64} {
  func.func @mamba_block_kernel(%arg0: i32, %arg1: memref<1x64x32xf32, #tpu.memory_space<vmem>>, %arg2: memref<1x32xf32, #tpu.memory_space<vmem>>, %arg3: memref<1x32xf32, #tpu.memory_space<vmem>>, %arg4: memref<32x16xbf16, #tpu.memory_space<vmem>>, %arg5: memref<32x16xbf16, #tpu.memory_space<vmem>>, %arg6: memref<3x16xf32, #tpu.memory_space<vmem>>, %arg7: memref<3x16xf32, #tpu.memory_space<vmem>>, %arg8: memref<16x2xf32, #tpu.memory_space<vmem>>, %arg9: memref<2x128xf32, #tpu.memory_space<vmem>>, %arg10: memref<1x128xf32, #tpu.memory_space<vmem>>, %arg11: memref<1x128xf32, #tpu.memory_space<vmem>>, %arg12: memref<16x128xf32, #tpu.memory_space<vmem>>, %arg13: memref<16x128xf32, #tpu.memory_space<vmem>>, %arg14: memref<16x128xf32, #tpu.memory_space<vmem>>, %arg15: memref<128x16xf32, #tpu.memory_space<vmem>>, %arg16: memref<1x16xf32, #tpu.memory_space<vmem>>, %arg17: memref<16x32xbf16, #tpu.memory_space<vmem>>, %arg18: memref<16x32xbf16, #tpu.memory_space<vmem>>, %arg19: memref<1x32xf32, #tpu.memory_space<vmem>>, %arg20: memref<1x32xf32, #tpu.memory_space<vmem>>, %arg21: memref<32x128xbf16, #tpu.memory_space<vmem>>, %arg22: memref<1x128xf32, #tpu.memory_space<vmem>>, %arg23: memref<128x32xbf16, #tpu.memory_space<vmem>>, %arg24: memref<1x32xf32, #tpu.memory_space<vmem>>, %arg25: memref<1x64x32xf32, #tpu.memory_space<vmem>>) attributes {dimension_semantics = [#tpu.dimension_semantics<parallel>], iteration_bounds = array<i64: 2>, scalar_prefetch = 0 : i64, scratch_operands = 0 : i64, tpu.core_type = #tpu.core_type<tc>, window_params = [{transform_indices = @transform_0, window_bounds = array<i64: 1, 64, 32>}, {pipeline_mode = #tpu.pipeline_mode<synchronous>, transform_indices = @transform_1, window_bounds = array<i64: 1, 32>}, {pipeline_mode = #tpu.pipeline_mode<synchronous>, transform_indices = @transform_2, window_bounds = array<i64: 1, 32>}, {pipeline_mode = #tpu.pipeline_mode<synchronous>, transform_indices = @transform_3, window_bounds = array<i64: 32, 16>}, {pipeline_mode = #tpu.pipeline_mode<synchronous>, transform_indices = @transform_4, window_bounds = array<i64: 32, 16>}, {pipeline_mode = #tpu.pipeline_mode<synchronous>, transform_indices = @transform_5, window_bounds = array<i64: 3, 16>}, {pipeline_mode = #tpu.pipeline_mode<synchronous>, transform_indices = @transform_6, window_bounds = array<i64: 3, 16>}, {pipeline_mode = #tpu.pipeline_mode<synchronous>, transform_indices = @transform_7, window_bounds = array<i64: 16, 2>}, {pipeline_mode = #tpu.pipeline_mode<synchronous>, transform_indices = @transform_8, window_bounds = array<i64: 2, 128>}, {pipeline_mode = #tpu.pipeline_mode<synchronous>, transform_indices = @transform_9, window_bounds = array<i64: 1, 128>}, {pipeline_mode = #tpu.pipeline_mode<synchronous>, transform_indices = @transform_10, window_bounds = array<i64: 1, 128>}, {pipeline_mode = #tpu.pipeline_mode<synchronous>, transform_indices = @transform_11, window_bounds = array<i64: 16, 128>}, {pipeline_mode = #tpu.pipeline_mode<synchronous>, transform_indices = @transform_12, window_bounds = array<i64: 16, 128>}, {pipeline_mode = #tpu.pipeline_mode<synchronous>, transform_indices = @transform_13, window_bounds = array<i64: 16, 128>}, {pipeline_mode = #tpu.pipeline_mode<synchronous>, transform_indices = @transform_14, window_bounds = array<i64: 128, 16>}, {pipeline_mode = #tpu.pipeline_mode<synchronous>, transform_indices = @transform_15, window_bounds = array<i64: 1, 16>}, {pipeline_mode = #tpu.pipeline_mode<synchronous>, transform_indices = @transform_16, window_bounds = array<i64: 16, 32>}, {pipeline_mode = #tpu.pipeline_mode<synchronous>, transform_indices = @transform_17, window_bounds = array<i64: 16, 32>}, {pipeline_mode = #tpu.pipeline_mode<synchronous>, transform_indices = @transform_18, window_bounds = array<i64: 1, 32>}, {pipeline_mode = #tpu.pipeline_mode<synchronous>, transform_indices = @transform_19, window_bounds = array<i64: 1, 32>}, {pipeline_mode = #tpu.pipeline_mode<synchronous>, transform_indices = @transform_20, window_bounds = array<i64: 32, 128>}, {pipeline_mode = #tpu.pipeline_mode<synchronous>, transform_indices = @transform_21, window_bounds = array<i64: 1, 128>}, {pipeline_mode = #tpu.pipeline_mode<synchronous>, transform_indices = @transform_22, window_bounds = array<i64: 128, 32>}, {pipeline_mode = #tpu.pipeline_mode<synchronous>, transform_indices = @transform_23, window_bounds = array<i64: 1, 32>}, {transform_indices = @transform_24, window_bounds = array<i64: 1, 64, 32>}]} {
    %c0 = arith.constant 0 : index
    %c0_0 = arith.constant 0 : index
    %c0_1 = arith.constant 0 : index
    %0 = vector.load %arg1[%c0, %c0_0, %c0_1] : memref<1x64x32xf32, #tpu.memory_space<vmem>>, vector<1x64x32xf32>
    %1 = vector.shape_cast %0 : vector<1x64x32xf32> to vector<64x32xf32>
    %c0_2 = arith.constant 0 : index
    %c0_3 = arith.constant 0 : index
    %2 = vector.load %arg2[%c0_2, %c0_3] : memref<1x32xf32, #tpu.memory_space<vmem>>, vector<1x32xf32>
    %c0_4 = arith.constant 0 : index
    %c0_5 = arith.constant 0 : index
    %3 = vector.load %arg3[%c0_4, %c0_5] : memref<1x32xf32, #tpu.memory_space<vmem>>, vector<1x32xf32>
    %cst = arith.constant dense<0.000000e+00> : vector<64xf32>
    %4 = vector.multi_reduction <add>, %1, %cst [1] : vector<64x32xf32> to vector<64xf32>
    %5 = vector.shape_cast %4 : vector<64xf32> to vector<64x1xf32>
    %cst_6 = arith.constant 3.200000e+01 : f32
    %6 = vector.broadcast %cst_6 : f32 to vector<64x1xf32>
    %7 = arith.divf %5, %6 : vector<64x1xf32>
    %8 = vector.broadcast %7 : vector<64x1xf32> to vector<64x32xf32>
    %9 = arith.subf %1, %8 : vector<64x32xf32>
    %10 = arith.mulf %9, %9 : vector<64x32xf32>
    %cst_7 = arith.constant dense<0.000000e+00> : vector<64xf32>
    %11 = vector.multi_reduction <add>, %10, %cst_7 [1] : vector<64x32xf32> to vector<64xf32>
    %12 = vector.shape_cast %11 : vector<64xf32> to vector<64x1xf32>
    %cst_8 = arith.constant 3.200000e+01 : f32
    %13 = vector.broadcast %cst_8 : f32 to vector<64x1xf32>
    %14 = arith.divf %12, %13 : vector<64x1xf32>
    %cst_9 = arith.constant 9.99999974E-6 : f32
    %15 = vector.broadcast %cst_9 : f32 to vector<64x1xf32>
    %16 = arith.addf %14, %15 : vector<64x1xf32>
    %17 = math.rsqrt %16 : vector<64x1xf32>
    %18 = vector.broadcast %17 : vector<64x1xf32> to vector<64x32xf32>
    %19 = arith.mulf %9, %18 : vector<64x32xf32>
    %20 = vector.broadcast %2 : vector<1x32xf32> to vector<64x32xf32>
    %21 = arith.mulf %19, %20 : vector<64x32xf32>
    %22 = vector.broadcast %3 : vector<1x32xf32> to vector<64x32xf32>
    %23 = arith.addf %21, %22 : vector<64x32xf32>
    %24 = arith.truncf %23 : vector<64x32xf32> to vector<64x32xbf16>
    %c0_10 = arith.constant 0 : index
    %c0_11 = arith.constant 0 : index
    %25 = vector.load %arg4[%c0_10, %c0_11] : memref<32x16xbf16, #tpu.memory_space<vmem>>, vector<32x16xbf16>
    %cst_12 = arith.constant dense<0.000000e+00> : vector<64x16xf32>
    %26 = tpu.matmul %24, %25, %cst_12 {dimension_numbers = #tpu.dot_dimension_numbers<[1], [0], [0], [1], [0, 0, 1, 1], [], []>} : vector<64x32xbf16>, vector<32x16xbf16>, vector<64x16xf32> -> vector<64x16xf32>
    %c0_13 = arith.constant 0 : index
    %c0_14 = arith.constant 0 : index
    %27 = vector.load %arg5[%c0_13, %c0_14] : memref<32x16xbf16, #tpu.memory_space<vmem>>, vector<32x16xbf16>
    %cst_15 = arith.constant dense<0.000000e+00> : vector<64x16xf32>
    %28 = tpu.matmul %24, %27, %cst_15 {dimension_numbers = #tpu.dot_dimension_numbers<[1], [0], [0], [1], [0, 0, 1, 1], [], []>} : vector<64x32xbf16>, vector<32x16xbf16>, vector<64x16xf32> -> vector<64x16xf32>
    %c0_16 = arith.constant 0 : index
    %c0_17 = arith.constant 0 : index
    %29 = vector.load %arg6[%c0_16, %c0_17] : memref<3x16xf32, #tpu.memory_space<vmem>>, vector<3x16xf32>
    %30 = tpu.iota {dimensions = array<i32: 0>} : vector<64x16xi32>
    %c1_i32 = arith.constant 1 : i32
    %31 = vector.broadcast %c1_i32 : i32 to vector<64x16xi32>
    %32 = arith.cmpi sge, %30, %31 : vector<64x16xi32>
    %c1_i32_18 = arith.constant 1 : i32
    %33 = tpu.dynamic_rotate %26 by %c1_i32_18 dim 0 : vector<64x16xf32>, i32 -> vector<64x16xf32>
    %cst_19 = arith.constant 0.000000e+00 : f32
    %34 = vector.broadcast %cst_19 : f32 to vector<64x16xf32>
    %35 = arith.select %32, %33, %34 : vector<64x16xi1>, vector<64x16xf32>
    %c62_i32 = arith.constant 62 : i32
    %36 = vector.broadcast %c62_i32 : i32 to vector<64x16xi32>
    %37 = arith.cmpi sle, %30, %36 : vector<64x16xi32>
    %c63_i32 = arith.constant 63 : i32
    %38 = tpu.dynamic_rotate %26 by %c63_i32 dim 0 : vector<64x16xf32>, i32 -> vector<64x16xf32>
    %cst_20 = arith.constant 0.000000e+00 : f32
    %39 = vector.broadcast %cst_20 : f32 to vector<64x16xf32>
    %40 = arith.select %37, %38, %39 : vector<64x16xi1>, vector<64x16xf32>
    %41 = vector.extract_strided_slice %29 {offsets = [0, 0], sizes = [1, 16], strides = [1, 1]} : vector<3x16xf32> to vector<1x16xf32>
    %42 = vector.broadcast %41 : vector<1x16xf32> to vector<64x16xf32>
    %43 = arith.mulf %35, %42 : vector<64x16xf32>
    %44 = vector.extract_strided_slice %29 {offsets = [1, 0], sizes = [1, 16], strides = [1, 1]} : vector<3x16xf32> to vector<1x16xf32>
    %45 = vector.broadcast %44 : vector<1x16xf32> to vector<64x16xf32>
    %46 = arith.mulf %26, %45 : vector<64x16xf32>
    %47 = arith.addf %43, %46 : vector<64x16xf32>
    %48 = vector.extract_strided_slice %29 {offsets = [2, 0], sizes = [1, 16], strides = [1, 1]} : vector<3x16xf32> to vector<1x16xf32>
    %49 = vector.broadcast %48 : vector<1x16xf32> to vector<64x16xf32>
    %50 = arith.mulf %40, %49 : vector<64x16xf32>
    %51 = arith.addf %47, %50 : vector<64x16xf32>
    %52 = arith.negf %51 : vector<64x16xf32>
    %53 = math.exp %52 : vector<64x16xf32>
    %cst_21 = arith.constant 1.000000e+00 : f32
    %54 = vector.broadcast %cst_21 : f32 to vector<64x16xf32>
    %55 = arith.addf %54, %53 : vector<64x16xf32>
    %56 = arith.divf %54, %55 : vector<64x16xf32>
    %57 = arith.mulf %51, %56 : vector<64x16xf32>
    %c0_22 = arith.constant 0 : index
    %c0_23 = arith.constant 0 : index
    %58 = vector.load %arg7[%c0_22, %c0_23] : memref<3x16xf32, #tpu.memory_space<vmem>>, vector<3x16xf32>
    %59 = tpu.iota {dimensions = array<i32: 0>} : vector<64x16xi32>
    %c1_i32_24 = arith.constant 1 : i32
    %60 = vector.broadcast %c1_i32_24 : i32 to vector<64x16xi32>
    %61 = arith.cmpi sge, %59, %60 : vector<64x16xi32>
    %c1_i32_25 = arith.constant 1 : i32
    %62 = tpu.dynamic_rotate %28 by %c1_i32_25 dim 0 : vector<64x16xf32>, i32 -> vector<64x16xf32>
    %cst_26 = arith.constant 0.000000e+00 : f32
    %63 = vector.broadcast %cst_26 : f32 to vector<64x16xf32>
    %64 = arith.select %61, %62, %63 : vector<64x16xi1>, vector<64x16xf32>
    %c62_i32_27 = arith.constant 62 : i32
    %65 = vector.broadcast %c62_i32_27 : i32 to vector<64x16xi32>
    %66 = arith.cmpi sle, %59, %65 : vector<64x16xi32>
    %c63_i32_28 = arith.constant 63 : i32
    %67 = tpu.dynamic_rotate %28 by %c63_i32_28 dim 0 : vector<64x16xf32>, i32 -> vector<64x16xf32>
    %cst_29 = arith.constant 0.000000e+00 : f32
    %68 = vector.broadcast %cst_29 : f32 to vector<64x16xf32>
    %69 = arith.select %66, %67, %68 : vector<64x16xi1>, vector<64x16xf32>
    %70 = vector.extract_strided_slice %58 {offsets = [0, 0], sizes = [1, 16], strides = [1, 1]} : vector<3x16xf32> to vector<1x16xf32>
    %71 = vector.broadcast %70 : vector<1x16xf32> to vector<64x16xf32>
    %72 = arith.mulf %64, %71 : vector<64x16xf32>
    %73 = vector.extract_strided_slice %58 {offsets = [1, 0], sizes = [1, 16], strides = [1, 1]} : vector<3x16xf32> to vector<1x16xf32>
    %74 = vector.broadcast %73 : vector<1x16xf32> to vector<64x16xf32>
    %75 = arith.mulf %28, %74 : vector<64x16xf32>
    %76 = arith.addf %72, %75 : vector<64x16xf32>
    %77 = vector.extract_strided_slice %58 {offsets = [2, 0], sizes = [1, 16], strides = [1, 1]} : vector<3x16xf32> to vector<1x16xf32>
    %78 = vector.broadcast %77 : vector<1x16xf32> to vector<64x16xf32>
    %79 = arith.mulf %69, %78 : vector<64x16xf32>
    %80 = arith.addf %76, %79 : vector<64x16xf32>
    %81 = arith.negf %80 : vector<64x16xf32>
    %82 = math.exp %81 : vector<64x16xf32>
    %cst_30 = arith.constant 1.000000e+00 : f32
    %83 = vector.broadcast %cst_30 : f32 to vector<64x16xf32>
    %84 = arith.addf %83, %82 : vector<64x16xf32>
    %85 = arith.divf %83, %84 : vector<64x16xf32>
    %86 = arith.mulf %80, %85 : vector<64x16xf32>
    %c0_31 = arith.constant 0 : index
    %c0_32 = arith.constant 0 : index
    %87 = vector.load %arg8[%c0_31, %c0_32] : memref<16x2xf32, #tpu.memory_space<vmem>>, vector<16x2xf32>
    %cst_33 = arith.constant dense<0.000000e+00> : vector<64x2xf32>
    %88 = tpu.matmul %57, %87, %cst_33 {dimension_numbers = #tpu.dot_dimension_numbers<[1], [0], [0], [1], [0, 0, 1, 1], [], []>} : vector<64x16xf32>, vector<16x2xf32>, vector<64x2xf32> -> vector<64x2xf32>
    %c0_34 = arith.constant 0 : index
    %c0_35 = arith.constant 0 : index
    %89 = vector.load %arg9[%c0_34, %c0_35] : memref<2x128xf32, #tpu.memory_space<vmem>>, vector<2x128xf32>
    %cst_36 = arith.constant dense<0.000000e+00> : vector<64x128xf32>
    %90 = tpu.matmul %88, %89, %cst_36 {dimension_numbers = #tpu.dot_dimension_numbers<[1], [0], [0], [1], [0, 0, 1, 1], [], []>} : vector<64x2xf32>, vector<2x128xf32>, vector<64x128xf32> -> vector<64x128xf32>
    %c0_37 = arith.constant 0 : index
    %c0_38 = arith.constant 0 : index
    %91 = vector.load %arg10[%c0_37, %c0_38] : memref<1x128xf32, #tpu.memory_space<vmem>>, vector<1x128xf32>
    %92 = vector.broadcast %91 : vector<1x128xf32> to vector<64x128xf32>
    %93 = arith.addf %90, %92 : vector<64x128xf32>
    %c0_39 = arith.constant 0 : index
    %c0_40 = arith.constant 0 : index
    %94 = vector.load %arg10[%c0_39, %c0_40] : memref<1x128xf32, #tpu.memory_space<vmem>>, vector<1x128xf32>
    %95 = vector.broadcast %94 : vector<1x128xf32> to vector<64x128xf32>
    %96 = arith.addf %93, %95 : vector<64x128xf32>
    %cst_41 = arith.constant 0.000000e+00 : f32
    %97 = vector.broadcast %cst_41 : f32 to vector<64x128xf32>
    %98 = arith.maximumf %96, %97 : vector<64x128xf32>
    %99 = math.absf %96 : vector<64x128xf32>
    %cst_42 = arith.constant 0.000000e+00 : f32
    %100 = vector.broadcast %cst_42 : f32 to vector<64x128xf32>
    %101 = arith.subf %100, %99 : vector<64x128xf32>
    %102 = math.exp %101 : vector<64x128xf32>
    %cst_43 = arith.constant 1.000000e+00 : f32
    %103 = vector.broadcast %cst_43 : f32 to vector<64x128xf32>
    %104 = arith.addf %103, %102 : vector<64x128xf32>
    %105 = math.log %104 : vector<64x128xf32>
    %106 = arith.addf %98, %105 : vector<64x128xf32>
    %c0_44 = arith.constant 0 : index
    %c0_45 = arith.constant 0 : index
    %107 = vector.load %arg11[%c0_44, %c0_45] : memref<1x128xf32, #tpu.memory_space<vmem>>, vector<1x128xf32>
    %108 = math.exp %107 : vector<1x128xf32>
    %cst_46 = arith.constant 0.000000e+00 : f32
    %109 = vector.broadcast %cst_46 : f32 to vector<1x128xf32>
    %110 = arith.subf %109, %108 : vector<1x128xf32>
    %c0_47 = arith.constant 0 : index
    %c0_48 = arith.constant 0 : index
    %111 = vector.load %arg12[%c0_47, %c0_48] : memref<16x128xf32, #tpu.memory_space<vmem>>, vector<16x128xf32>
    %cst_49 = arith.constant dense<0.000000e+00> : vector<64x128xf32>
    %112 = tpu.matmul %57, %111, %cst_49 {dimension_numbers = #tpu.dot_dimension_numbers<[1], [0], [0], [1], [0, 0, 1, 1], [], []>} : vector<64x16xf32>, vector<16x128xf32>, vector<64x128xf32> -> vector<64x128xf32>
    %c0_50 = arith.constant 0 : index
    %c0_51 = arith.constant 0 : index
    %113 = vector.load %arg13[%c0_50, %c0_51] : memref<16x128xf32, #tpu.memory_space<vmem>>, vector<16x128xf32>
    %cst_52 = arith.constant dense<0.000000e+00> : vector<64x128xf32>
    %114 = tpu.matmul %57, %113, %cst_52 {dimension_numbers = #tpu.dot_dimension_numbers<[1], [0], [0], [1], [0, 0, 1, 1], [], []>} : vector<64x16xf32>, vector<16x128xf32>, vector<64x128xf32> -> vector<64x128xf32>
    %c0_53 = arith.constant 0 : index
    %c0_54 = arith.constant 0 : index
    %115 = vector.load %arg14[%c0_53, %c0_54] : memref<16x128xf32, #tpu.memory_space<vmem>>, vector<16x128xf32>
    %cst_55 = arith.constant dense<0.000000e+00> : vector<64x128xf32>
    %116 = tpu.matmul %57, %115, %cst_55 {dimension_numbers = #tpu.dot_dimension_numbers<[1], [0], [0], [1], [0, 0, 1, 1], [], []>} : vector<64x16xf32>, vector<16x128xf32>, vector<64x128xf32> -> vector<64x128xf32>
    %117 = vector.broadcast %110 : vector<1x128xf32> to vector<64x128xf32>
    %118 = arith.mulf %106, %117 : vector<64x128xf32>
    %119 = math.exp %118 : vector<64x128xf32>
    %120 = arith.mulf %106, %116 : vector<64x128xf32>
    %121 = arith.mulf %120, %112 : vector<64x128xf32>
    %122 = tpu.iota {dimensions = array<i32: 0>} : vector<64x128xi32>
    %c1_i32_56 = arith.constant 1 : i32
    %123 = vector.broadcast %c1_i32_56 : i32 to vector<64x128xi32>
    %124 = arith.cmpi sge, %122, %123 : vector<64x128xi32>
    %c1_i32_57 = arith.constant 1 : i32
    %125 = tpu.dynamic_rotate %119 by %c1_i32_57 dim 0 : vector<64x128xf32>, i32 -> vector<64x128xf32>
    %cst_58 = arith.constant 1.000000e+00 : f32
    %126 = vector.broadcast %cst_58 : f32 to vector<64x128xf32>
    %127 = arith.select %124, %125, %126 : vector<64x128xi1>, vector<64x128xf32>
    %c1_i32_59 = arith.constant 1 : i32
    %128 = tpu.dynamic_rotate %121 by %c1_i32_59 dim 0 : vector<64x128xf32>, i32 -> vector<64x128xf32>
    %cst_60 = arith.constant 0.000000e+00 : f32
    %129 = vector.broadcast %cst_60 : f32 to vector<64x128xf32>
    %130 = arith.select %124, %128, %129 : vector<64x128xi1>, vector<64x128xf32>
    %131 = arith.mulf %119, %130 : vector<64x128xf32>
    %132 = arith.addf %131, %121 : vector<64x128xf32>
    %133 = arith.mulf %119, %127 : vector<64x128xf32>
    %c2_i32 = arith.constant 2 : i32
    %134 = vector.broadcast %c2_i32 : i32 to vector<64x128xi32>
    %135 = arith.cmpi sge, %122, %134 : vector<64x128xi32>
    %c2_i32_61 = arith.constant 2 : i32
    %136 = tpu.dynamic_rotate %133 by %c2_i32_61 dim 0 : vector<64x128xf32>, i32 -> vector<64x128xf32>
    %cst_62 = arith.constant 1.000000e+00 : f32
    %137 = vector.broadcast %cst_62 : f32 to vector<64x128xf32>
    %138 = arith.select %135, %136, %137 : vector<64x128xi1>, vector<64x128xf32>
    %c2_i32_63 = arith.constant 2 : i32
    %139 = tpu.dynamic_rotate %132 by %c2_i32_63 dim 0 : vector<64x128xf32>, i32 -> vector<64x128xf32>
    %cst_64 = arith.constant 0.000000e+00 : f32
    %140 = vector.broadcast %cst_64 : f32 to vector<64x128xf32>
    %141 = arith.select %135, %139, %140 : vector<64x128xi1>, vector<64x128xf32>
    %142 = arith.mulf %133, %141 : vector<64x128xf32>
    %143 = arith.addf %142, %132 : vector<64x128xf32>
    %144 = arith.mulf %133, %138 : vector<64x128xf32>
    %c4_i32 = arith.constant 4 : i32
    %145 = vector.broadcast %c4_i32 : i32 to vector<64x128xi32>
    %146 = arith.cmpi sge, %122, %145 : vector<64x128xi32>
    %c4_i32_65 = arith.constant 4 : i32
    %147 = tpu.dynamic_rotate %144 by %c4_i32_65 dim 0 : vector<64x128xf32>, i32 -> vector<64x128xf32>
    %cst_66 = arith.constant 1.000000e+00 : f32
    %148 = vector.broadcast %cst_66 : f32 to vector<64x128xf32>
    %149 = arith.select %146, %147, %148 : vector<64x128xi1>, vector<64x128xf32>
    %c4_i32_67 = arith.constant 4 : i32
    %150 = tpu.dynamic_rotate %143 by %c4_i32_67 dim 0 : vector<64x128xf32>, i32 -> vector<64x128xf32>
    %cst_68 = arith.constant 0.000000e+00 : f32
    %151 = vector.broadcast %cst_68 : f32 to vector<64x128xf32>
    %152 = arith.select %146, %150, %151 : vector<64x128xi1>, vector<64x128xf32>
    %153 = arith.mulf %144, %152 : vector<64x128xf32>
    %154 = arith.addf %153, %143 : vector<64x128xf32>
    %155 = arith.mulf %144, %149 : vector<64x128xf32>
    %c8_i32 = arith.constant 8 : i32
    %156 = vector.broadcast %c8_i32 : i32 to vector<64x128xi32>
    %157 = arith.cmpi sge, %122, %156 : vector<64x128xi32>
    %c8_i32_69 = arith.constant 8 : i32
    %158 = tpu.dynamic_rotate %155 by %c8_i32_69 dim 0 : vector<64x128xf32>, i32 -> vector<64x128xf32>
    %cst_70 = arith.constant 1.000000e+00 : f32
    %159 = vector.broadcast %cst_70 : f32 to vector<64x128xf32>
    %160 = arith.select %157, %158, %159 : vector<64x128xi1>, vector<64x128xf32>
    %c8_i32_71 = arith.constant 8 : i32
    %161 = tpu.dynamic_rotate %154 by %c8_i32_71 dim 0 : vector<64x128xf32>, i32 -> vector<64x128xf32>
    %cst_72 = arith.constant 0.000000e+00 : f32
    %162 = vector.broadcast %cst_72 : f32 to vector<64x128xf32>
    %163 = arith.select %157, %161, %162 : vector<64x128xi1>, vector<64x128xf32>
    %164 = arith.mulf %155, %163 : vector<64x128xf32>
    %165 = arith.addf %164, %154 : vector<64x128xf32>
    %166 = arith.mulf %155, %160 : vector<64x128xf32>
    %c16_i32 = arith.constant 16 : i32
    %167 = vector.broadcast %c16_i32 : i32 to vector<64x128xi32>
    %168 = arith.cmpi sge, %122, %167 : vector<64x128xi32>
    %c16_i32_73 = arith.constant 16 : i32
    %169 = tpu.dynamic_rotate %166 by %c16_i32_73 dim 0 : vector<64x128xf32>, i32 -> vector<64x128xf32>
    %cst_74 = arith.constant 1.000000e+00 : f32
    %170 = vector.broadcast %cst_74 : f32 to vector<64x128xf32>
    %171 = arith.select %168, %169, %170 : vector<64x128xi1>, vector<64x128xf32>
    %c16_i32_75 = arith.constant 16 : i32
    %172 = tpu.dynamic_rotate %165 by %c16_i32_75 dim 0 : vector<64x128xf32>, i32 -> vector<64x128xf32>
    %cst_76 = arith.constant 0.000000e+00 : f32
    %173 = vector.broadcast %cst_76 : f32 to vector<64x128xf32>
    %174 = arith.select %168, %172, %173 : vector<64x128xi1>, vector<64x128xf32>
    %175 = arith.mulf %166, %174 : vector<64x128xf32>
    %176 = arith.addf %175, %165 : vector<64x128xf32>
    %177 = arith.mulf %166, %171 : vector<64x128xf32>
    %c32_i32 = arith.constant 32 : i32
    %178 = vector.broadcast %c32_i32 : i32 to vector<64x128xi32>
    %179 = arith.cmpi sge, %122, %178 : vector<64x128xi32>
    %c32_i32_77 = arith.constant 32 : i32
    %180 = tpu.dynamic_rotate %176 by %c32_i32_77 dim 0 : vector<64x128xf32>, i32 -> vector<64x128xf32>
    %cst_78 = arith.constant 0.000000e+00 : f32
    %181 = vector.broadcast %cst_78 : f32 to vector<64x128xf32>
    %182 = arith.select %179, %180, %181 : vector<64x128xi1>, vector<64x128xf32>
    %183 = arith.mulf %177, %182 : vector<64x128xf32>
    %184 = arith.addf %183, %176 : vector<64x128xf32>
    %185 = arith.mulf %184, %114 : vector<64x128xf32>
    %c0_79 = arith.constant 0 : index
    %c0_80 = arith.constant 0 : index
    %186 = vector.load %arg15[%c0_79, %c0_80] : memref<128x16xf32, #tpu.memory_space<vmem>>, vector<128x16xf32>
    %cst_81 = arith.constant dense<0.000000e+00> : vector<64x16xf32>
    %187 = tpu.matmul %185, %186, %cst_81 {dimension_numbers = #tpu.dot_dimension_numbers<[1], [0], [0], [1], [0, 0, 1, 1], [], []>} : vector<64x128xf32>, vector<128x16xf32>, vector<64x16xf32> -> vector<64x16xf32>
    %c0_82 = arith.constant 0 : index
    %c0_83 = arith.constant 0 : index
    %188 = vector.load %arg16[%c0_82, %c0_83] : memref<1x16xf32, #tpu.memory_space<vmem>>, vector<1x16xf32>
    %189 = vector.broadcast %188 : vector<1x16xf32> to vector<64x16xf32>
    %190 = arith.mulf %189, %57 : vector<64x16xf32>
    %191 = arith.addf %187, %190 : vector<64x16xf32>
    %192 = arith.truncf %191 : vector<64x16xf32> to vector<64x16xbf16>
    %c0_84 = arith.constant 0 : index
    %c0_85 = arith.constant 0 : index
    %193 = vector.load %arg17[%c0_84, %c0_85] : memref<16x32xbf16, #tpu.memory_space<vmem>>, vector<16x32xbf16>
    %cst_86 = arith.constant dense<0.000000e+00> : vector<64x32xf32>
    %194 = tpu.matmul %192, %193, %cst_86 {dimension_numbers = #tpu.dot_dimension_numbers<[1], [0], [0], [1], [0, 0, 1, 1], [], []>} : vector<64x16xbf16>, vector<16x32xbf16>, vector<64x32xf32> -> vector<64x32xf32>
    %195 = arith.truncf %86 : vector<64x16xf32> to vector<64x16xbf16>
    %c0_87 = arith.constant 0 : index
    %c0_88 = arith.constant 0 : index
    %196 = vector.load %arg18[%c0_87, %c0_88] : memref<16x32xbf16, #tpu.memory_space<vmem>>, vector<16x32xbf16>
    %cst_89 = arith.constant dense<0.000000e+00> : vector<64x32xf32>
    %197 = tpu.matmul %195, %196, %cst_89 {dimension_numbers = #tpu.dot_dimension_numbers<[1], [0], [0], [1], [0, 0, 1, 1], [], []>} : vector<64x16xbf16>, vector<16x32xbf16>, vector<64x32xf32> -> vector<64x32xf32>
    %198 = arith.addf %194, %197 : vector<64x32xf32>
    %199 = arith.addf %1, %198 : vector<64x32xf32>
    %c0_90 = arith.constant 0 : index
    %c0_91 = arith.constant 0 : index
    %200 = vector.load %arg19[%c0_90, %c0_91] : memref<1x32xf32, #tpu.memory_space<vmem>>, vector<1x32xf32>
    %c0_92 = arith.constant 0 : index
    %c0_93 = arith.constant 0 : index
    %201 = vector.load %arg20[%c0_92, %c0_93] : memref<1x32xf32, #tpu.memory_space<vmem>>, vector<1x32xf32>
    %cst_94 = arith.constant dense<0.000000e+00> : vector<64xf32>
    %202 = vector.multi_reduction <add>, %199, %cst_94 [1] : vector<64x32xf32> to vector<64xf32>
    %203 = vector.shape_cast %202 : vector<64xf32> to vector<64x1xf32>
    %cst_95 = arith.constant 3.200000e+01 : f32
    %204 = vector.broadcast %cst_95 : f32 to vector<64x1xf32>
    %205 = arith.divf %203, %204 : vector<64x1xf32>
    %206 = vector.broadcast %205 : vector<64x1xf32> to vector<64x32xf32>
    %207 = arith.subf %199, %206 : vector<64x32xf32>
    %208 = arith.mulf %207, %207 : vector<64x32xf32>
    %cst_96 = arith.constant dense<0.000000e+00> : vector<64xf32>
    %209 = vector.multi_reduction <add>, %208, %cst_96 [1] : vector<64x32xf32> to vector<64xf32>
    %210 = vector.shape_cast %209 : vector<64xf32> to vector<64x1xf32>
    %cst_97 = arith.constant 3.200000e+01 : f32
    %211 = vector.broadcast %cst_97 : f32 to vector<64x1xf32>
    %212 = arith.divf %210, %211 : vector<64x1xf32>
    %cst_98 = arith.constant 9.99999974E-6 : f32
    %213 = vector.broadcast %cst_98 : f32 to vector<64x1xf32>
    %214 = arith.addf %212, %213 : vector<64x1xf32>
    %215 = math.rsqrt %214 : vector<64x1xf32>
    %216 = vector.broadcast %215 : vector<64x1xf32> to vector<64x32xf32>
    %217 = arith.mulf %207, %216 : vector<64x32xf32>
    %218 = vector.broadcast %200 : vector<1x32xf32> to vector<64x32xf32>
    %219 = arith.mulf %217, %218 : vector<64x32xf32>
    %220 = vector.broadcast %201 : vector<1x32xf32> to vector<64x32xf32>
    %221 = arith.addf %219, %220 : vector<64x32xf32>
    %c0_99 = arith.constant 0 : index
    %c0_100 = arith.constant 0 : index
    %222 = vector.load %arg21[%c0_99, %c0_100] : memref<32x128xbf16, #tpu.memory_space<vmem>>, vector<32x128xbf16>
    %c0_101 = arith.constant 0 : index
    %c0_102 = arith.constant 0 : index
    %223 = vector.load %arg22[%c0_101, %c0_102] : memref<1x128xf32, #tpu.memory_space<vmem>>, vector<1x128xf32>
    %c0_103 = arith.constant 0 : index
    %c0_104 = arith.constant 0 : index
    %224 = vector.load %arg23[%c0_103, %c0_104] : memref<128x32xbf16, #tpu.memory_space<vmem>>, vector<128x32xbf16>
    %c0_105 = arith.constant 0 : index
    %c0_106 = arith.constant 0 : index
    %225 = vector.load %arg24[%c0_105, %c0_106] : memref<1x32xf32, #tpu.memory_space<vmem>>, vector<1x32xf32>
    %226 = arith.truncf %221 : vector<64x32xf32> to vector<64x32xbf16>
    %cst_107 = arith.constant dense<0.000000e+00> : vector<64x128xf32>
    %227 = tpu.matmul %226, %222, %cst_107 {dimension_numbers = #tpu.dot_dimension_numbers<[1], [0], [0], [1], [0, 0, 1, 1], [], []>} : vector<64x32xbf16>, vector<32x128xbf16>, vector<64x128xf32> -> vector<64x128xf32>
    %228 = vector.broadcast %223 : vector<1x128xf32> to vector<64x128xf32>
    %229 = arith.addf %227, %228 : vector<64x128xf32>
    %cst_108 = arith.constant 5.000000e-01 : f32
    %230 = vector.broadcast %cst_108 : f32 to vector<64x128xf32>
    %231 = arith.mulf %230, %229 : vector<64x128xf32>
    %cst_109 = arith.constant 4.471500e-02 : f32
    %232 = vector.broadcast %cst_109 : f32 to vector<64x128xf32>
    %233 = arith.mulf %232, %229 : vector<64x128xf32>
    %234 = arith.mulf %233, %229 : vector<64x128xf32>
    %235 = arith.mulf %234, %229 : vector<64x128xf32>
    %236 = arith.addf %229, %235 : vector<64x128xf32>
    %cst_110 = arith.constant 0.797884583 : f32
    %237 = vector.broadcast %cst_110 : f32 to vector<64x128xf32>
    %238 = arith.mulf %237, %236 : vector<64x128xf32>
    %239 = math.tanh %238 : vector<64x128xf32>
    %cst_111 = arith.constant 1.000000e+00 : f32
    %240 = vector.broadcast %cst_111 : f32 to vector<64x128xf32>
    %241 = arith.addf %240, %239 : vector<64x128xf32>
    %242 = arith.mulf %231, %241 : vector<64x128xf32>
    %243 = arith.truncf %242 : vector<64x128xf32> to vector<64x128xbf16>
    %cst_112 = arith.constant dense<0.000000e+00> : vector<64x32xf32>
    %244 = tpu.matmul %243, %224, %cst_112 {dimension_numbers = #tpu.dot_dimension_numbers<[1], [0], [0], [1], [0, 0, 1, 1], [], []>} : vector<64x128xbf16>, vector<128x32xbf16>, vector<64x32xf32> -> vector<64x32xf32>
    %245 = vector.broadcast %225 : vector<1x32xf32> to vector<64x32xf32>
    %246 = arith.addf %244, %245 : vector<64x32xf32>
    %247 = arith.addf %199, %246 : vector<64x32xf32>
    %c0_113 = arith.constant 0 : index
    %c0_114 = arith.constant 0 : index
    %c0_115 = arith.constant 0 : index
    %248 = vector.load %arg25[%c0_113, %c0_114, %c0_115] : memref<1x64x32xf32, #tpu.memory_space<vmem>>, vector<1x64x32xf32>
    %249 = vector.shape_cast %248 : vector<1x64x32xf32> to vector<64x32xf32>
    %250 = vector.shape_cast %247 : vector<64x32xf32> to vector<1x64x32xf32>
    tpu.vector_store %arg25[%c0_113, %c0_114, %c0_115], %250 {strides = array<i32>} : memref<1x64x32xf32, #tpu.memory_space<vmem>>, vector<1x64x32xf32>,
    return
  }
  func.func @transform_0(%arg0: i32) -> (i32, i32, i32) {
    %c0_i32 = arith.constant 0 : i32
    %c0_i32_0 = arith.constant 0 : i32
    %c0_i32_1 = arith.constant 0 : i32
    return %arg0, %c0_i32, %c0_i32_0 : i32, i32, i32
  }
  func.func @transform_1(%arg0: i32) -> (i32, i32) {
    %c0_i32 = arith.constant 0 : i32
    %c0_i32_0 = arith.constant 0 : i32
    %c0_i32_1 = arith.constant 0 : i32
    return %c0_i32, %c0_i32_0 : i32, i32
  }
  func.func @transform_2(%arg0: i32) -> (i32, i32) {
    %c0_i32 = arith.constant 0 : i32
    %c0_i32_0 = arith.constant 0 : i32
    %c0_i32_1 = arith.constant 0 : i32
    return %c0_i32, %c0_i32_0 : i32, i32
  }
  func.func @transform_3(%arg0: i32) -> (i32, i32) {
    %c0_i32 = arith.constant 0 : i32
    %c0_i32_0 = arith.constant 0 : i32
    %c0_i32_1 = arith.constant 0 : i32
    return %c0_i32, %c0_i32_0 : i32, i32
  }
  func.func @transform_4(%arg0: i32) -> (i32, i32) {
    %c0_i32 = arith.constant 0 : i32
    %c0_i32_0 = arith.constant 0 : i32
    %c0_i32_1 = arith.constant 0 : i32
    return %c0_i32, %c0_i32_0 : i32, i32
  }
  func.func @transform_5(%arg0: i32) -> (i32, i32) {
    %c0_i32 = arith.constant 0 : i32
    %c0_i32_0 = arith.constant 0 : i32
    %c0_i32_1 = arith.constant 0 : i32
    return %c0_i32, %c0_i32_0 : i32, i32
  }
  func.func @transform_6(%arg0: i32) -> (i32, i32) {
    %c0_i32 = arith.constant 0 : i32
    %c0_i32_0 = arith.constant 0 : i32
    %c0_i32_1 = arith.constant 0 : i32
    return %c0_i32, %c0_i32_0 : i32, i32
  }
  func.func @transform_7(%arg0: i32) -> (i32, i32) {
    %c0_i32 = arith.constant 0 : i32
    %c0_i32_0 = arith.constant 0 : i32
    %c0_i32_1 = arith.constant 0 : i32
    return %c0_i32, %c0_i32_0 : i32, i32
  }
  func.func @transform_8(%arg0: i32) -> (i32, i32) {
    %c0_i32 = arith.constant 0 : i32
    %c0_i32_0 = arith.constant 0 : i32
    %c0_i32_1 = arith.constant 0 : i32
    return %c0_i32, %c0_i32_0 : i32, i32
  }
  func.func @transform_9(%arg0: i32) -> (i32, i32) {
    %c0_i32 = arith.constant 0 : i32
    %c0_i32_0 = arith.constant 0 : i32
    %c0_i32_1 = arith.constant 0 : i32
    return %c0_i32, %c0_i32_0 : i32, i32
  }
  func.func @transform_10(%arg0: i32) -> (i32, i32) {
    %c0_i32 = arith.constant 0 : i32
    %c0_i32_0 = arith.constant 0 : i32
    %c0_i32_1 = arith.constant 0 : i32
    return %c0_i32, %c0_i32_0 : i32, i32
  }
  func.func @transform_11(%arg0: i32) -> (i32, i32) {
    %c0_i32 = arith.constant 0 : i32
    %c0_i32_0 = arith.constant 0 : i32
    %c0_i32_1 = arith.constant 0 : i32
    return %c0_i32, %c0_i32_0 : i32, i32
  }
  func.func @transform_12(%arg0: i32) -> (i32, i32) {
    %c0_i32 = arith.constant 0 : i32
    %c0_i32_0 = arith.constant 0 : i32
    %c0_i32_1 = arith.constant 0 : i32
    return %c0_i32, %c0_i32_0 : i32, i32
  }
  func.func @transform_13(%arg0: i32) -> (i32, i32) {
    %c0_i32 = arith.constant 0 : i32
    %c0_i32_0 = arith.constant 0 : i32
    %c0_i32_1 = arith.constant 0 : i32
    return %c0_i32, %c0_i32_0 : i32, i32
  }
  func.func @transform_14(%arg0: i32) -> (i32, i32) {
    %c0_i32 = arith.constant 0 : i32
    %c0_i32_0 = arith.constant 0 : i32
    %c0_i32_1 = arith.constant 0 : i32
    return %c0_i32, %c0_i32_0 : i32, i32
  }
  func.func @transform_15(%arg0: i32) -> (i32, i32) {
    %c0_i32 = arith.constant 0 : i32
    %c0_i32_0 = arith.constant 0 : i32
    %c0_i32_1 = arith.constant 0 : i32
    return %c0_i32, %c0_i32_0 : i32, i32
  }
  func.func @transform_16(%arg0: i32) -> (i32, i32) {
    %c0_i32 = arith.constant 0 : i32
    %c0_i32_0 = arith.constant 0 : i32
    %c0_i32_1 = arith.constant 0 : i32
    return %c0_i32, %c0_i32_0 : i32, i32
  }
  func.func @transform_17(%arg0: i32) -> (i32, i32) {
    %c0_i32 = arith.constant 0 : i32
    %c0_i32_0 = arith.constant 0 : i32
    %c0_i32_1 = arith.constant 0 : i32
    return %c0_i32, %c0_i32_0 : i32, i32
  }
  func.func @transform_18(%arg0: i32) -> (i32, i32) {
    %c0_i32 = arith.constant 0 : i32
    %c0_i32_0 = arith.constant 0 : i32
    %c0_i32_1 = arith.constant 0 : i32
    return %c0_i32, %c0_i32_0 : i32, i32
  }
  func.func @transform_19(%arg0: i32) -> (i32, i32) {
    %c0_i32 = arith.constant 0 : i32
    %c0_i32_0 = arith.constant 0 : i32
    %c0_i32_1 = arith.constant 0 : i32
    return %c0_i32, %c0_i32_0 : i32, i32
  }
  func.func @transform_20(%arg0: i32) -> (i32, i32) {
    %c0_i32 = arith.constant 0 : i32
    %c0_i32_0 = arith.constant 0 : i32
    %c0_i32_1 = arith.constant 0 : i32
    return %c0_i32, %c0_i32_0 : i32, i32
  }
  func.func @transform_21(%arg0: i32) -> (i32, i32) {
    %c0_i32 = arith.constant 0 : i32
    %c0_i32_0 = arith.constant 0 : i32
    %c0_i32_1 = arith.constant 0 : i32
    return %c0_i32, %c0_i32_0 : i32, i32
  }
  func.func @transform_22(%arg0: i32) -> (i32, i32) {
    %c0_i32 = arith.constant 0 : i32
    %c0_i32_0 = arith.constant 0 : i32
    %c0_i32_1 = arith.constant 0 : i32
    return %c0_i32, %c0_i32_0 : i32, i32
  }
  func.func @transform_23(%arg0: i32) -> (i32, i32) {
    %c0_i32 = arith.constant 0 : i32
    %c0_i32_0 = arith.constant 0 : i32
    %c0_i32_1 = arith.constant 0 : i32
    return %c0_i32, %c0_i32_0 : i32, i32
  }
  func.func @transform_24(%arg0: i32) -> (i32, i32, i32) {
    %c0_i32 = arith.constant 0 : i32
    %c0_i32_0 = arith.constant 0 : i32
    %c0_i32_1 = arith.constant 0 : i32
    return %arg0, %c0_i32, %c0_i32_0 : i32, i32, i32
  }
}

</mosaic_0001>

<llo_original>
// kernel: tpu_custom_call.1
$region0: #{tpu_custom_call.1}
  #allocation0 [shape = 'u32[]', space=smem, size = 0x4, offset = 0x4, fixed_abs, tag = 'smem constant byte address 0x4 - core index']
  #allocation1 [shape = 'u32[144,128]{1,0:T(1,128)}', space=vmem, size = 0x12000, scoped, tag = 'internal scratch']
  %s0 = inlined_call_operand.vmem [shape: f32[2,64,32], index: 0, kind: input, shape index: {}]
  %s1 = inlined_call_operand.vmem [shape: f32[1,32], index: 1, kind: input, shape index: {}]
  %s2 = inlined_call_operand.vmem [shape: f32[1,32], index: 2, kind: input, shape index: {}]
  %s3 = inlined_call_operand.vmem [shape: bf16[32,16], index: 3, kind: input, shape index: {}]
  %s4 = inlined_call_operand.vmem [shape: bf16[32,16], index: 4, kind: input, shape index: {}]
  %s5 = inlined_call_operand.vmem [shape: f32[3,16], index: 5, kind: input, shape index: {}]
  %s6 = inlined_call_operand.vmem [shape: f32[3,16], index: 6, kind: input, shape index: {}]
  %s7 = inlined_call_operand.vmem [shape: f32[16,2], index: 7, kind: input, shape index: {}]
  %s8 = inlined_call_operand.vmem [shape: f32[2,128], index: 8, kind: input, shape index: {}]
  %s9 = inlined_call_operand.vmem [shape: f32[1,128], index: 9, kind: input, shape index: {}]
  %s10 = inlined_call_operand.vmem [shape: f32[1,128], index: 10, kind: input, shape index: {}]
  %s11 = inlined_call_operand.vmem [shape: f32[16,128], index: 11, kind: input, shape index: {}]
  %s12 = inlined_call_operand.vmem [shape: f32[16,128], index: 12, kind: input, shape index: {}]
  %s13 = inlined_call_operand.vmem [shape: f32[16,128], index: 13, kind: input, shape index: {}]
  %s14 = inlined_call_operand.vmem [shape: f32[128,16], index: 14, kind: input, shape index: {}]
  %s15 = inlined_call_operand.vmem [shape: f32[1,16], index: 15, kind: input, shape index: {}]
  %s16 = inlined_call_operand.vmem [shape: bf16[16,32], index: 16, kind: input, shape index: {}]
  %s17 = inlined_call_operand.vmem [shape: bf16[16,32], index: 17, kind: input, shape index: {}]
  %s18 = inlined_call_operand.vmem [shape: f32[1,32], index: 18, kind: input, shape index: {}]
  %s19 = inlined_call_operand.vmem [shape: f32[1,32], index: 19, kind: input, shape index: {}]
  %s20 = inlined_call_operand.vmem [shape: bf16[32,128], index: 20, kind: input, shape index: {}]
  %s21 = inlined_call_operand.vmem [shape: f32[1,128], index: 21, kind: input, shape index: {}]
  %s22 = inlined_call_operand.vmem [shape: bf16[128,32], index: 22, kind: input, shape index: {}]
  %s23 = inlined_call_operand.vmem [shape: f32[1,32], index: 23, kind: input, shape index: {}]
  %s24 = inlined_call_operand.vmem [shape: f32[2,64,32], index: 24, kind: output, shape index: {}]
  %s25 = sld [smem:[#allocation0]]
  $region129: #{tpu_custom_call.1} parent=0
    _
  %s27 = ssub.s32 1, %s25
  %s28 = scalar_select 0, %s27, %s25
  loop: start=0, step=1, limit=4
  $region2: #{tpu_custom_call.1} parent=0 // loop_pre_header
    _
  $region3: #{tpu_custom_call.1} parent=0 // loop_header
    %s30 = sphi 0, %s34
    %p31 = scmp.ge.s32.totalorder %s30, 4
    %s40 = sphi 0, %s42
    %s43 = sphi 0, %s40
    %s44 = sphi 0, %s43
    %s60 = sphi 0, %s44
    %s64 = sphi 0, %s64
    %s66 = sphi 0, %s64
    %s67 = sphi 0, %s66
    %s81 = sphi 0, %s67
    %s85 = sphi 0, %s85
    %s87 = sphi 0, %s85
    %s88 = sphi 0, %s87
    %s102 = sphi 0, %s88
    %s106 = sphi 0, %s106
    %s108 = sphi 0, %s106
    %s109 = sphi 0, %s108
    %s123 = sphi 0, %s109
    %s127 = sphi 0, %s127
    %s129 = sphi 0, %s127
    %s130 = sphi 0, %s129
    %s144 = sphi 0, %s130
    %s148 = sphi 0, %s148
    %s150 = sphi 0, %s148
    %s151 = sphi 0, %s150
    %s165 = sphi 0, %s151
    %s169 = sphi 0, %s169
    %s171 = sphi 0, %s169
    %s172 = sphi 0, %s171
    %s186 = sphi 0, %s172
    %s190 = sphi 0, %s190
    %s192 = sphi 0, %s190
    %s193 = sphi 0, %s192
    %s207 = sphi 0, %s193
    %s211 = sphi 0, %s211
    %s213 = sphi 0, %s211
    %s214 = sphi 0, %s213
    %s228 = sphi 0, %s214
    %s232 = sphi 0, %s232
    %s234 = sphi 0, %s232
    %s235 = sphi 0, %s234
    %s249 = sphi 0, %s235
    %s253 = sphi 0, %s253
    %s255 = sphi 0, %s253
    %s256 = sphi 0, %s255
    %s270 = sphi 0, %s256
    %s274 = sphi 0, %s274
    %s276 = sphi 0, %s274
    %s277 = sphi 0, %s276
    %s291 = sphi 0, %s277
    %s295 = sphi 0, %s295
    %s297 = sphi 0, %s295
    %s298 = sphi 0, %s297
    %s312 = sphi 0, %s298
    %s316 = sphi 0, %s316
    %s318 = sphi 0, %s316
    %s319 = sphi 0, %s318
    %s333 = sphi 0, %s319
    %s337 = sphi 0, %s337
    %s339 = sphi 0, %s337
    %s340 = sphi 0, %s339
    %s354 = sphi 0, %s340
    %s358 = sphi 0, %s358
    %s360 = sphi 0, %s358
    %s361 = sphi 0, %s360
    %s375 = sphi 0, %s361
    %s379 = sphi 0, %s379
    %s381 = sphi 0, %s379
    %s382 = sphi 0, %s381
    %s396 = sphi 0, %s382
    %s400 = sphi 0, %s400
    %s402 = sphi 0, %s400
    %s403 = sphi 0, %s402
    %s417 = sphi 0, %s403
    %s421 = sphi 0, %s421
    %s423 = sphi 0, %s421
    %s424 = sphi 0, %s423
    %s438 = sphi 0, %s424
    %s442 = sphi 0, %s442
    %s444 = sphi 0, %s442
    %s445 = sphi 0, %s444
    %s459 = sphi 0, %s445
    %s463 = sphi 0, %s463
    %s465 = sphi 0, %s463
    %s466 = sphi 0, %s465
    %s480 = sphi 0, %s466
    %s484 = sphi 0, %s484
    %s486 = sphi 0, %s484
    %s487 = sphi 0, %s486
    %s501 = sphi 0, %s487
    %s505 = sphi 0, %s505
    %s507 = sphi 0, %s505
    %s508 = sphi 0, %s507
    %s522 = sphi 0, %s508
    %s526 = sphi 0, %s526
    %s528 = sphi 0, %s526
    %s529 = sphi 0, %s528
    %s543 = sphi 0, %s529
    %s549 = sphi 0, %s551
    %s552 = sphi 0, %s549
    %s553 = sphi 0, %s552
    %s569 = sphi 0, %s553
  $region4: #{tpu_custom_call.1} parent=0 // loop_header_branch
    %33 = sbr.rel (%p31) target = $region8
  $region5: #{tpu_custom_call.1} parent=0 // loop_body
    %s35 = ssub.s32 %s30, 1
    %s36 = ssub.s32 %s30, 2
    %s37 = sadd.s32 %s30, 1
    %s38 = ssub.s32 %s30, %s37
    %p39 = scmp.eq.s32.totalorder %s38, 0
    %s41 = sadd.s32 %s40, 1
    %s42 = scalar_select %p39, %s40, %s41
    %p45 = pneg %p39
    %p46 = scmp.eq.s32.totalorder %s30, 1
    %p47 = por %p45, %p46
    %p48 = scmp.ne.s32.totalorder %s40, %s43
    %p49 = scmp.eq.s32.totalorder %s30, 0
    %p50 = por %p48, %p49
    %p51 = scmp.ne.s32.totalorder %s40, %s43
    %p52 = scmp.eq.s32.totalorder %s35, 1
    %p53 = por %p51, %p52
    %p54 = scmp.ne.s32.totalorder %s43, %s44
    %p55 = scmp.eq.s32.totalorder %s35, 0
    %p56 = por %p54, %p55
    %p57 = scmp.ne.s32.totalorder %s43, %s44
    %p58 = scmp.eq.s32.totalorder %s36, 1
    %p59 = por %p57, %p58
    %p61 = scmp.ne.s32.totalorder %s44, %s60
    %p62 = scmp.eq.s32.totalorder %s36, 0
    %p63 = por %p61, %p62
    %s65 = sadd.s32 %s64, 1
    %p68 = scmp.eq.s32.totalorder %s30, 1
    %p69 = scmp.ne.s32.totalorder %s64, %s66
    %p70 = scmp.eq.s32.totalorder %s30, 0
    %p71 = por %p69, %p70
    %p72 = scmp.ne.s32.totalorder %s64, %s66
    %p73 = scmp.eq.s32.totalorder %s35, 1
    %p74 = por %p72, %p73
    %p75 = scmp.ne.s32.totalorder %s66, %s67
    %p76 = scmp.eq.s32.totalorder %s35, 0
    %p77 = por %p75, %p76
    %p78 = scmp.ne.s32.totalorder %s66, %s67
    %p79 = scmp.eq.s32.totalorder %s36, 1
    %p80 = por %p78, %p79
    %p82 = scmp.ne.s32.totalorder %s67, %s81
    %p83 = scmp.eq.s32.totalorder %s36, 0
    %p84 = por %p82, %p83
    %s86 = sadd.s32 %s85, 1
    %p89 = scmp.eq.s32.totalorder %s30, 1
    %p90 = scmp.ne.s32.totalorder %s85, %s87
    %p91 = scmp.eq.s32.totalorder %s30, 0
    %p92 = por %p90, %p91
    %p93 = scmp.ne.s32.totalorder %s85, %s87
    %p94 = scmp.eq.s32.totalorder %s35, 1
    %p95 = por %p93, %p94
    %p96 = scmp.ne.s32.totalorder %s87, %s88
    %p97 = scmp.eq.s32.totalorder %s35, 0
    %p98 = por %p96, %p97
    %p99 = scmp.ne.s32.totalorder %s87, %s88
    %p100 = scmp.eq.s32.totalorder %s36, 1
    %p101 = por %p99, %p100
    %p103 = scmp.ne.s32.totalorder %s88, %s102
    %p104 = scmp.eq.s32.totalorder %s36, 0
    %p105 = por %p103, %p104
    %s107 = sadd.s32 %s106, 1
    %p110 = scmp.eq.s32.totalorder %s30, 1
    %p111 = scmp.ne.s32.totalorder %s106, %s108
    %p112 = scmp.eq.s32.totalorder %s30, 0
    %p113 = por %p111, %p112
    %p114 = scmp.ne.s32.totalorder %s106, %s108
    %p115 = scmp.eq.s32.totalorder %s35, 1
    %p116 = por %p114, %p115
    %p117 = scmp.ne.s32.totalorder %s108, %s109
    %p118 = scmp.eq.s32.totalorder %s35, 0
    %p119 = por %p117, %p118
    %p120 = scmp.ne.s32.totalorder %s108, %s109
    %p121 = scmp.eq.s32.totalorder %s36, 1
    %p122 = por %p120, %p121
    %p124 = scmp.ne.s32.totalorder %s109, %s123
    %p125 = scmp.eq.s32.totalorder %s36, 0
    %p126 = por %p124, %p125
    %s128 = sadd.s32 %s127, 1
    %p131 = scmp.eq.s32.totalorder %s30, 1
    %p132 = scmp.ne.s32.totalorder %s127, %s129
    %p133 = scmp.eq.s32.totalorder %s30, 0
    %p134 = por %p132, %p133
    %p135 = scmp.ne.s32.totalorder %s127, %s129
    %p136 = scmp.eq.s32.totalorder %s35, 1
    %p137 = por %p135, %p136
    %p138 = scmp.ne.s32.totalorder %s129, %s130
    %p139 = scmp.eq.s32.totalorder %s35, 0
    %p140 = por %p138, %p139
    %p141 = scmp.ne.s32.totalorder %s129, %s130
    %p142 = scmp.eq.s32.totalorder %s36, 1
    %p143 = por %p141, %p142
    %p145 = scmp.ne.s32.totalorder %s130, %s144
    %p146 = scmp.eq.s32.totalorder %s36, 0
    %p147 = por %p145, %p146
    %s149 = sadd.s32 %s148, 1
    %p152 = scmp.eq.s32.totalorder %s30, 1
    %p153 = scmp.ne.s32.totalorder %s148, %s150
    %p154 = scmp.eq.s32.totalorder %s30, 0
    %p155 = por %p153, %p154
    %p156 = scmp.ne.s32.totalorder %s148, %s150
    %p157 = scmp.eq.s32.totalorder %s35, 1
    %p158 = por %p156, %p157
    %p159 = scmp.ne.s32.totalorder %s150, %s151
    %p160 = scmp.eq.s32.totalorder %s35, 0
    %p161 = por %p159, %p160
    %p162 = scmp.ne.s32.totalorder %s150, %s151
    %p163 = scmp.eq.s32.totalorder %s36, 1
    %p164 = por %p162, %p163
    %p166 = scmp.ne.s32.totalorder %s151, %s165
    %p167 = scmp.eq.s32.totalorder %s36, 0
    %p168 = por %p166, %p167
    %s170 = sadd.s32 %s169, 1
    %p173 = scmp.eq.s32.totalorder %s30, 1
    %p174 = scmp.ne.s32.totalorder %s169, %s171
    %p175 = scmp.eq.s32.totalorder %s30, 0
    %p176 = por %p174, %p175
    %p177 = scmp.ne.s32.totalorder %s169, %s171
    %p178 = scmp.eq.s32.totalorder %s35, 1
    %p179 = por %p177, %p178
    %p180 = scmp.ne.s32.totalorder %s171, %s172
    %p181 = scmp.eq.s32.totalorder %s35, 0
    %p182 = por %p180, %p181
    %p183 = scmp.ne.s32.totalorder %s171, %s172
    %p184 = scmp.eq.s32.totalorder %s36, 1
    %p185 = por %p183, %p184
    %p187 = scmp.ne.s32.totalorder %s172, %s186
    %p188 = scmp.eq.s32.totalorder %s36, 0
    %p189 = por %p187, %p188
    %s191 = sadd.s32 %s190, 1
    %p194 = scmp.eq.s32.totalorder %s30, 1
    %p195 = scmp.ne.s32.totalorder %s190, %s192
    %p196 = scmp.eq.s32.totalorder %s30, 0
    %p197 = por %p195, %p196
    %p198 = scmp.ne.s32.totalorder %s190, %s192
    %p199 = scmp.eq.s32.totalorder %s35, 1
    %p200 = por %p198, %p199
    %p201 = scmp.ne.s32.totalorder %s192, %s193
    %p202 = scmp.eq.s32.totalorder %s35, 0
    %p203 = por %p201, %p202
    %p204 = scmp.ne.s32.totalorder %s192, %s193
    %p205 = scmp.eq.s32.totalorder %s36, 1
    %p206 = por %p204, %p205
    %p208 = scmp.ne.s32.totalorder %s193, %s207
    %p209 = scmp.eq.s32.totalorder %s36, 0
    %p210 = por %p208, %p209
    %s212 = sadd.s32 %s211, 1
    %p215 = scmp.eq.s32.totalorder %s30, 1
    %p216 = scmp.ne.s32.totalorder %s211, %s213
    %p217 = scmp.eq.s32.totalorder %s30, 0
    %p218 = por %p216, %p217
    %p219 = scmp.ne.s32.totalorder %s211, %s213
    %p220 = scmp.eq.s32.totalorder %s35, 1
    %p221 = por %p219, %p220
    %p222 = scmp.ne.s32.totalorder %s213, %s214
    %p223 = scmp.eq.s32.totalorder %s35, 0
    %p224 = por %p222, %p223
    %p225 = scmp.ne.s32.totalorder %s213, %s214
    %p226 = scmp.eq.s32.totalorder %s36, 1
    %p227 = por %p225, %p226
    %p229 = scmp.ne.s32.totalorder %s214, %s228
    %p230 = scmp.eq.s32.totalorder %s36, 0
    %p231 = por %p229, %p230
    %s233 = sadd.s32 %s232, 1
    %p236 = scmp.eq.s32.totalorder %s30, 1
    %p237 = scmp.ne.s32.totalorder %s232, %s234
    %p238 = scmp.eq.s32.totalorder %s30, 0
    %p239 = por %p237, %p238
    %p240 = scmp.ne.s32.totalorder %s232, %s234
    %p241 = scmp.eq.s32.totalorder %s35, 1
    %p242 = por %p240, %p241
    %p243 = scmp.ne.s32.totalorder %s234, %s235
    %p244 = scmp.eq.s32.totalorder %s35, 0
    %p245 = por %p243, %p244
    %p246 = scmp.ne.s32.totalorder %s234, %s235
    %p247 = scmp.eq.s32.totalorder %s36, 1
    %p248 = por %p246, %p247
    %p250 = scmp.ne.s32.totalorder %s235, %s249
    %p251 = scmp.eq.s32.totalorder %s36, 0
    %p252 = por %p250, %p251
    %s254 = sadd.s32 %s253, 1
    %p257 = scmp.eq.s32.totalorder %s30, 1
    %p258 = scmp.ne.s32.totalorder %s253, %s255
    %p259 = scmp.eq.s32.totalorder %s30, 0
    %p260 = por %p258, %p259
    %p261 = scmp.ne.s32.totalorder %s253, %s255
    %p262 = scmp.eq.s32.totalorder %s35, 1
    %p263 = por %p261, %p262
    %p264 = scmp.ne.s32.totalorder %s255, %s256
    %p265 = scmp.eq.s32.totalorder %s35, 0
    %p266 = por %p264, %p265
    %p267 = scmp.ne.s32.totalorder %s255, %s256
    %p268 = scmp.eq.s32.totalorder %s36, 1
    %p269 = por %p267, %p268
    %p271 = scmp.ne.s32.totalorder %s256, %s270
    %p272 = scmp.eq.s32.totalorder %s36, 0
    %p273 = por %p271, %p272
    %s275 = sadd.s32 %s274, 1
    %p278 = scmp.eq.s32.totalorder %s30, 1
    %p279 = scmp.ne.s32.totalorder %s274, %s276
    %p280 = scmp.eq.s32.totalorder %s30, 0
    %p281 = por %p279, %p280
    %p282 = scmp.ne.s32.totalorder %s274, %s276
    %p283 = scmp.eq.s32.totalorder %s35, 1
    %p284 = por %p282, %p283
    %p285 = scmp.ne.s32.totalorder %s276, %s277
    %p286 = scmp.eq.s32.totalorder %s35, 0
    %p287 = por %p285, %p286
    %p288 = scmp.ne.s32.totalorder %s276, %s277
    %p289 = scmp.eq.s32.totalorder %s36, 1
    %p290 = por %p288, %p289
    %p292 = scmp.ne.s32.totalorder %s277, %s291
    %p293 = scmp.eq.s32.totalorder %s36, 0
    %p294 = por %p292, %p293
    %s296 = sadd.s32 %s295, 1
    %p299 = scmp.eq.s32.totalorder %s30, 1
    %p300 = scmp.ne.s32.totalorder %s295, %s297
    %p301 = scmp.eq.s32.totalorder %s30, 0
    %p302 = por %p300, %p301
    %p303 = scmp.ne.s32.totalorder %s295, %s297
    %p304 = scmp.eq.s32.totalorder %s35, 1
    %p305 = por %p303, %p304
    %p306 = scmp.ne.s32.totalorder %s297, %s298
    %p307 = scmp.eq.s32.totalorder %s35, 0
    %p308 = por %p306, %p307
    %p309 = scmp.ne.s32.totalorder %s297, %s298
    %p310 = scmp.eq.s32.totalorder %s36, 1
    %p311 = por %p309, %p310
    %p313 = scmp.ne.s32.totalorder %s298, %s312
    %p314 = scmp.eq.s32.totalorder %s36, 0
    %p315 = por %p313, %p314
    %s317 = sadd.s32 %s316, 1
    %p320 = scmp.eq.s32.totalorder %s30, 1
    %p321 = scmp.ne.s32.totalorder %s316, %s318
    %p322 = scmp.eq.s32.totalorder %s30, 0
    %p323 = por %p321, %p322
    %p324 = scmp.ne.s32.totalorder %s316, %s318
    %p325 = scmp.eq.s32.totalorder %s35, 1
    %p326 = por %p324, %p325
    %p327 = scmp.ne.s32.totalorder %s318, %s319
    %p328 = scmp.eq.s32.totalorder %s35, 0
    %p329 = por %p327, %p328
    %p330 = scmp.ne.s32.totalorder %s318, %s319
    %p331 = scmp.eq.s32.totalorder %s36, 1
    %p332 = por %p330, %p331
    %p334 = scmp.ne.s32.totalorder %s319, %s333
    %p335 = scmp.eq.s32.totalorder %s36, 0
    %p336 = por %p334, %p335
    %s338 = sadd.s32 %s337, 1
    %p341 = scmp.eq.s32.totalorder %s30, 1
    %p342 = scmp.ne.s32.totalorder %s337, %s339
    %p343 = scmp.eq.s32.totalorder %s30, 0
    %p344 = por %p342, %p343
    %p345 = scmp.ne.s32.totalorder %s337, %s339
    %p346 = scmp.eq.s32.totalorder %s35, 1
    %p347 = por %p345, %p346
    %p348 = scmp.ne.s32.totalorder %s339, %s340
    %p349 = scmp.eq.s32.totalorder %s35, 0
    %p350 = por %p348, %p349
    %p351 = scmp.ne.s32.totalorder %s339, %s340
    %p352 = scmp.eq.s32.totalorder %s36, 1
    %p353 = por %p351, %p352
    %p355 = scmp.ne.s32.totalorder %s340, %s354
    %p356 = scmp.eq.s32.totalorder %s36, 0
    %p357 = por %p355, %p356
    %s359 = sadd.s32 %s358, 1
    %p362 = scmp.eq.s32.totalorder %s30, 1
    %p363 = scmp.ne.s32.totalorder %s358, %s360
    %p364 = scmp.eq.s32.totalorder %s30, 0
    %p365 = por %p363, %p364
    %p366 = scmp.ne.s32.totalorder %s358, %s360
    %p367 = scmp.eq.s32.totalorder %s35, 1
    %p368 = por %p366, %p367
    %p369 = scmp.ne.s32.totalorder %s360, %s361
    %p370 = scmp.eq.s32.totalorder %s35, 0
    %p371 = por %p369, %p370
    %p372 = scmp.ne.s32.totalorder %s360, %s361
    %p373 = scmp.eq.s32.totalorder %s36, 1
    %p374 = por %p372, %p373
    %p376 = scmp.ne.s32.totalorder %s361, %s375
    %p377 = scmp.eq.s32.totalorder %s36, 0
    %p378 = por %p376, %p377
    %s380 = sadd.s32 %s379, 1
    %p383 = scmp.eq.s32.totalorder %s30, 1
    %p384 = scmp.ne.s32.totalorder %s379, %s381
    %p385 = scmp.eq.s32.totalorder %s30, 0
    %p386 = por %p384, %p385
    %p387 = scmp.ne.s32.totalorder %s379, %s381
    %p388 = scmp.eq.s32.totalorder %s35, 1
    %p389 = por %p387, %p388
    %p390 = scmp.ne.s32.totalorder %s381, %s382
    %p391 = scmp.eq.s32.totalorder %s35, 0
    %p392 = por %p390, %p391
    %p393 = scmp.ne.s32.totalorder %s381, %s382
    %p394 = scmp.eq.s32.totalorder %s36, 1
    %p395 = por %p393, %p394
    %p397 = scmp.ne.s32.totalorder %s382, %s396
    %p398 = scmp.eq.s32.totalorder %s36, 0
    %p399 = por %p397, %p398
    %s401 = sadd.s32 %s400, 1
    %p404 = scmp.eq.s32.totalorder %s30, 1
    %p405 = scmp.ne.s32.totalorder %s400, %s402
    %p406 = scmp.eq.s32.totalorder %s30, 0
    %p407 = por %p405, %p406
    %p408 = scmp.ne.s32.totalorder %s400, %s402
    %p409 = scmp.eq.s32.totalorder %s35, 1
    %p410 = por %p408, %p409
    %p411 = scmp.ne.s32.totalorder %s402, %s403
    %p412 = scmp.eq.s32.totalorder %s35, 0
    %p413 = por %p411, %p412
    %p414 = scmp.ne.s32.totalorder %s402, %s403
    %p415 = scmp.eq.s32.totalorder %s36, 1
    %p416 = por %p414, %p415
    %p418 = scmp.ne.s32.totalorder %s403, %s417
    %p419 = scmp.eq.s32.totalorder %s36, 0
    %p420 = por %p418, %p419
    %s422 = sadd.s32 %s421, 1
    %p425 = scmp.eq.s32.totalorder %s30, 1
    %p426 = scmp.ne.s32.totalorder %s421, %s423
    %p427 = scmp.eq.s32.totalorder %s30, 0
    %p428 = por %p426, %p427
    %p429 = scmp.ne.s32.totalorder %s421, %s423
    %p430 = scmp.eq.s32.totalorder %s35, 1
    %p431 = por %p429, %p430
    %p432 = scmp.ne.s32.totalorder %s423, %s424
    %p433 = scmp.eq.s32.totalorder %s35, 0
    %p434 = por %p432, %p433
    %p435 = scmp.ne.s32.totalorder %s423, %s424
    %p436 = scmp.eq.s32.totalorder %s36, 1
    %p437 = por %p435, %p436
    %p439 = scmp.ne.s32.totalorder %s424, %s438
    %p440 = scmp.eq.s32.totalorder %s36, 0
    %p441 = por %p439, %p440
    %s443 = sadd.s32 %s442, 1
    %p446 = scmp.eq.s32.totalorder %s30, 1
    %p447 = scmp.ne.s32.totalorder %s442, %s444
    %p448 = scmp.eq.s32.totalorder %s30, 0
    %p449 = por %p447, %p448
    %p450 = scmp.ne.s32.totalorder %s442, %s444
    %p451 = scmp.eq.s32.totalorder %s35, 1
    %p452 = por %p450, %p451
    %p453 = scmp.ne.s32.totalorder %s444, %s445
    %p454 = scmp.eq.s32.totalorder %s35, 0
    %p455 = por %p453, %p454
    %p456 = scmp.ne.s32.totalorder %s444, %s445
    %p457 = scmp.eq.s32.totalorder %s36, 1
    %p458 = por %p456, %p457
    %p460 = scmp.ne.s32.totalorder %s445, %s459
    %p461 = scmp.eq.s32.totalorder %s36, 0
    %p462 = por %p460, %p461
    %s464 = sadd.s32 %s463, 1
    %p467 = scmp.eq.s32.totalorder %s30, 1
    %p468 = scmp.ne.s32.totalorder %s463, %s465
    %p469 = scmp.eq.s32.totalorder %s30, 0
    %p470 = por %p468, %p469
    %p471 = scmp.ne.s32.totalorder %s463, %s465
    %p472 = scmp.eq.s32.totalorder %s35, 1
    %p473 = por %p471, %p472
    %p474 = scmp.ne.s32.totalorder %s465, %s466
    %p475 = scmp.eq.s32.totalorder %s35, 0
    %p476 = por %p474, %p475
    %p477 = scmp.ne.s32.totalorder %s465, %s466
    %p478 = scmp.eq.s32.totalorder %s36, 1
    %p479 = por %p477, %p478
    %p481 = scmp.ne.s32.totalorder %s466, %s480
    %p482 = scmp.eq.s32.totalorder %s36, 0
    %p483 = por %p481, %p482
    %s485 = sadd.s32 %s484, 1
    %p488 = scmp.eq.s32.totalorder %s30, 1
    %p489 = scmp.ne.s32.totalorder %s484, %s486
    %p490 = scmp.eq.s32.totalorder %s30, 0
    %p491 = por %p489, %p490
    %p492 = scmp.ne.s32.totalorder %s484, %s486
    %p493 = scmp.eq.s32.totalorder %s35, 1
    %p494 = por %p492, %p493
    %p495 = scmp.ne.s32.totalorder %s486, %s487
    %p496 = scmp.eq.s32.totalorder %s35, 0
    %p497 = por %p495, %p496
    %p498 = scmp.ne.s32.totalorder %s486, %s487
    %p499 = scmp.eq.s32.totalorder %s36, 1
    %p500 = por %p498, %p499
    %p502 = scmp.ne.s32.totalorder %s487, %s501
    %p503 = scmp.eq.s32.totalorder %s36, 0
    %p504 = por %p502, %p503
    %s506 = sadd.s32 %s505, 1
    %p509 = scmp.eq.s32.totalorder %s30, 1
    %p510 = scmp.ne.s32.totalorder %s505, %s507
    %p511 = scmp.eq.s32.totalorder %s30, 0
    %p512 = por %p510, %p511
    %p513 = scmp.ne.s32.totalorder %s505, %s507
    %p514 = scmp.eq.s32.totalorder %s35, 1
    %p515 = por %p513, %p514
    %p516 = scmp.ne.s32.totalorder %s507, %s508
    %p517 = scmp.eq.s32.totalorder %s35, 0
    %p518 = por %p516, %p517
    %p519 = scmp.ne.s32.totalorder %s507, %s508
    %p520 = scmp.eq.s32.totalorder %s36, 1
    %p521 = por %p519, %p520
    %p523 = scmp.ne.s32.totalorder %s508, %s522
    %p524 = scmp.eq.s32.totalorder %s36, 0
    %p525 = por %p523, %p524
    %s527 = sadd.s32 %s526, 1
    %p530 = scmp.eq.s32.totalorder %s30, 1
    %p531 = scmp.ne.s32.totalorder %s526, %s528
    %p532 = scmp.eq.s32.totalorder %s30, 0
    %p533 = por %p531, %p532
    %p534 = scmp.ne.s32.totalorder %s526, %s528
    %p535 = scmp.eq.s32.totalorder %s35, 1
    %p536 = por %p534, %p535
    %p537 = scmp.ne.s32.totalorder %s528, %s529
    %p538 = scmp.eq.s32.totalorder %s35, 0
    %p539 = por %p537, %p538
    %p540 = scmp.ne.s32.totalorder %s528, %s529
    %p541 = scmp.eq.s32.totalorder %s36, 1
    %p542 = por %p540, %p541
    %p544 = scmp.ne.s32.totalorder %s529, %s543
    %p545 = scmp.eq.s32.totalorder %s36, 0
    %p546 = por %p544, %p545
    %s547 = ssub.s32 %s30, %s37
    %p548 = scmp.eq.s32.totalorder %s547, 0
    %s550 = sadd.s32 %s549, 1
    %s551 = scalar_select %p548, %s549, %s550
    %p554 = pneg %p548
    %p555 = scmp.eq.s32.totalorder %s30, 1
    %p556 = por %p554, %p555
    %p557 = scmp.ne.s32.totalorder %s549, %s552
    %p558 = scmp.eq.s32.totalorder %s30, 0
    %p559 = por %p557, %p558
    %p560 = scmp.ne.s32.totalorder %s549, %s552
    %p561 = scmp.eq.s32.totalorder %s35, 1
    %p562 = por %p560, %p561
    %p563 = scmp.ne.s32.totalorder %s552, %s553
    %p564 = scmp.eq.s32.totalorder %s35, 0
    %p565 = por %p563, %p564
    %p566 = scmp.ne.s32.totalorder %s552, %s553
    %p567 = scmp.eq.s32.totalorder %s36, 1
    %p568 = por %p566, %p567
    %p570 = scmp.ne.s32.totalorder %s553, %s569
    %p571 = scmp.eq.s32.totalorder %s36, 0
    %p572 = por %p570, %p571
    %p573 = scmp.le.s32.totalorder 1, %s30
    %p574 = scmp.lt.s32.totalorder %s30, 3
    %p575 = pnand %p573, %p574
    %p576 = pneg %p575
    // Predicated region
    $region9: #{tpu_custom_call.1} parent=5 // pred_check
      _
    $region10: #{tpu_custom_call.1} parent=5 // pred_check_branch
      %578 = sbr.rel (%p575) target = $region12
    $region11: #{tpu_custom_call.1} parent=5 // pred_region
      %s579 = ssub.s32 %s30, 1
      // Predicated region
      $region13: #{tpu_custom_call.1} parent=11 // pred_check
        %p580 = pneg %p77
      $region14: #{tpu_custom_call.1} parent=11 // pred_check_branch
        %582 = sbr.rel (%p580) target = $region16
      $region15: #{tpu_custom_call.1} parent=11 // pred_region
        _
      $region16: #{tpu_custom_call.1} parent=11 // pred_fallthru
        _
      // Predicated region
      $region17: #{tpu_custom_call.1} parent=11 // pred_check
        %p583 = pneg %p98
      $region18: #{tpu_custom_call.1} parent=11 // pred_check_branch
        %585 = sbr.rel (%p583) target = $region20
      $region19: #{tpu_custom_call.1} parent=11 // pred_region
        _
      $region20: #{tpu_custom_call.1} parent=11 // pred_fallthru
        _
      // Predicated region
      $region21: #{tpu_custom_call.1} parent=11 // pred_check
        %p586 = pneg %p119
      $region22: #{tpu_custom_call.1} parent=11 // pred_check_branch
        %588 = sbr.rel (%p586) target = $region24
      $region23: #{tpu_custom_call.1} parent=11 // pred_region
        _
      $region24: #{tpu_custom_call.1} parent=11 // pred_fallthru
        _
      // Predicated region
      $region25: #{tpu_custom_call.1} parent=11 // pred_check
        %p589 = pneg %p140
      $region26: #{tpu_custom_call.1} parent=11 // pred_check_branch
        %591 = sbr.rel (%p589) target = $region28
      $region27: #{tpu_custom_call.1} parent=11 // pred_region
        _
      $region28: #{tpu_custom_call.1} parent=11 // pred_fallthru
        _
      // Predicated region
      $region29: #{tpu_custom_call.1} parent=11 // pred_check
        %p592 = pneg %p161
      $region30: #{tpu_custom_call.1} parent=11 // pred_check_branch
        %594 = sbr.rel (%p592) target = $region32
      $region31: #{tpu_custom_call.1} parent=11 // pred_region
        _
      $region32: #{tpu_custom_call.1} parent=11 // pred_fallthru
        _
      // Predicated region
      $region33: #{tpu_custom_call.1} parent=11 // pred_check
        %p595 = pneg %p182
      $region34: #{tpu_custom_call.1} parent=11 // pred_check_branch
        %597 = sbr.rel (%p595) target = $region36
      $region35: #{tpu_custom_call.1} parent=11 // pred_region
        _
      $region36: #{tpu_custom_call.1} parent=11 // pred_fallthru
        _
      // Predicated region
      $region37: #{tpu_custom_call.1} parent=11 // pred_check
        %p598 = pneg %p203
      $region38: #{tpu_custom_call.1} parent=11 // pred_check_branch
        %600 = sbr.rel (%p598) target = $region40
      $region39: #{tpu_custom_call.1} parent=11 // pred_region
        _
      $region40: #{tpu_custom_call.1} parent=11 // pred_fallthru
        _
      // Predicated region
      $region41: #{tpu_custom_call.1} parent=11 // pred_check
        %p601 = pneg %p224
      $region42: #{tpu_custom_call.1} parent=11 // pred_check_branch
        %603 = sbr.rel (%p601) target = $region44
      $region43: #{tpu_custom_call.1} parent=11 // pred_region
        _
      $region44: #{tpu_custom_call.1} parent=11 // pred_fallthru
        _
      // Predicated region
      $region45: #{tpu_custom_call.1} parent=11 // pred_check
        %p604 = pneg %p245
      $region46: #{tpu_custom_call.1} parent=11 // pred_check_branch
        %606 = sbr.rel (%p604) target = $region48
      $region47: #{tpu_custom_call.1} parent=11 // pred_region
        _
      $region48: #{tpu_custom_call.1} parent=11 // pred_fallthru
        _
      // Predicated region
      $region49: #{tpu_custom_call.1} parent=11 // pred_check
        %p607 = pneg %p266
      $region50: #{tpu_custom_call.1} parent=11 // pred_check_branch
        %609 = sbr.rel (%p607) target = $region52
      $region51: #{tpu_custom_call.1} parent=11 // pred_region
        _
      $region52: #{tpu_custom_call.1} parent=11 // pred_fallthru
        _
      // Predicated region
      $region53: #{tpu_custom_call.1} parent=11 // pred_check
        %p610 = pneg %p287
      $region54: #{tpu_custom_call.1} parent=11 // pred_check_branch
        %612 = sbr.rel (%p610) target = $region56
      $region55: #{tpu_custom_call.1} parent=11 // pred_region
        _
      $region56: #{tpu_custom_call.1} parent=11 // pred_fallthru
        _
      // Predicated region
      $region57: #{tpu_custom_call.1} parent=11 // pred_check
        %p613 = pneg %p308
      $region58: #{tpu_custom_call.1} parent=11 // pred_check_branch
        %615 = sbr.rel (%p613) target = $region60
      $region59: #{tpu_custom_call.1} parent=11 // pred_region
        _
      $region60: #{tpu_custom_call.1} parent=11 // pred_fallthru
        _
      // Predicated region
      $region61: #{tpu_custom_call.1} parent=11 // pred_check
        %p616 = pneg %p329
      $region62: #{tpu_custom_call.1} parent=11 // pred_check_branch
        %618 = sbr.rel (%p616) target = $region64
      $region63: #{tpu_custom_call.1} parent=11 // pred_region
        _
      $region64: #{tpu_custom_call.1} parent=11 // pred_fallthru
        _
      // Predicated region
      $region65: #{tpu_custom_call.1} parent=11 // pred_check
        %p619 = pneg %p350
      $region66: #{tpu_custom_call.1} parent=11 // pred_check_branch
        %621 = sbr.rel (%p619) target = $region68
      $region67: #{tpu_custom_call.1} parent=11 // pred_region
        _
      $region68: #{tpu_custom_call.1} parent=11 // pred_fallthru
        _
      // Predicated region
      $region69: #{tpu_custom_call.1} parent=11 // pred_check
        %p622 = pneg %p371
      $region70: #{tpu_custom_call.1} parent=11 // pred_check_branch
        %624 = sbr.rel (%p622) target = $region72
      $region71: #{tpu_custom_call.1} parent=11 // pred_region
        _
      $region72: #{tpu_custom_call.1} parent=11 // pred_fallthru
        _
      // Predicated region
      $region73: #{tpu_custom_call.1} parent=11 // pred_check
        %p625 = pneg %p392
      $region74: #{tpu_custom_call.1} parent=11 // pred_check_branch
        %627 = sbr.rel (%p625) target = $region76
      $region75: #{tpu_custom_call.1} parent=11 // pred_region
        _
      $region76: #{tpu_custom_call.1} parent=11 // pred_fallthru
        _
      // Predicated region
      $region77: #{tpu_custom_call.1} parent=11 // pred_check
        %p628 = pneg %p413
      $region78: #{tpu_custom_call.1} parent=11 // pred_check_branch
        %630 = sbr.rel (%p628) target = $region80
      $region79: #{tpu_custom_call.1} parent=11 // pred_region
        _
      $region80: #{tpu_custom_call.1} parent=11 // pred_fallthru
        _
      // Predicated region
      $region81: #{tpu_custom_call.1} parent=11 // pred_check
        %p631 = pneg %p434
      $region82: #{tpu_custom_call.1} parent=11 // pred_check_branch
        %633 = sbr.rel (%p631) target = $region84
      $region83: #{tpu_custom_call.1} parent=11 // pred_region
        _
      $region84: #{tpu_custom_call.1} parent=11 // pred_fallthru
        _
      // Predicated region
      $region85: #{tpu_custom_call.1} parent=11 // pred_check
        %p634 = pneg %p455
      $region86: #{tpu_custom_call.1} parent=11 // pred_check_branch
        %636 = sbr.rel (%p634) target = $region88
      $region87: #{tpu_custom_call.1} parent=11 // pred_region
        _
      $region88: #{tpu_custom_call.1} parent=11 // pred_fallthru
        _
      // Predicated region
      $region89: #{tpu_custom_call.1} parent=11 // pred_check
        %p637 = pneg %p476
      $region90: #{tpu_custom_call.1} parent=11 // pred_check_branch
        %639 = sbr.rel (%p637) target = $region92
      $region91: #{tpu_custom_call.1} parent=11 // pred_region
        _
      $region92: #{tpu_custom_call.1} parent=11 // pred_fallthru
        _
      // Predicated region
      $region93: #{tpu_custom_call.1} parent=11 // pred_check
        %p640 = pneg %p497
      $region94: #{tpu_custom_call.1} parent=11 // pred_check_branch
        %642 = sbr.rel (%p640) target = $region96
      $region95: #{tpu_custom_call.1} parent=11 // pred_region
        _
      $region96: #{tpu_custom_call.1} parent=11 // pred_fallthru
        _
      // Predicated region
      $region97: #{tpu_custom_call.1} parent=11 // pred_check
        %p643 = pneg %p518
      $region98: #{tpu_custom_call.1} parent=11 // pred_check_branch
        %645 = sbr.rel (%p643) target = $region100
      $region99: #{tpu_custom_call.1} parent=11 // pred_region
        _
      $region100: #{tpu_custom_call.1} parent=11 // pred_fallthru
        _
      // Predicated region
      $region101: #{tpu_custom_call.1} parent=11 // pred_check
        %p646 = pneg %p539
      $region102: #{tpu_custom_call.1} parent=11 // pred_check_branch
        %648 = sbr.rel (%p646) target = $region104
      $region103: #{tpu_custom_call.1} parent=11 // pred_region
        _
      $region104: #{tpu_custom_call.1} parent=11 // pred_fallthru
        _
    $region12: #{tpu_custom_call.1} parent=5 // pred_fallthru
      _
    %p649 = scmp.lt.s32.totalorder %s30, 2
    // Predicated region
    $region105: #{tpu_custom_call.1} parent=5 // pred_check
      %p650 = pneg %p649
    $region106: #{tpu_custom_call.1} parent=5 // pred_check_branch
      %652 = sbr.rel (%p650) target = $region108
    $region107: #{tpu_custom_call.1} parent=5 // pred_region
      // Predicated region
      $region109: #{tpu_custom_call.1} parent=107 // pred_check
        %p653 = pneg %p50
      $region110: #{tpu_custom_call.1} parent=107 // pred_check_branch
        %655 = sbr.rel (%p653) target = $region112
      $region111: #{tpu_custom_call.1} parent=107 // pred_region
        %p656 = scmp.lt.s32.totalorder %s30, 1
        %s657 = scalar_select %p656, %s30, 1
        %s658 = smul.addr %s657, 8
        %s659 = smul.addr %s658, 8
        %s660 = scalar_lea.vmem %s0, %s659
      $region112: #{tpu_custom_call.1} parent=107 // pred_fallthru
        _
    $region108: #{tpu_custom_call.1} parent=5 // pred_fallthru
      _
    %p661 = scmp.le.s32.totalorder 1, %s30
    %p662 = scmp.lt.s32.totalorder %s30, 3
    %p663 = pnand %p661, %p662
    %p664 = pneg %p663
    // Predicated region
    $region113: #{tpu_custom_call.1} parent=5 // pred_check
      _
    $region114: #{tpu_custom_call.1} parent=5 // pred_check_branch
      %666 = sbr.rel (%p663) target = $region116
    $region115: #{tpu_custom_call.1} parent=5 // pred_region
      %s667 = ssub.s32 %s30, 1
      %p668 = scmp.lt.s32.totalorder %s35, 1
      %s669 = scalar_select %p668, %s35, 1
      %s670 = smul.addr %s669, 8
      %s671 = smul.addr %s670, 8
      %s672 = scalar_lea.vmem %s0, %s671
      %p673 = pneg %p56
      %p674 = pneg %p53
      %p675 = pneg %p77
      %p676 = pneg %p74
      %p677 = pneg %p98
      %p678 = pneg %p95
      %p679 = pneg %p119
      %p680 = pneg %p116
      %p681 = pneg %p140
      %p682 = pneg %p137
      %p683 = pneg %p161
      %p684 = pneg %p158
      %p685 = pneg %p182
      %p686 = pneg %p179
      %p687 = pneg %p203
      %p688 = pneg %p200
      %p689 = pneg %p224
      %p690 = pneg %p221
      %p691 = pneg %p245
      %p692 = pneg %p242
      %p693 = pneg %p266
      %p694 = pneg %p263
      %p695 = pneg %p287
      %p696 = pneg %p284
      %p697 = pneg %p308
      %p698 = pneg %p305
      %p699 = pneg %p329
      %p700 = pneg %p326
      %p701 = pneg %p350
      %p702 = pneg %p347
      %p703 = pneg %p371
      %p704 = pneg %p368
      %p705 = pneg %p392
      %p706 = pneg %p389
      %p707 = pneg %p413
      %p708 = pneg %p410
      %p709 = pneg %p434
      %p710 = pneg %p431
      %p711 = pneg %p455
      %p712 = pneg %p452
      %p713 = pneg %p476
      %p714 = pneg %p473
      %p715 = pneg %p497
      %p716 = pneg %p494
      %p717 = pneg %p518
      %p718 = pneg %p515
      %p719 = pneg %p539
      %p720 = pneg %p536
      %p721 = pneg %p565
      %p722 = pneg %p562
      %p723 = scmp.lt.s32.totalorder %s35, 1
      %s724 = scalar_select %p723, %s35, 1
      %s725 = smul.addr %s724, 8
      %s726 = smul.addr %s725, 8
      %s727 = scalar_lea.vmem %s24, %s726
      %p728 = scmp.lt.s32.totalorder %s35, 1
      %s729 = scalar_select %p728, %s35, 1
      %s730 = smul.addr %s729, 8
      %s731 = smul.addr %s730, 8
      %s732 = scalar_lea.vmem %s0, %s731
      %p733 = scmp.lt.s32.totalorder %s35, 1
      %s734 = scalar_select %p733, %s35, 1
      %s735 = smul.addr %s734, 8
      %s736 = smul.addr %s735, 8
      %s737 = scalar_lea.vmem %s24, %s736
      %v739 = vld [vmem:[%s732] sm:$0xff]
      %v740 = vld [vmem:[%s732 + $0x8] sm:$0xff]
      %v741 = vld [vmem:[%s732 + $0x10] sm:$0xff]
      %v742 = vld [vmem:[%s732 + $0x18] sm:$0xff]
      %v743 = vld [vmem:[%s732 + $0x20] sm:$0xff]
      %v744 = vld [vmem:[%s732 + $0x28] sm:$0xff]
      %v745 = vld [vmem:[%s732 + $0x30] sm:$0xff]
      %v746 = vld [vmem:[%s732 + $0x38] sm:$0xff]
      %v747 = vld [vmem:[%s1] sm:$0x1]
      %v748 = vld [vmem:[%s2] sm:$0x1]
      %vm749 = vcmask 261120
      %v750 = vsel %vm749, %v739, 0.0
      %751 = vadd.xlane.f32.xlu0 %v750
      %v752 = vpop.xlane.xlu0 %751
      %v753 = vsel %vm749, %v740, 0.0
      %754 = vadd.xlane.f32.xlu0 %v753
      %v755 = vpop.xlane.xlu0 %754
      %v756 = vsel %vm749, %v741, 0.0
      %757 = vadd.xlane.f32.xlu0 %v756
      %v758 = vpop.xlane.xlu0 %757
      %v759 = vsel %vm749, %v742, 0.0
      %760 = vadd.xlane.f32.xlu0 %v759
      %v761 = vpop.xlane.xlu0 %760
      %v762 = vsel %vm749, %v743, 0.0
      %763 = vadd.xlane.f32.xlu0 %v762
      %v764 = vpop.xlane.xlu0 %763
      %v765 = vsel %vm749, %v744, 0.0
      %766 = vadd.xlane.f32.xlu0 %v765
      %v767 = vpop.xlane.xlu0 %766
      %v768 = vsel %vm749, %v745, 0.0
      %769 = vadd.xlane.f32.xlu0 %v768
      %v770 = vpop.xlane.xlu0 %769
      %v771 = vsel %vm749, %v746, 0.0
      %772 = vadd.xlane.f32.xlu0 %v771
      %v773 = vpop.xlane.xlu0 %772
      %v774 = vrcp.pop 32.0
      %v775 = vmul.f32 %v752, %v774
      %v776 = vmul.f32 %v755, %v774
      %v777 = vmul.f32 %v758, %v774
      %v778 = vmul.f32 %v761, %v774
      %v779 = vmul.f32 %v764, %v774
      %v780 = vmul.f32 %v767, %v774
      %v781 = vmul.f32 %v770, %v774
      %v782 = vmul.f32 %v773, %v774
      %v783 = vsub.f32 %v739, %v775
      %v784 = vsub.f32 %v740, %v776
      %v785 = vsub.f32 %v741, %v777
      %v786 = vsub.f32 %v742, %v778
      %v787 = vsub.f32 %v743, %v779
      %v788 = vsub.f32 %v744, %v780
      %v789 = vsub.f32 %v745, %v781
      %v790 = vsub.f32 %v746, %v782
      %v791 = vmul.f32 %v783, %v783
      %v792 = vmul.f32 %v784, %v784
      %v793 = vmul.f32 %v785, %v785
      %v794 = vmul.f32 %v786, %v786
      %v795 = vmul.f32 %v787, %v787
      %v796 = vmul.f32 %v788, %v788
      %v797 = vmul.f32 %v789, %v789
      %v798 = vmul.f32 %v790, %v790
      %v799 = vsel %vm749, %v791, 0.0
      %800 = vadd.xlane.f32.xlu0 %v799
      %v801 = vpop.xlane.xlu0 %800
      %v802 = vsel %vm749, %v792, 0.0
      %803 = vadd.xlane.f32.xlu0 %v802
      %v804 = vpop.xlane.xlu0 %803
      %v805 = vsel %vm749, %v793, 0.0
      %806 = vadd.xlane.f32.xlu0 %v805
      %v807 = vpop.xlane.xlu0 %806
      %v808 = vsel %vm749, %v794, 0.0
      %809 = vadd.xlane.f32.xlu0 %v808
      %v810 = vpop.xlane.xlu0 %809
      %v811 = vsel %vm749, %v795, 0.0
      %812 = vadd.xlane.f32.xlu0 %v811
      %v813 = vpop.xlane.xlu0 %812
      %v814 = vsel %vm749, %v796, 0.0
      %815 = vadd.xlane.f32.xlu0 %v814
      %v816 = vpop.xlane.xlu0 %815
      %v817 = vsel %vm749, %v797, 0.0
      %818 = vadd.xlane.f32.xlu0 %v817
      %v819 = vpop.xlane.xlu0 %818
      %v820 = vsel %vm749, %v798, 0.0
      %821 = vadd.xlane.f32.xlu0 %v820
      %v822 = vpop.xlane.xlu0 %821
      %v823 = vmul.f32 %v801, %v774
      %v824 = vmul.f32 %v804, %v774
      %v825 = vmul.f32 %v807, %v774
      %v826 = vmul.f32 %v810, %v774
      %v827 = vmul.f32 %v813, %v774
      %v828 = vmul.f32 %v816, %v774
      %v829 = vmul.f32 %v819, %v774
      %v830 = vmul.f32 %v822, %v774
      %v831 = vadd.f32 %v823, 1e-05
      %v832 = vadd.f32 %v824, 1e-05
      %v833 = vadd.f32 %v825, 1e-05
      %v834 = vadd.f32 %v826, 1e-05
      %v835 = vadd.f32 %v827, 1e-05
      %v836 = vadd.f32 %v828, 1e-05
      %v837 = vadd.f32 %v829, 1e-05
      %v838 = vadd.f32 %v830, 1e-05
      %v839 = vrsqrt.pop %v831
      %v840 = vrsqrt.pop %v832
      %v841 = vrsqrt.pop %v833
      %v842 = vrsqrt.pop %v834
      %v843 = vrsqrt.pop %v835
      %v844 = vrsqrt.pop %v836
      %v845 = vrsqrt.pop %v837
      %v846 = vrsqrt.pop %v838
      %v847 = vmul.f32 %v783, %v839
      %v848 = vmul.f32 %v784, %v840
      %v849 = vmul.f32 %v785, %v841
      %v850 = vmul.f32 %v786, %v842
      %v851 = vmul.f32 %v787, %v843
      %v852 = vmul.f32 %v788, %v844
      %v853 = vmul.f32 %v789, %v845
      %v854 = vmul.f32 %v790, %v846
      %v856 = vlaneseq
      %v857 = vshrl.u32 %v856, 7
      %v858 = vsub.s32 0, %v857
      %v859 = vrot.slane %v747, %v858
      %v861 = vmul.f32 %v847, %v859
      %v862 = vmul.f32 %v848, %v859
      %v863 = vmul.f32 %v849, %v859
      %v864 = vmul.f32 %v850, %v859
      %v865 = vmul.f32 %v851, %v859
      %v866 = vmul.f32 %v852, %v859
      %v867 = vmul.f32 %v853, %v859
      %v868 = vmul.f32 %v854, %v859
      %v870 = vlaneseq
      %v871 = vshrl.u32 %v870, 7
      %v872 = vsub.s32 0, %v871
      %v873 = vrot.slane %v748, %v872
      %v875 = vadd.f32 %v861, %v873
      %v876 = vadd.f32 %v862, %v873
      %v877 = vadd.f32 %v863, %v873
      %v878 = vadd.f32 %v864, %v873
      %v879 = vadd.f32 %v865, %v873
      %v880 = vadd.f32 %v866, %v873
      %v881 = vadd.f32 %v867, %v873
      %v882 = vadd.f32 %v868, %v873
      %v883 = vpack.c.bf16 %v876, %v875
      %v884 = vpack.c.bf16 %v878, %v877
      %v885 = vpack.c.bf16 %v880, %v879
      %v886 = vpack.c.bf16 %v882, %v881
      %v887 = vld [vmem:[%s3] sm:$0xf]
      %v888 = vld [vmem:[%s3 + $0x4] sm:$0xf]
      %v889 = vld [vmem:[%s3 + $0x8] sm:$0xf]
      %v890 = vld [vmem:[%s3 + $0xc] sm:$0xf]
      %v895 = vunpack.c.l.b16 %v887
      %v896 = vunpack.c.l.b16 %v888
      %v897 = vunpack.c.l.b16 %v889
      %v898 = vunpack.c.l.b16 %v890
      %v899 = vpack.c.b16 %v896, %v895
      %v900 = vpack.c.b16 %v898, %v897
      %v904 = vsel %vm749, %v883, 0
      %v907 = vsel %vm749, %v884, 0
      %v910 = vsel %vm749, %v885, 0
      %v913 = vsel %vm749, %v886, 0
      %915 = vmatprep.subr.bf16.mxu0 0
      %916 = vmatpush1.bf16.msra.mxu0 %v899
      %917 = vmatprep.subr.bf16.mxu0 0
      %918 = vmatpush1.bf16.msra.mxu0 %v900
      %919 = vmatprep.subr.bf16.mxu0 0
      %920 = vmatpush1.bf16.msra.mxu0 0
      %921 = vmatprep.subr.bf16.mxu0 0
      %922 = vmatpush1.bf16.msra.mxu0 0
      %923 = vmatprep.subr.bf16.mxu0 0
      %924 = vmatpush1.bf16.msra.mxu0 0
      %925 = vmatprep.subr.bf16.mxu0 0
      %926 = vmatpush1.bf16.msra.mxu0 0
      %927 = vmatprep.subr.bf16.mxu0 0
      %928 = vmatpush1.bf16.msra.mxu0 0
      %929 = vmatprep.subr.bf16.mxu0 0
      %930 = vmatpush1.bf16.msra.mxu0 0
      %931 = vmatprep.subr.bf16.mxu0 0
      %932 = vmatpush1.bf16.msra.mxu0 0
      %933 = vmatprep.subr.bf16.mxu0 0
      %934 = vmatpush1.bf16.msra.mxu0 0
      %935 = vmatprep.subr.bf16.mxu0 0
      %936 = vmatpush1.bf16.msra.mxu0 0
      %937 = vmatprep.subr.bf16.mxu0 0
      %938 = vmatpush1.bf16.msra.mxu0 0
      %939 = vmatprep.subr.bf16.mxu0 0
      %940 = vmatpush1.bf16.msra.mxu0 0
      %941 = vmatprep.subr.bf16.mxu0 0
      %942 = vmatpush1.bf16.msra.mxu0 0
      %943 = vmatprep.subr.bf16.mxu0 0
      %944 = vmatpush1.bf16.msra.mxu0 0
      %945 = vmatprep.subr.bf16.mxu0 0
      %946 = vmatpush1.bf16.msra.mxu0 0
      %947 = vmatprep.mubr.bf16.mxu0 0
      %948 = vmatmul.mubr.bf16.gmra.mrb[0].mxu0 %v904
      %v949 = vpop.f32.mrb[0].mxu0
      %v950 = vadd.f32 0.0, %v949
      %v951 = vpop.f32.mrb[0].mxu0
      %v952 = vpop.f32.mrb[0].mxu0
      %v953 = vadd.f32 0.0, %v952
      %v954 = vpop.f32.mrb[0].mxu0
      %955 = vmatprep.mubr.bf16.mxu0 0
      %956 = vmatmul.mubr.bf16.gmra.mrb[0].mxu0 %v907
      %v957 = vpop.f32.mrb[0].mxu0
      %v958 = vadd.f32 0.0, %v957
      %v959 = vpop.f32.mrb[0].mxu0
      %v960 = vpop.f32.mrb[0].mxu0
      %v961 = vadd.f32 0.0, %v960
      %v962 = vpop.f32.mrb[0].mxu0
      %963 = vmatprep.mubr.bf16.mxu0 0
      %964 = vmatmul.mubr.bf16.gmra.mrb[0].mxu0 %v910
      %v965 = vpop.f32.mrb[0].mxu0
      %v966 = vadd.f32 0.0, %v965
      %v967 = vpop.f32.mrb[0].mxu0
      %v968 = vpop.f32.mrb[0].mxu0
      %v969 = vadd.f32 0.0, %v968
      %v970 = vpop.f32.mrb[0].mxu0
      %971 = vmatprep.mubr.bf16.mxu0 0
      %972 = vmatmul.mubr.bf16.gmra.mrb[0].mxu0 %v913
      %v973 = vpop.f32.mrb[0].mxu0
      %v974 = vadd.f32 0.0, %v973
      %v975 = vpop.f32.mrb[0].mxu0
      %v976 = vpop.f32.mrb[0].mxu0
      %v977 = vadd.f32 0.0, %v976
      %v978 = vpop.f32.mrb[0].mxu0
      %979 = vdwg.mxu0
      %v980 = vld [vmem:[%s4] sm:$0xf]
      %v981 = vld [vmem:[%s4 + $0x4] sm:$0xf]
      %v982 = vld [vmem:[%s4 + $0x8] sm:$0xf]
      %v983 = vld [vmem:[%s4 + $0xc] sm:$0xf]
      %v988 = vunpack.c.l.b16 %v980
      %v989 = vunpack.c.l.b16 %v981
      %v990 = vunpack.c.l.b16 %v982
      %v991 = vunpack.c.l.b16 %v983
      %v992 = vpack.c.b16 %v989, %v988
      %v993 = vpack.c.b16 %v991, %v990
      %996 = vmatprep.subr.bf16.mxu0 0
      %997 = vmatpush1.bf16.msra.mxu0 %v992
      %998 = vmatprep.subr.bf16.mxu0 0
      %999 = vmatpush1.bf16.msra.mxu0 %v993
      %1000 = vmatprep.subr.bf16.mxu0 0
      %1001 = vmatpush1.bf16.msra.mxu0 0
      %1002 = vmatprep.subr.bf16.mxu0 0
      %1003 = vmatpush1.bf16.msra.mxu0 0
      %1004 = vmatprep.subr.bf16.mxu0 0
      %1005 = vmatpush1.bf16.msra.mxu0 0
      %1006 = vmatprep.subr.bf16.mxu0 0
      %1007 = vmatpush1.bf16.msra.mxu0 0
      %1008 = vmatprep.subr.bf16.mxu0 0
      %1009 = vmatpush1.bf16.msra.mxu0 0
      %1010 = vmatprep.subr.bf16.mxu0 0
      %1011 = vmatpush1.bf16.msra.mxu0 0
      %1012 = vmatprep.subr.bf16.mxu0 0
      %1013 = vmatpush1.bf16.msra.mxu0 0
      %1014 = vmatprep.subr.bf16.mxu0 0
      %1015 = vmatpush1.bf16.msra.mxu0 0
      %1016 = vmatprep.subr.bf16.mxu0 0
      %1017 = vmatpush1.bf16.msra.mxu0 0
      %1018 = vmatprep.subr.bf16.mxu0 0
      %1019 = vmatpush1.bf16.msra.mxu0 0
      %1020 = vmatprep.subr.bf16.mxu0 0
      %1021 = vmatpush1.bf16.msra.mxu0 0
      %1022 = vmatprep.subr.bf16.mxu0 0
      %1023 = vmatpush1.bf16.msra.mxu0 0
      %1024 = vmatprep.subr.bf16.mxu0 0
      %1025 = vmatpush1.bf16.msra.mxu0 0
      %1026 = vmatprep.subr.bf16.mxu0 0
      %1027 = vmatpush1.bf16.msra.mxu0 0
      %1028 = vmatprep.mubr.bf16.mxu0 0
      %1029 = vmatmul.mubr.bf16.gmra.mrb[0].mxu0 %v904
      %v1030 = vpop.f32.mrb[0].mxu0
      %v1031 = vadd.f32 0.0, %v1030
      %v1032 = vpop.f32.mrb[0].mxu0
      %v1033 = vpop.f32.mrb[0].mxu0
      %v1034 = vadd.f32 0.0, %v1033
      %v1035 = vpop.f32.mrb[0].mxu0
      %1036 = vmatprep.mubr.bf16.mxu0 0
      %1037 = vmatmul.mubr.bf16.gmra.mrb[0].mxu0 %v907
      %v1038 = vpop.f32.mrb[0].mxu0
      %v1039 = vadd.f32 0.0, %v1038
      %v1040 = vpop.f32.mrb[0].mxu0
      %v1041 = vpop.f32.mrb[0].mxu0
      %v1042 = vadd.f32 0.0, %v1041
      %v1043 = vpop.f32.mrb[0].mxu0
      %1044 = vmatprep.mubr.bf16.mxu0 0
      %1045 = vmatmul.mubr.bf16.gmra.mrb[0].mxu0 %v910
      %v1046 = vpop.f32.mrb[0].mxu0
      %v1047 = vadd.f32 0.0, %v1046
      %v1048 = vpop.f32.mrb[0].mxu0
      %v1049 = vpop.f32.mrb[0].mxu0
      %v1050 = vadd.f32 0.0, %v1049
      %v1051 = vpop.f32.mrb[0].mxu0
      %1052 = vmatprep.mubr.bf16.mxu0 0
      %1053 = vmatmul.mubr.bf16.gmra.mrb[0].mxu0 %v913
      %v1054 = vpop.f32.mrb[0].mxu0
      %v1055 = vadd.f32 0.0, %v1054
      %v1056 = vpop.f32.mrb[0].mxu0
      %v1057 = vpop.f32.mrb[0].mxu0
      %v1058 = vadd.f32 0.0, %v1057
      %v1059 = vpop.f32.mrb[0].mxu0
      %1060 = vdwg.mxu0
      %v1061 = vld [vmem:[%s5] sm:$0x7]
      %v1062 = vlaneseq
      %v1063 = vshrl.u32 %v1062, 7
      %v1064 = vadd.s32 %v1063, 8
      %v1065 = vadd.s32 %v1063, 16
      %v1066 = vadd.s32 %v1063, 24
      %v1067 = vadd.s32 %v1063, 32
      %v1068 = vadd.s32 %v1063, 40
      %v1069 = vadd.s32 %v1063, 48
      %v1070 = vadd.s32 %v1063, 56
      %vm1071 = vcmp.ge.s32.totalorder %v1063, 1
      %vm1072 = vcmp.ge.s32.totalorder %v1064, 1
      %vm1073 = vcmp.ge.s32.totalorder %v1065, 1
      %vm1074 = vcmp.ge.s32.totalorder %v1066, 1
      %vm1075 = vcmp.ge.s32.totalorder %v1067, 1
      %vm1076 = vcmp.ge.s32.totalorder %v1068, 1
      %vm1077 = vcmp.ge.s32.totalorder %v1069, 1
      %vm1078 = vcmp.ge.s32.totalorder %v1070, 1
      %v1079 = vrot.slane %v950, 7
      %v1080 = vrot.slane %v953, 7
      %v1081 = vrot.slane %v958, 7
      %v1082 = vrot.slane %v961, 7
      %v1083 = vrot.slane %v966, 7
      %v1084 = vrot.slane %v969, 7
      %v1085 = vrot.slane %v974, 7
      %v1086 = vrot.slane %v977, 7
      %vm1087 = vcmp.lt.s32.totalorder %v1063, 1
      %v1088 = vsel %vm1087, %v1085, %v1086
      %v1089 = vsel %vm1087, %v1084, %v1085
      %v1090 = vsel %vm1087, %v1083, %v1084
      %v1091 = vsel %vm1087, %v1082, %v1083
      %v1092 = vsel %vm1087, %v1081, %v1082
      %v1093 = vsel %vm1087, %v1080, %v1081
      %v1094 = vsel %vm1087, %v1079, %v1080
      %v1095 = vsel %vm1087, %v1086, %v1079
      %v1096 = vsel %vm1071, %v1095, 0.0
      %v1097 = vsel %vm1072, %v1094, 0.0
      %v1098 = vsel %vm1073, %v1093, 0.0
      %v1099 = vsel %vm1074, %v1092, 0.0
      %v1100 = vsel %vm1075, %v1091, 0.0
      %v1101 = vsel %vm1076, %v1090, 0.0
      %v1102 = vsel %vm1077, %v1089, 0.0
      %v1103 = vsel %vm1078, %v1088, 0.0
      %vm1104 = vcmp.le.s32.totalorder %v1063, 62
      %vm1105 = vcmp.le.s32.totalorder %v1064, 62
      %vm1106 = vcmp.le.s32.totalorder %v1065, 62
      %vm1107 = vcmp.le.s32.totalorder %v1066, 62
      %vm1108 = vcmp.le.s32.totalorder %v1067, 62
      %vm1109 = vcmp.le.s32.totalorder %v1068, 62
      %vm1110 = vcmp.le.s32.totalorder %v1069, 62
      %vm1111 = vcmp.le.s32.totalorder %v1070, 62
      %v1112 = vrot.slane %v950, 1
      %v1113 = vrot.slane %v953, 1
      %v1114 = vrot.slane %v958, 1
      %v1115 = vrot.slane %v961, 1
      %v1116 = vrot.slane %v966, 1
      %v1117 = vrot.slane %v969, 1
      %v1118 = vrot.slane %v974, 1
      %v1119 = vrot.slane %v977, 1
      %vm1120 = vcmp.lt.s32.totalorder %v1063, 7
      %v1121 = vsel %vm1120, %v1118, %v1119
      %v1122 = vsel %vm1120, %v1117, %v1118
      %v1123 = vsel %vm1120, %v1116, %v1117
      %v1124 = vsel %vm1120, %v1115, %v1116
      %v1125 = vsel %vm1120, %v1114, %v1115
      %v1126 = vsel %vm1120, %v1113, %v1114
      %v1127 = vsel %vm1120, %v1112, %v1113
      %v1128 = vsel %vm1120, %v1119, %v1112
      %v1129 = vsel %vm1104, %v1127, 0.0
      %v1130 = vsel %vm1105, %v1126, 0.0
      %v1131 = vsel %vm1106, %v1125, 0.0
      %v1132 = vsel %vm1107, %v1124, 0.0
      %v1133 = vsel %vm1108, %v1123, 0.0
      %v1134 = vsel %vm1109, %v1122, 0.0
      %v1135 = vsel %vm1110, %v1121, 0.0
      %v1136 = vsel %vm1111, %v1128, 0.0
      %v1137 = vlaneseq
      %v1138 = vshrl.u32 %v1137, 7
      %v1139 = vsub.s32 0, %v1138
      %v1140 = vrot.slane %v1061, %v1139
      %v1141 = vmul.f32 %v1096, %v1140
      %v1142 = vmul.f32 %v1097, %v1140
      %v1143 = vmul.f32 %v1098, %v1140
      %v1144 = vmul.f32 %v1099, %v1140
      %v1145 = vmul.f32 %v1100, %v1140
      %v1146 = vmul.f32 %v1101, %v1140
      %v1147 = vmul.f32 %v1102, %v1140
      %v1148 = vmul.f32 %v1103, %v1140
      %v1149 = vlaneseq
      %v1150 = vshrl.u32 %v1149, 7
      %v1151 = vsub.s32 1, %v1150
      %v1152 = vrot.slane %v1061, %v1151
      %v1153 = vmul.f32 %v950, %v1152
      %v1154 = vmul.f32 %v953, %v1152
      %v1155 = vmul.f32 %v958, %v1152
      %v1156 = vmul.f32 %v961, %v1152
      %v1157 = vmul.f32 %v966, %v1152
      %v1158 = vmul.f32 %v969, %v1152
      %v1159 = vmul.f32 %v974, %v1152
      %v1160 = vmul.f32 %v977, %v1152
      %v1161 = vadd.f32 %v1141, %v1153
      %v1162 = vadd.f32 %v1142, %v1154
      %v1163 = vadd.f32 %v1143, %v1155
      %v1164 = vadd.f32 %v1144, %v1156
      %v1165 = vadd.f32 %v1145, %v1157
      %v1166 = vadd.f32 %v1146, %v1158
      %v1167 = vadd.f32 %v1147, %v1159
      %v1168 = vadd.f32 %v1148, %v1160
      %v1169 = vlaneseq
      %v1170 = vshrl.u32 %v1169, 7
      %v1171 = vsub.s32 2, %v1170
      %v1172 = vrot.slane %v1061, %v1171
      %v1173 = vmul.f32 %v1129, %v1172
      %v1174 = vmul.f32 %v1130, %v1172
      %v1175 = vmul.f32 %v1131, %v1172
      %v1176 = vmul.f32 %v1132, %v1172
      %v1177 = vmul.f32 %v1133, %v1172
      %v1178 = vmul.f32 %v1134, %v1172
      %v1179 = vmul.f32 %v1135, %v1172
      %v1180 = vmul.f32 %v1136, %v1172
      %v1181 = vadd.f32 %v1161, %v1173
      %v1182 = vadd.f32 %v1162, %v1174
      %v1183 = vadd.f32 %v1163, %v1175
      %v1184 = vadd.f32 %v1164, %v1176
      %v1185 = vadd.f32 %v1165, %v1177
      %v1186 = vadd.f32 %v1166, %v1178
      %v1187 = vadd.f32 %v1167, %v1179
      %v1188 = vadd.f32 %v1168, %v1180
      %v1189 = vxor.u32 %v1181, 2147483648
      %v1190 = vxor.u32 %v1182, 2147483648
      %v1191 = vxor.u32 %v1183, 2147483648
      %v1192 = vxor.u32 %v1184, 2147483648
      %v1193 = vxor.u32 %v1185, 2147483648
      %v1194 = vxor.u32 %v1186, 2147483648
      %v1195 = vxor.u32 %v1187, 2147483648
      %v1196 = vxor.u32 %v1188, 2147483648
      %v1197 = vmul.f32 %v1189, 1.442695
      %v1198 = vpow.pop %v1197
      %v1199 = vmul.f32 %v1190, 1.442695
      %v1200 = vpow.pop %v1199
      %v1201 = vmul.f32 %v1191, 1.442695
      %v1202 = vpow.pop %v1201
      %v1203 = vmul.f32 %v1192, 1.442695
      %v1204 = vpow.pop %v1203
      %v1205 = vmul.f32 %v1193, 1.442695
      %v1206 = vpow.pop %v1205
      %v1207 = vmul.f32 %v1194, 1.442695
      %v1208 = vpow.pop %v1207
      %v1209 = vmul.f32 %v1195, 1.442695
      %v1210 = vpow.pop %v1209
      %v1211 = vmul.f32 %v1196, 1.442695
      %v1212 = vpow.pop %v1211
      %v1213 = vadd.f32 %v1198, 1.0
      %v1214 = vadd.f32 %v1200, 1.0
      %v1215 = vadd.f32 %v1202, 1.0
      %v1216 = vadd.f32 %v1204, 1.0
      %v1217 = vadd.f32 %v1206, 1.0
      %v1218 = vadd.f32 %v1208, 1.0
      %v1219 = vadd.f32 %v1210, 1.0
      %v1220 = vadd.f32 %v1212, 1.0
      %v1221 = vrcp.pop %v1213
      %v1222 = vmul.f32 1.0, %v1221
      %v1223 = vrcp.pop %v1214
      %v1224 = vmul.f32 1.0, %v1223
      %v1225 = vrcp.pop %v1215
      %v1226 = vmul.f32 1.0, %v1225
      %v1227 = vrcp.pop %v1216
      %v1228 = vmul.f32 1.0, %v1227
      %v1229 = vrcp.pop %v1217
      %v1230 = vmul.f32 1.0, %v1229
      %v1231 = vrcp.pop %v1218
      %v1232 = vmul.f32 1.0, %v1231
      %v1233 = vrcp.pop %v1219
      %v1234 = vmul.f32 1.0, %v1233
      %v1235 = vrcp.pop %v1220
      %v1236 = vmul.f32 1.0, %v1235
      %v1237 = vmul.f32 %v1181, %v1222
      %v1238 = vmul.f32 %v1182, %v1224
      %v1239 = vmul.f32 %v1183, %v1226
      %v1240 = vmul.f32 %v1184, %v1228
      %v1241 = vmul.f32 %v1185, %v1230
      %v1242 = vmul.f32 %v1186, %v1232
      %v1243 = vmul.f32 %v1187, %v1234
      %v1244 = vmul.f32 %v1188, %v1236
      %v1245 = vld [vmem:[%s6] sm:$0x7]
      %v1246 = vrot.slane %v1031, 7
      %v1247 = vrot.slane %v1034, 7
      %v1248 = vrot.slane %v1039, 7
      %v1249 = vrot.slane %v1042, 7
      %v1250 = vrot.slane %v1047, 7
      %v1251 = vrot.slane %v1050, 7
      %v1252 = vrot.slane %v1055, 7
      %v1253 = vrot.slane %v1058, 7
      %v1254 = vsel %vm1087, %v1252, %v1253
      %v1255 = vsel %vm1087, %v1251, %v1252
      %v1256 = vsel %vm1087, %v1250, %v1251
      %v1257 = vsel %vm1087, %v1249, %v1250
      %v1258 = vsel %vm1087, %v1248, %v1249
      %v1259 = vsel %vm1087, %v1247, %v1248
      %v1260 = vsel %vm1087, %v1246, %v1247
      %v1261 = vsel %vm1087, %v1253, %v1246
      %v1262 = vsel %vm1071, %v1261, 0.0
      %v1263 = vsel %vm1072, %v1260, 0.0
      %v1264 = vsel %vm1073, %v1259, 0.0
      %v1265 = vsel %vm1074, %v1258, 0.0
      %v1266 = vsel %vm1075, %v1257, 0.0
      %v1267 = vsel %vm1076, %v1256, 0.0
      %v1268 = vsel %vm1077, %v1255, 0.0
      %v1269 = vsel %vm1078, %v1254, 0.0
      %v1270 = vrot.slane %v1031, 1
      %v1271 = vrot.slane %v1034, 1
      %v1272 = vrot.slane %v1039, 1
      %v1273 = vrot.slane %v1042, 1
      %v1274 = vrot.slane %v1047, 1
      %v1275 = vrot.slane %v1050, 1
      %v1276 = vrot.slane %v1055, 1
      %v1277 = vrot.slane %v1058, 1
      %v1278 = vsel %vm1120, %v1276, %v1277
      %v1279 = vsel %vm1120, %v1275, %v1276
      %v1280 = vsel %vm1120, %v1274, %v1275
      %v1281 = vsel %vm1120, %v1273, %v1274
      %v1282 = vsel %vm1120, %v1272, %v1273
      %v1283 = vsel %vm1120, %v1271, %v1272
      %v1284 = vsel %vm1120, %v1270, %v1271
      %v1285 = vsel %vm1120, %v1277, %v1270
      %v1286 = vsel %vm1104, %v1284, 0.0
      %v1287 = vsel %vm1105, %v1283, 0.0
      %v1288 = vsel %vm1106, %v1282, 0.0
      %v1289 = vsel %vm1107, %v1281, 0.0
      %v1290 = vsel %vm1108, %v1280, 0.0
      %v1291 = vsel %vm1109, %v1279, 0.0
      %v1292 = vsel %vm1110, %v1278, 0.0
      %v1293 = vsel %vm1111, %v1285, 0.0
      %v1294 = vlaneseq
      %v1295 = vshrl.u32 %v1294, 7
      %v1296 = vsub.s32 0, %v1295
      %v1297 = vrot.slane %v1245, %v1296
      %v1298 = vmul.f32 %v1262, %v1297
      %v1299 = vmul.f32 %v1263, %v1297
      %v1300 = vmul.f32 %v1264, %v1297
      %v1301 = vmul.f32 %v1265, %v1297
      %v1302 = vmul.f32 %v1266, %v1297
      %v1303 = vmul.f32 %v1267, %v1297
      %v1304 = vmul.f32 %v1268, %v1297
      %v1305 = vmul.f32 %v1269, %v1297
      %v1306 = vlaneseq
      %v1307 = vshrl.u32 %v1306, 7
      %v1308 = vsub.s32 1, %v1307
      %v1309 = vrot.slane %v1245, %v1308
      %v1310 = vmul.f32 %v1031, %v1309
      %v1311 = vmul.f32 %v1034, %v1309
      %v1312 = vmul.f32 %v1039, %v1309
      %v1313 = vmul.f32 %v1042, %v1309
      %v1314 = vmul.f32 %v1047, %v1309
      %v1315 = vmul.f32 %v1050, %v1309
      %v1316 = vmul.f32 %v1055, %v1309
      %v1317 = vmul.f32 %v1058, %v1309
      %v1318 = vadd.f32 %v1298, %v1310
      %v1319 = vadd.f32 %v1299, %v1311
      %v1320 = vadd.f32 %v1300, %v1312
      %v1321 = vadd.f32 %v1301, %v1313
      %v1322 = vadd.f32 %v1302, %v1314
      %v1323 = vadd.f32 %v1303, %v1315
      %v1324 = vadd.f32 %v1304, %v1316
      %v1325 = vadd.f32 %v1305, %v1317
      %v1326 = vlaneseq
      %v1327 = vshrl.u32 %v1326, 7
      %v1328 = vsub.s32 2, %v1327
      %v1329 = vrot.slane %v1245, %v1328
      %v1330 = vmul.f32 %v1286, %v1329
      %v1331 = vmul.f32 %v1287, %v1329
      %v1332 = vmul.f32 %v1288, %v1329
      %v1333 = vmul.f32 %v1289, %v1329
      %v1334 = vmul.f32 %v1290, %v1329
      %v1335 = vmul.f32 %v1291, %v1329
      %v1336 = vmul.f32 %v1292, %v1329
      %v1337 = vmul.f32 %v1293, %v1329
      %v1338 = vadd.f32 %v1318, %v1330
      %v1339 = vadd.f32 %v1319, %v1331
      %v1340 = vadd.f32 %v1320, %v1332
      %v1341 = vadd.f32 %v1321, %v1333
      %v1342 = vadd.f32 %v1322, %v1334
      %v1343 = vadd.f32 %v1323, %v1335
      %v1344 = vadd.f32 %v1324, %v1336
      %v1345 = vadd.f32 %v1325, %v1337
      %v1346 = vxor.u32 %v1338, 2147483648
      %v1347 = vxor.u32 %v1339, 2147483648
      %v1348 = vxor.u32 %v1340, 2147483648
      %v1349 = vxor.u32 %v1341, 2147483648
      %v1350 = vxor.u32 %v1342, 2147483648
      %v1351 = vxor.u32 %v1343, 2147483648
      %v1352 = vxor.u32 %v1344, 2147483648
      %v1353 = vxor.u32 %v1345, 2147483648
      %v1354 = vmul.f32 %v1346, 1.442695
      %v1355 = vpow.pop %v1354
      %v1356 = vmul.f32 %v1347, 1.442695
      %v1357 = vpow.pop %v1356
      %v1358 = vmul.f32 %v1348, 1.442695
      %v1359 = vpow.pop %v1358
      %v1360 = vmul.f32 %v1349, 1.442695
      %v1361 = vpow.pop %v1360
      %v1362 = vmul.f32 %v1350, 1.442695
      %v1363 = vpow.pop %v1362
      %v1364 = vmul.f32 %v1351, 1.442695
      %v1365 = vpow.pop %v1364
      %v1366 = vmul.f32 %v1352, 1.442695
      %v1367 = vpow.pop %v1366
      %v1368 = vmul.f32 %v1353, 1.442695
      %v1369 = vpow.pop %v1368
      %v1370 = vadd.f32 %v1355, 1.0
      %v1371 = vadd.f32 %v1357, 1.0
      %v1372 = vadd.f32 %v1359, 1.0
      %v1373 = vadd.f32 %v1361, 1.0
      %v1374 = vadd.f32 %v1363, 1.0
      %v1375 = vadd.f32 %v1365, 1.0
      %v1376 = vadd.f32 %v1367, 1.0
      %v1377 = vadd.f32 %v1369, 1.0
      %v1378 = vrcp.pop %v1370
      %v1379 = vmul.f32 1.0, %v1378
      %v1380 = vrcp.pop %v1371
      %v1381 = vmul.f32 1.0, %v1380
      %v1382 = vrcp.pop %v1372
      %v1383 = vmul.f32 1.0, %v1382
      %v1384 = vrcp.pop %v1373
      %v1385 = vmul.f32 1.0, %v1384
      %v1386 = vrcp.pop %v1374
      %v1387 = vmul.f32 1.0, %v1386
      %v1388 = vrcp.pop %v1375
      %v1389 = vmul.f32 1.0, %v1388
      %v1390 = vrcp.pop %v1376
      %v1391 = vmul.f32 1.0, %v1390
      %v1392 = vrcp.pop %v1377
      %v1393 = vmul.f32 1.0, %v1392
      %v1394 = vmul.f32 %v1338, %v1379
      %v1395 = vmul.f32 %v1339, %v1381
      %v1396 = vmul.f32 %v1340, %v1383
      %v1397 = vmul.f32 %v1341, %v1385
      %v1398 = vmul.f32 %v1342, %v1387
      %v1399 = vmul.f32 %v1343, %v1389
      %v1400 = vmul.f32 %v1344, %v1391
      %v1401 = vmul.f32 %v1345, %v1393
      %v1402 = vld [vmem:[%s7] sm:$0xff]
      %v1403 = vld [vmem:[%s7 + $0x8] sm:$0xff]
      %vm1404 = vcmask 130048
      %v1406 = vsel %vm1404, %v1237, 0
      %v1409 = vsel %vm1404, %v1238, 0
      %v1412 = vsel %vm1404, %v1239, 0
      %v1415 = vsel %vm1404, %v1240, 0
      %v1418 = vsel %vm1404, %v1241, 0
      %v1421 = vsel %vm1404, %v1242, 0
      %v1424 = vsel %vm1404, %v1243, 0
      %v1427 = vsel %vm1404, %v1244, 0
      %1429 = vmatprep.subr.mxu0 0.0
      %1430 = vmatpush1.msra.mxu0 %v1402
      %1431 = vmatprep.subr.mxu0 0.0
      %1432 = vmatpush1.msra.mxu0 %v1403
      %1433 = vmatprep.subr.mxu0 0.0
      %1434 = vmatpush1.msra.mxu0 0.0
      %1435 = vmatprep.subr.mxu0 0.0
      %1436 = vmatpush1.msra.mxu0 0.0
      %1437 = vmatprep.subr.mxu0 0.0
      %1438 = vmatpush1.msra.mxu0 0.0
      %1439 = vmatprep.subr.mxu0 0.0
      %1440 = vmatpush1.msra.mxu0 0.0
      %1441 = vmatprep.subr.mxu0 0.0
      %1442 = vmatpush1.msra.mxu0 0.0
      %1443 = vmatprep.subr.mxu0 0.0
      %1444 = vmatpush1.msra.mxu0 0.0
      %1445 = vmatprep.subr.mxu0 0.0
      %1446 = vmatpush1.msra.mxu0 0.0
      %1447 = vmatprep.subr.mxu0 0.0
      %1448 = vmatpush1.msra.mxu0 0.0
      %1449 = vmatprep.subr.mxu0 0.0
      %1450 = vmatpush1.msra.mxu0 0.0
      %1451 = vmatprep.subr.mxu0 0.0
      %1452 = vmatpush1.msra.mxu0 0.0
      %1453 = vmatprep.subr.mxu0 0.0
      %1454 = vmatpush1.msra.mxu0 0.0
      %1455 = vmatprep.subr.mxu0 0.0
      %1456 = vmatpush1.msra.mxu0 0.0
      %1457 = vmatprep.subr.mxu0 0.0
      %1458 = vmatpush1.msra.mxu0 0.0
      %1459 = vmatprep.subr.mxu0 0.0
      %1460 = vmatpush1.msra.mxu0 0.0
      %1461 = vmatprep.subr.mxu0 0.0
      %1462 = vmatpush1.msra.mxu0 0.0
      %1463 = vmatprep.subr.mxu0 0.0
      %1464 = vmatpush1.msra.mxu0 0.0
      %1465 = vmatprep.subr.mxu0 0.0
      %1466 = vmatpush1.msra.mxu0 0.0
      %1467 = vmatprep.subr.mxu0 0.0
      %1468 = vmatpush1.msra.mxu0 0.0
      %1469 = vmatprep.subr.mxu0 0.0
      %1470 = vmatpush1.msra.mxu0 0.0
      %1471 = vmatprep.subr.mxu0 0.0
      %1472 = vmatpush1.msra.mxu0 0.0
      %1473 = vmatprep.subr.mxu0 0.0
      %1474 = vmatpush1.msra.mxu0 0.0
      %1475 = vmatprep.subr.mxu0 0.0
      %1476 = vmatpush1.msra.mxu0 0.0
      %1477 = vmatprep.subr.mxu0 0.0
      %1478 = vmatpush1.msra.mxu0 0.0
      %1479 = vmatprep.subr.mxu0 0.0
      %1480 = vmatpush1.msra.mxu0 0.0
      %1481 = vmatprep.subr.mxu0 0.0
      %1482 = vmatpush1.msra.mxu0 0.0
      %1483 = vmatprep.subr.mxu0 0.0
      %1484 = vmatpush1.msra.mxu0 0.0
      %1485 = vmatprep.subr.mxu0 0.0
      %1486 = vmatpush1.msra.mxu0 0.0
      %1487 = vmatprep.subr.mxu0 0.0
      %1488 = vmatpush1.msra.mxu0 0.0
      %1489 = vmatprep.subr.mxu0 0.0
      %1490 = vmatpush1.msra.mxu0 0.0
      %1491 = vmatprep.subr.mxu0 0.0
      %1492 = vmatpush1.msra.mxu0 0.0
      %1493 = vmatprep.mubr.f32.mxu0 0.0
      %1494 = vmatmul.mubr.f32.gmra.mrb[0].mxu0 %v1406
      %v1495 = vpop.f32.mrb[0].mxu0
      %v1496 = vadd.f32 0.0, %v1495
      %v1497 = vpop.f32.mrb[0].mxu0
      %1498 = vmatprep.mubr.f32.mxu0 0.0
      %1499 = vmatmul.mubr.f32.gmra.mrb[0].mxu0 %v1409
      %v1500 = vpop.f32.mrb[0].mxu0
      %v1501 = vadd.f32 0.0, %v1500
      %v1502 = vpop.f32.mrb[0].mxu0
      %1503 = vmatprep.mubr.f32.mxu0 0.0
      %1504 = vmatmul.mubr.f32.gmra.mrb[0].mxu0 %v1412
      %v1505 = vpop.f32.mrb[0].mxu0
      %v1506 = vadd.f32 0.0, %v1505
      %v1507 = vpop.f32.mrb[0].mxu0
      %1508 = vmatprep.mubr.f32.mxu0 0.0
      %1509 = vmatmul.mubr.f32.gmra.mrb[0].mxu0 %v1415
      %v1510 = vpop.f32.mrb[0].mxu0
      %v1511 = vadd.f32 0.0, %v1510
      %v1512 = vpop.f32.mrb[0].mxu0
      %1513 = vmatprep.mubr.f32.mxu0 0.0
      %1514 = vmatmul.mubr.f32.gmra.mrb[0].mxu0 %v1418
      %v1515 = vpop.f32.mrb[0].mxu0
      %v1516 = vadd.f32 0.0, %v1515
      %v1517 = vpop.f32.mrb[0].mxu0
      %1518 = vmatprep.mubr.f32.mxu0 0.0
      %1519 = vmatmul.mubr.f32.gmra.mrb[0].mxu0 %v1421
      %v1520 = vpop.f32.mrb[0].mxu0
      %v1521 = vadd.f32 0.0, %v1520
      %v1522 = vpop.f32.mrb[0].mxu0
      %1523 = vmatprep.mubr.f32.mxu0 0.0
      %1524 = vmatmul.mubr.f32.gmra.mrb[0].mxu0 %v1424
      %v1525 = vpop.f32.mrb[0].mxu0
      %v1526 = vadd.f32 0.0, %v1525
      %v1527 = vpop.f32.mrb[0].mxu0
      %1528 = vmatprep.mubr.f32.mxu0 0.0
      %1529 = vmatmul.mubr.f32.gmra.mrb[0].mxu0 %v1427
      %v1530 = vpop.f32.mrb[0].mxu0
      %v1531 = vadd.f32 0.0, %v1530
      %v1532 = vpop.f32.mrb[0].mxu0
      %1533 = vdwg.mxu0
      %v1534 = vld [vmem:[%s8] sm:$0x3]
      %v1535 = vld [vmem:[%s9] sm:$0x1]
      %v1537 = vlaneseq
      %v1538 = vshrl.u32 %v1537, 7
      %v1539 = vsub.s32 0, %v1538
      %v1540 = vrot.slane %v1535, %v1539
      %vm1542 = vcmask 15360
      %v1544 = vsel %vm1542, %v1496, 0
      %v1547 = vsel %vm1542, %v1501, 0
      %v1550 = vsel %vm1542, %v1506, 0
      %v1553 = vsel %vm1542, %v1511, 0
      %v1556 = vsel %vm1542, %v1516, 0
      %v1559 = vsel %vm1542, %v1521, 0
      %v1562 = vsel %vm1542, %v1526, 0
      %v1565 = vsel %vm1542, %v1531, 0
      %vm1567 = vcmask 1041408
      %v1569 = vsel %vm1567, %v1534, 0
      %1571 = vmatprep.subr.mxu0 0.0
      %1572 = vmatpush1.msra.mxu0 %v1569
      %1573 = vmatprep.subr.mxu0 0.0
      %1574 = vmatpush1.msra.mxu0 0.0
      %1575 = vmatprep.subr.mxu0 0.0
      %1576 = vmatpush1.msra.mxu0 0.0
      %1577 = vmatprep.subr.mxu0 0.0
      %1578 = vmatpush1.msra.mxu0 0.0
      %1579 = vmatprep.subr.mxu0 0.0
      %1580 = vmatpush1.msra.mxu0 0.0
      %1581 = vmatprep.subr.mxu0 0.0
      %1582 = vmatpush1.msra.mxu0 0.0
      %1583 = vmatprep.subr.mxu0 0.0
      %1584 = vmatpush1.msra.mxu0 0.0
      %1585 = vmatprep.subr.mxu0 0.0
      %1586 = vmatpush1.msra.mxu0 0.0
      %1587 = vmatprep.subr.mxu0 0.0
      %1588 = vmatpush1.msra.mxu0 0.0
      %1589 = vmatprep.subr.mxu0 0.0
      %1590 = vmatpush1.msra.mxu0 0.0
      %1591 = vmatprep.subr.mxu0 0.0
      %1592 = vmatpush1.msra.mxu0 0.0
      %1593 = vmatprep.subr.mxu0 0.0
      %1594 = vmatpush1.msra.mxu0 0.0
      %1595 = vmatprep.subr.mxu0 0.0
      %1596 = vmatpush1.msra.mxu0 0.0
      %1597 = vmatprep.subr.mxu0 0.0
      %1598 = vmatpush1.msra.mxu0 0.0
      %1599 = vmatprep.subr.mxu0 0.0
      %1600 = vmatpush1.msra.mxu0 0.0
      %1601 = vmatprep.subr.mxu0 0.0
      %1602 = vmatpush1.msra.mxu0 0.0
      %1603 = vmatprep.subr.mxu0 0.0
      %1604 = vmatpush1.msra.mxu0 0.0
      %1605 = vmatprep.subr.mxu0 0.0
      %1606 = vmatpush1.msra.mxu0 0.0
      %1607 = vmatprep.subr.mxu0 0.0
      %1608 = vmatpush1.msra.mxu0 0.0
      %1609 = vmatprep.subr.mxu0 0.0
      %1610 = vmatpush1.msra.mxu0 0.0
      %1611 = vmatprep.subr.mxu0 0.0
      %1612 = vmatpush1.msra.mxu0 0.0
      %1613 = vmatprep.subr.mxu0 0.0
      %1614 = vmatpush1.msra.mxu0 0.0
      %1615 = vmatprep.subr.mxu0 0.0
      %1616 = vmatpush1.msra.mxu0 0.0
      %1617 = vmatprep.subr.mxu0 0.0
      %1618 = vmatpush1.msra.mxu0 0.0
      %1619 = vmatprep.subr.mxu0 0.0
      %1620 = vmatpush1.msra.mxu0 0.0
      %1621 = vmatprep.subr.mxu0 0.0
      %1622 = vmatpush1.msra.mxu0 0.0
      %1623 = vmatprep.subr.mxu0 0.0
      %1624 = vmatpush1.msra.mxu0 0.0
      %1625 = vmatprep.subr.mxu0 0.0
      %1626 = vmatpush1.msra.mxu0 0.0
      %1627 = vmatprep.subr.mxu0 0.0
      %1628 = vmatpush1.msra.mxu0 0.0
      %1629 = vmatprep.subr.mxu0 0.0
      %1630 = vmatpush1.msra.mxu0 0.0
      %1631 = vmatprep.subr.mxu0 0.0
      %1632 = vmatpush1.msra.mxu0 0.0
      %1633 = vmatprep.subr.mxu0 0.0
      %1634 = vmatpush1.msra.mxu0 0.0
      %1635 = vmatprep.mubr.f32.mxu0 0.0
      %1636 = vmatmul.mubr.f32.gmra.mrb[0].mxu0 %v1544
      %v1637 = vpop.f32.mrb[0].mxu0
      %v1638 = vadd.f32 %v1540, %v1637
      %v1639 = vpop.f32.mrb[0].mxu0
      %1640 = vmatprep.mubr.f32.mxu0 0.0
      %1641 = vmatmul.mubr.f32.gmra.mrb[0].mxu0 %v1547
      %v1642 = vpop.f32.mrb[0].mxu0
      %v1643 = vadd.f32 %v1540, %v1642
      %v1644 = vpop.f32.mrb[0].mxu0
      %1645 = vmatprep.mubr.f32.mxu0 0.0
      %1646 = vmatmul.mubr.f32.gmra.mrb[0].mxu0 %v1550
      %v1647 = vpop.f32.mrb[0].mxu0
      %v1648 = vadd.f32 %v1540, %v1647
      %v1649 = vpop.f32.mrb[0].mxu0
      %1650 = vmatprep.mubr.f32.mxu0 0.0
      %1651 = vmatmul.mubr.f32.gmra.mrb[0].mxu0 %v1553
      %v1652 = vpop.f32.mrb[0].mxu0
      %v1653 = vadd.f32 %v1540, %v1652
      %v1654 = vpop.f32.mrb[0].mxu0
      %1655 = vmatprep.mubr.f32.mxu0 0.0
      %1656 = vmatmul.mubr.f32.gmra.mrb[0].mxu0 %v1556
      %v1657 = vpop.f32.mrb[0].mxu0
      %v1658 = vadd.f32 %v1540, %v1657
      %v1659 = vpop.f32.mrb[0].mxu0
      %1660 = vmatprep.mubr.f32.mxu0 0.0
      %1661 = vmatmul.mubr.f32.gmra.mrb[0].mxu0 %v1559
      %v1662 = vpop.f32.mrb[0].mxu0
      %v1663 = vadd.f32 %v1540, %v1662
      %v1664 = vpop.f32.mrb[0].mxu0
      %1665 = vmatprep.mubr.f32.mxu0 0.0
      %1666 = vmatmul.mubr.f32.gmra.mrb[0].mxu0 %v1562
      %v1667 = vpop.f32.mrb[0].mxu0
      %v1668 = vadd.f32 %v1540, %v1667
      %v1669 = vpop.f32.mrb[0].mxu0
      %1670 = vmatprep.mubr.f32.mxu0 0.0
      %1671 = vmatmul.mubr.f32.gmra.mrb[0].mxu0 %v1565
      %v1672 = vpop.f32.mrb[0].mxu0
      %v1673 = vadd.f32 %v1540, %v1672
      %v1674 = vpop.f32.mrb[0].mxu0
      %1675 = vdwg.mxu0
      %v1676 = vadd.f32 %v1638, %v1540
      %v1677 = vadd.f32 %v1643, %v1540
      %v1678 = vadd.f32 %v1648, %v1540
      %v1679 = vadd.f32 %v1653, %v1540
      %v1680 = vadd.f32 %v1658, %v1540
      %v1681 = vadd.f32 %v1663, %v1540
      %v1682 = vadd.f32 %v1668, %v1540
      %v1683 = vadd.f32 %v1673, %v1540
      %v1684 = vmax.f32 %v1676, 0.0
      %v1685 = vmax.f32 %v1677, 0.0
      %v1686 = vmax.f32 %v1678, 0.0
      %v1687 = vmax.f32 %v1679, 0.0
      %v1688 = vmax.f32 %v1680, 0.0
      %v1689 = vmax.f32 %v1681, 0.0
      %v1690 = vmax.f32 %v1682, 0.0
      %v1691 = vmax.f32 %v1683, 0.0
      %v1692 = vand.u32 2147483647, %v1676
      %v1693 = vand.u32 2147483647, %v1677
      %v1694 = vand.u32 2147483647, %v1678
      %v1695 = vand.u32 2147483647, %v1679
      %v1696 = vand.u32 2147483647, %v1680
      %v1697 = vand.u32 2147483647, %v1681
      %v1698 = vand.u32 2147483647, %v1682
      %v1699 = vand.u32 2147483647, %v1683
      %v1700 = vsub.f32 0.0, %v1692
      %v1701 = vsub.f32 0.0, %v1693
      %v1702 = vsub.f32 0.0, %v1694
      %v1703 = vsub.f32 0.0, %v1695
      %v1704 = vsub.f32 0.0, %v1696
      %v1705 = vsub.f32 0.0, %v1697
      %v1706 = vsub.f32 0.0, %v1698
      %v1707 = vsub.f32 0.0, %v1699
      %v1708 = vmul.f32 %v1700, 1.442695
      %v1709 = vpow.pop %v1708
      %v1710 = vmul.f32 %v1701, 1.442695
      %v1711 = vpow.pop %v1710
      %v1712 = vmul.f32 %v1702, 1.442695
      %v1713 = vpow.pop %v1712
      %v1714 = vmul.f32 %v1703, 1.442695
      %v1715 = vpow.pop %v1714
      %v1716 = vmul.f32 %v1704, 1.442695
      %v1717 = vpow.pop %v1716
      %v1718 = vmul.f32 %v1705, 1.442695
      %v1719 = vpow.pop %v1718
      %v1720 = vmul.f32 %v1706, 1.442695
      %v1721 = vpow.pop %v1720
      %v1722 = vmul.f32 %v1707, 1.442695
      %v1723 = vpow.pop %v1722
      %v1724 = vadd.f32 %v1709, 1.0
      %v1725 = vadd.f32 %v1711, 1.0
      %v1726 = vadd.f32 %v1713, 1.0
      %v1727 = vadd.f32 %v1715, 1.0
      %v1728 = vadd.f32 %v1717, 1.0
      %v1729 = vadd.f32 %v1719, 1.0
      %v1730 = vadd.f32 %v1721, 1.0
      %v1731 = vadd.f32 %v1723, 1.0
      %v1732 = vlog2.pop %v1724
      %v1733 = vmul.f32 %v1732, 0.6931472
      %v1734 = vlog2.pop %v1725
      %v1735 = vmul.f32 %v1734, 0.6931472
      %v1736 = vlog2.pop %v1726
      %v1737 = vmul.f32 %v1736, 0.6931472
      %v1738 = vlog2.pop %v1727
      %v1739 = vmul.f32 %v1738, 0.6931472
      %v1740 = vlog2.pop %v1728
      %v1741 = vmul.f32 %v1740, 0.6931472
      %v1742 = vlog2.pop %v1729
      %v1743 = vmul.f32 %v1742, 0.6931472
      %v1744 = vlog2.pop %v1730
      %v1745 = vmul.f32 %v1744, 0.6931472
      %v1746 = vlog2.pop %v1731
      %v1747 = vmul.f32 %v1746, 0.6931472
      %v1748 = vadd.f32 %v1684, %v1733
      %v1749 = vadd.f32 %v1685, %v1735
      %v1750 = vadd.f32 %v1686, %v1737
      %v1751 = vadd.f32 %v1687, %v1739
      %v1752 = vadd.f32 %v1688, %v1741
      %v1753 = vadd.f32 %v1689, %v1743
      %v1754 = vadd.f32 %v1690, %v1745
      %v1755 = vadd.f32 %v1691, %v1747
      %v1756 = vld [vmem:[%s10] sm:$0x1]
      %v1757 = vmul.f32 %v1756, 1.442695
      %v1758 = vpow.pop %v1757
      %v1759 = vsub.f32 0.0, %v1758
      %v1760 = vld [vmem:[%s11] sm:$0xff]
      %v1761 = vld [vmem:[%s11 + $0x8] sm:$0xff]
      %1762 = vmatprep.subr.mxu0 0.0
      %1763 = vmatpush1.msra.mxu0 %v1760
      %1764 = vmatprep.subr.mxu0 0.0
      %1765 = vmatpush1.msra.mxu0 %v1761
      %1766 = vmatprep.subr.mxu0 0.0
      %1767 = vmatpush1.msra.mxu0 0.0
      %1768 = vmatprep.subr.mxu0 0.0
      %1769 = vmatpush1.msra.mxu0 0.0
      %1770 = vmatprep.subr.mxu0 0.0
      %1771 = vmatpush1.msra.mxu0 0.0
      %1772 = vmatprep.subr.mxu0 0.0
      %1773 = vmatpush1.msra.mxu0 0.0
      %1774 = vmatprep.subr.mxu0 0.0
      %1775 = vmatpush1.msra.mxu0 0.0
      %1776 = vmatprep.subr.mxu0 0.0
      %1777 = vmatpush1.msra.mxu0 0.0
      %1778 = vmatprep.subr.mxu0 0.0
      %1779 = vmatpush1.msra.mxu0 0.0
      %1780 = vmatprep.subr.mxu0 0.0
      %1781 = vmatpush1.msra.mxu0 0.0
      %1782 = vmatprep.subr.mxu0 0.0
      %1783 = vmatpush1.msra.mxu0 0.0
      %1784 = vmatprep.subr.mxu0 0.0
      %1785 = vmatpush1.msra.mxu0 0.0
      %1786 = vmatprep.subr.mxu0 0.0
      %1787 = vmatpush1.msra.mxu0 0.0
      %1788 = vmatprep.subr.mxu0 0.0
      %1789 = vmatpush1.msra.mxu0 0.0
      %1790 = vmatprep.subr.mxu0 0.0
      %1791 = vmatpush1.msra.mxu0 0.0
      %1792 = vmatprep.subr.mxu0 0.0
      %1793 = vmatpush1.msra.mxu0 0.0
      %1794 = vmatprep.subr.mxu0 0.0
      %1795 = vmatpush1.msra.mxu0 0.0
      %1796 = vmatprep.subr.mxu0 0.0
      %1797 = vmatpush1.msra.mxu0 0.0
      %1798 = vmatprep.subr.mxu0 0.0
      %1799 = vmatpush1.msra.mxu0 0.0
      %1800 = vmatprep.subr.mxu0 0.0
      %1801 = vmatpush1.msra.mxu0 0.0
      %1802 = vmatprep.subr.mxu0 0.0
      %1803 = vmatpush1.msra.mxu0 0.0
      %1804 = vmatprep.subr.mxu0 0.0
      %1805 = vmatpush1.msra.mxu0 0.0
      %1806 = vmatprep.subr.mxu0 0.0
      %1807 = vmatpush1.msra.mxu0 0.0
      %1808 = vmatprep.subr.mxu0 0.0
      %1809 = vmatpush1.msra.mxu0 0.0
      %1810 = vmatprep.subr.mxu0 0.0
      %1811 = vmatpush1.msra.mxu0 0.0
      %1812 = vmatprep.subr.mxu0 0.0
      %1813 = vmatpush1.msra.mxu0 0.0
      %1814 = vmatprep.subr.mxu0 0.0
      %1815 = vmatpush1.msra.mxu0 0.0
      %1816 = vmatprep.subr.mxu0 0.0
      %1817 = vmatpush1.msra.mxu0 0.0
      %1818 = vmatprep.subr.mxu0 0.0
      %1819 = vmatpush1.msra.mxu0 0.0
      %1820 = vmatprep.subr.mxu0 0.0
      %1821 = vmatpush1.msra.mxu0 0.0
      %1822 = vmatprep.subr.mxu0 0.0
      %1823 = vmatpush1.msra.mxu0 0.0
      %1824 = vmatprep.subr.mxu0 0.0
      %1825 = vmatpush1.msra.mxu0 0.0
      %1826 = vmatprep.mubr.f32.mxu0 0.0
      %1827 = vmatmul.mubr.f32.gmra.mrb[0].mxu0 %v1406
      %v1828 = vpop.f32.mrb[0].mxu0
      %v1829 = vadd.f32 0.0, %v1828
      %v1830 = vpop.f32.mrb[0].mxu0
      %1831 = vmatprep.mubr.f32.mxu0 0.0
      %1832 = vmatmul.mubr.f32.gmra.mrb[0].mxu0 %v1409
      %v1833 = vpop.f32.mrb[0].mxu0
      %v1834 = vadd.f32 0.0, %v1833
      %v1835 = vpop.f32.mrb[0].mxu0
      %1836 = vmatprep.mubr.f32.mxu0 0.0
      %1837 = vmatmul.mubr.f32.gmra.mrb[0].mxu0 %v1412
      %v1838 = vpop.f32.mrb[0].mxu0
      %v1839 = vadd.f32 0.0, %v1838
      %v1840 = vpop.f32.mrb[0].mxu0
      %1841 = vmatprep.mubr.f32.mxu0 0.0
      %1842 = vmatmul.mubr.f32.gmra.mrb[0].mxu0 %v1415
      %v1843 = vpop.f32.mrb[0].mxu0
      %v1844 = vadd.f32 0.0, %v1843
      %v1845 = vpop.f32.mrb[0].mxu0
      %1846 = vmatprep.mubr.f32.mxu0 0.0
      %1847 = vmatmul.mubr.f32.gmra.mrb[0].mxu0 %v1418
      %v1848 = vpop.f32.mrb[0].mxu0
      %v1849 = vadd.f32 0.0, %v1848
      %v1850 = vpop.f32.mrb[0].mxu0
      %1851 = vmatprep.mubr.f32.mxu0 0.0
      %1852 = vmatmul.mubr.f32.gmra.mrb[0].mxu0 %v1421
      %v1853 = vpop.f32.mrb[0].mxu0
      %v1854 = vadd.f32 0.0, %v1853
      %v1855 = vpop.f32.mrb[0].mxu0
      %1856 = vmatprep.mubr.f32.mxu0 0.0
      %1857 = vmatmul.mubr.f32.gmra.mrb[0].mxu0 %v1424
      %v1858 = vpop.f32.mrb[0].mxu0
      %v1859 = vadd.f32 0.0, %v1858
      %v1860 = vpop.f32.mrb[0].mxu0
      %1861 = vmatprep.mubr.f32.mxu0 0.0
      %1862 = vmatmul.mubr.f32.gmra.mrb[0].mxu0 %v1427
      %v1863 = vpop.f32.mrb[0].mxu0
      %v1864 = vadd.f32 0.0, %v1863
      %v1865 = vpop.f32.mrb[0].mxu0
      %1866 = vdwg.mxu0
      %v1867 = vld [vmem:[%s12] sm:$0xff]
      %v1868 = vld [vmem:[%s12 + $0x8] sm:$0xff]
      %1869 = vmatprep.subr.mxu0 0.0
      %1870 = vmatpush1.msra.mxu0 %v1867
      %1871 = vmatprep.subr.mxu0 0.0
      %1872 = vmatpush1.msra.mxu0 %v1868
      %1873 = vmatprep.subr.mxu0 0.0
      %1874 = vmatpush1.msra.mxu0 0.0
      %1875 = vmatprep.subr.mxu0 0.0
      %1876 = vmatpush1.msra.mxu0 0.0
      %1877 = vmatprep.subr.mxu0 0.0
      %1878 = vmatpush1.msra.mxu0 0.0
      %1879 = vmatprep.subr.mxu0 0.0
      %1880 = vmatpush1.msra.mxu0 0.0
      %1881 = vmatprep.subr.mxu0 0.0
      %1882 = vmatpush1.msra.mxu0 0.0
      %1883 = vmatprep.subr.mxu0 0.0
      %1884 = vmatpush1.msra.mxu0 0.0
      %1885 = vmatprep.subr.mxu0 0.0
      %1886 = vmatpush1.msra.mxu0 0.0
      %1887 = vmatprep.subr.mxu0 0.0
      %1888 = vmatpush1.msra.mxu0 0.0
      %1889 = vmatprep.subr.mxu0 0.0
      %1890 = vmatpush1.msra.mxu0 0.0
      %1891 = vmatprep.subr.mxu0 0.0
      %1892 = vmatpush1.msra.mxu0 0.0
      %1893 = vmatprep.subr.mxu0 0.0
      %1894 = vmatpush1.msra.mxu0 0.0
      %1895 = vmatprep.subr.mxu0 0.0
      %1896 = vmatpush1.msra.mxu0 0.0
      %1897 = vmatprep.subr.mxu0 0.0
      %1898 = vmatpush1.msra.mxu0 0.0
      %1899 = vmatprep.subr.mxu0 0.0
      %1900 = vmatpush1.msra.mxu0 0.0
      %1901 = vmatprep.subr.mxu0 0.0
      %1902 = vmatpush1.msra.mxu0 0.0
      %1903 = vmatprep.subr.mxu0 0.0
      %1904 = vmatpush1.msra.mxu0 0.0
      %1905 = vmatprep.subr.mxu0 0.0
      %1906 = vmatpush1.msra.mxu0 0.0
      %1907 = vmatprep.subr.mxu0 0.0
      %1908 = vmatpush1.msra.mxu0 0.0
      %1909 = vmatprep.subr.mxu0 0.0
      %1910 = vmatpush1.msra.mxu0 0.0
      %1911 = vmatprep.subr.mxu0 0.0
      %1912 = vmatpush1.msra.mxu0 0.0
      %1913 = vmatprep.subr.mxu0 0.0
      %1914 = vmatpush1.msra.mxu0 0.0
      %1915 = vmatprep.subr.mxu0 0.0
      %1916 = vmatpush1.msra.mxu0 0.0
      %1917 = vmatprep.subr.mxu0 0.0
      %1918 = vmatpush1.msra.mxu0 0.0
      %1919 = vmatprep.subr.mxu0 0.0
      %1920 = vmatpush1.msra.mxu0 0.0
      %1921 = vmatprep.subr.mxu0 0.0
      %1922 = vmatpush1.msra.mxu0 0.0
      %1923 = vmatprep.subr.mxu0 0.0
      %1924 = vmatpush1.msra.mxu0 0.0
      %1925 = vmatprep.subr.mxu0 0.0
      %1926 = vmatpush1.msra.mxu0 0.0
      %1927 = vmatprep.subr.mxu0 0.0
      %1928 = vmatpush1.msra.mxu0 0.0
      %1929 = vmatprep.subr.mxu0 0.0
      %1930 = vmatpush1.msra.mxu0 0.0
      %1931 = vmatprep.subr.mxu0 0.0
      %1932 = vmatpush1.msra.mxu0 0.0
      %1933 = vmatprep.mubr.f32.mxu0 0.0
      %1934 = vmatmul.mubr.f32.gmra.mrb[0].mxu0 %v1406
      %v1935 = vpop.f32.mrb[0].mxu0
      %v1936 = vadd.f32 0.0, %v1935
      %v1937 = vpop.f32.mrb[0].mxu0
      %1938 = vmatprep.mubr.f32.mxu0 0.0
      %1939 = vmatmul.mubr.f32.gmra.mrb[0].mxu0 %v1409
      %v1940 = vpop.f32.mrb[0].mxu0
      %v1941 = vadd.f32 0.0, %v1940
      %v1942 = vpop.f32.mrb[0].mxu0
      %1943 = vmatprep.mubr.f32.mxu0 0.0
      %1944 = vmatmul.mubr.f32.gmra.mrb[0].mxu0 %v1412
      %v1945 = vpop.f32.mrb[0].mxu0
      %v1946 = vadd.f32 0.0, %v1945
      %v1947 = vpop.f32.mrb[0].mxu0
      %1948 = vmatprep.mubr.f32.mxu0 0.0
      %1949 = vmatmul.mubr.f32.gmra.mrb[0].mxu0 %v1415
      %v1950 = vpop.f32.mrb[0].mxu0
      %v1951 = vadd.f32 0.0, %v1950
      %v1952 = vpop.f32.mrb[0].mxu0
      %1953 = vmatprep.mubr.f32.mxu0 0.0
      %1954 = vmatmul.mubr.f32.gmra.mrb[0].mxu0 %v1418
      %v1955 = vpop.f32.mrb[0].mxu0
      %v1956 = vadd.f32 0.0, %v1955
      %v1957 = vpop.f32.mrb[0].mxu0
      %1958 = vmatprep.mubr.f32.mxu0 0.0
      %1959 = vmatmul.mubr.f32.gmra.mrb[0].mxu0 %v1421
      %v1960 = vpop.f32.mrb[0].mxu0
      %v1961 = vadd.f32 0.0, %v1960
      %v1962 = vpop.f32.mrb[0].mxu0
      %1963 = vmatprep.mubr.f32.mxu0 0.0
      %1964 = vmatmul.mubr.f32.gmra.mrb[0].mxu0 %v1424
      %v1965 = vpop.f32.mrb[0].mxu0
      %v1966 = vadd.f32 0.0, %v1965
      %v1967 = vpop.f32.mrb[0].mxu0
      %1968 = vmatprep.mubr.f32.mxu0 0.0
      %1969 = vmatmul.mubr.f32.gmra.mrb[0].mxu0 %v1427
      %v1970 = vpop.f32.mrb[0].mxu0
      %v1971 = vadd.f32 0.0, %v1970
      %v1972 = vpop.f32.mrb[0].mxu0
      %1973 = vdwg.mxu0
      %v1974 = vld [vmem:[%s13] sm:$0xff]
      %v1975 = vld [vmem:[%s13 + $0x8] sm:$0xff]
      %1976 = vmatprep.subr.mxu0 0.0
      %1977 = vmatpush1.msra.mxu0 %v1974
      %1978 = vmatprep.subr.mxu0 0.0
      %1979 = vmatpush1.msra.mxu0 %v1975
      %1980 = vmatprep.subr.mxu0 0.0
      %1981 = vmatpush1.msra.mxu0 0.0
      %1982 = vmatprep.subr.mxu0 0.0
      %1983 = vmatpush1.msra.mxu0 0.0
      %1984 = vmatprep.subr.mxu0 0.0
      %1985 = vmatpush1.msra.mxu0 0.0
      %1986 = vmatprep.subr.mxu0 0.0
      %1987 = vmatpush1.msra.mxu0 0.0
      %1988 = vmatprep.subr.mxu0 0.0
      %1989 = vmatpush1.msra.mxu0 0.0
      %1990 = vmatprep.subr.mxu0 0.0
      %1991 = vmatpush1.msra.mxu0 0.0
      %1992 = vmatprep.subr.mxu0 0.0
      %1993 = vmatpush1.msra.mxu0 0.0
      %1994 = vmatprep.subr.mxu0 0.0
      %1995 = vmatpush1.msra.mxu0 0.0
      %1996 = vmatprep.subr.mxu0 0.0
      %1997 = vmatpush1.msra.mxu0 0.0
      %1998 = vmatprep.subr.mxu0 0.0
      %1999 = vmatpush1.msra.mxu0 0.0
      %2000 = vmatprep.subr.mxu0 0.0
      %2001 = vmatpush1.msra.mxu0 0.0
      %2002 = vmatprep.subr.mxu0 0.0
      %2003 = vmatpush1.msra.mxu0 0.0
      %2004 = vmatprep.subr.mxu0 0.0
      %2005 = vmatpush1.msra.mxu0 0.0
      %2006 = vmatprep.subr.mxu0 0.0
      %2007 = vmatpush1.msra.mxu0 0.0
      %2008 = vmatprep.subr.mxu0 0.0
      %2009 = vmatpush1.msra.mxu0 0.0
      %2010 = vmatprep.subr.mxu0 0.0
      %2011 = vmatpush1.msra.mxu0 0.0
      %2012 = vmatprep.subr.mxu0 0.0
      %2013 = vmatpush1.msra.mxu0 0.0
      %2014 = vmatprep.subr.mxu0 0.0
      %2015 = vmatpush1.msra.mxu0 0.0
      %2016 = vmatprep.subr.mxu0 0.0
      %2017 = vmatpush1.msra.mxu0 0.0
      %2018 = vmatprep.subr.mxu0 0.0
      %2019 = vmatpush1.msra.mxu0 0.0
      %2020 = vmatprep.subr.mxu0 0.0
      %2021 = vmatpush1.msra.mxu0 0.0
      %2022 = vmatprep.subr.mxu0 0.0
      %2023 = vmatpush1.msra.mxu0 0.0
      %2024 = vmatprep.subr.mxu0 0.0
      %2025 = vmatpush1.msra.mxu0 0.0
      %2026 = vmatprep.subr.mxu0 0.0
      %2027 = vmatpush1.msra.mxu0 0.0
      %2028 = vmatprep.subr.mxu0 0.0
      %2029 = vmatpush1.msra.mxu0 0.0
      %2030 = vmatprep.subr.mxu0 0.0
      %2031 = vmatpush1.msra.mxu0 0.0
      %2032 = vmatprep.subr.mxu0 0.0
      %2033 = vmatpush1.msra.mxu0 0.0
      %2034 = vmatprep.subr.mxu0 0.0
      %2035 = vmatpush1.msra.mxu0 0.0
      %2036 = vmatprep.subr.mxu0 0.0
      %2037 = vmatpush1.msra.mxu0 0.0
      %2038 = vmatprep.subr.mxu0 0.0
      %2039 = vmatpush1.msra.mxu0 0.0
      %2040 = vmatprep.mubr.f32.mxu0 0.0
      %2041 = vmatmul.mubr.f32.gmra.mrb[0].mxu0 %v1406
      %v2042 = vpop.f32.mrb[0].mxu0
      %v2043 = vadd.f32 0.0, %v2042
      %v2044 = vpop.f32.mrb[0].mxu0
      %2045 = vmatprep.mubr.f32.mxu0 0.0
      %2046 = vmatmul.mubr.f32.gmra.mrb[0].mxu0 %v1409
      %v2047 = vpop.f32.mrb[0].mxu0
      %v2048 = vadd.f32 0.0, %v2047
      %v2049 = vpop.f32.mrb[0].mxu0
      %2050 = vmatprep.mubr.f32.mxu0 0.0
      %2051 = vmatmul.mubr.f32.gmra.mrb[0].mxu0 %v1412
      %v2052 = vpop.f32.mrb[0].mxu0
      %v2053 = vadd.f32 0.0, %v2052
      %v2054 = vpop.f32.mrb[0].mxu0
      %2055 = vmatprep.mubr.f32.mxu0 0.0
      %2056 = vmatmul.mubr.f32.gmra.mrb[0].mxu0 %v1415
      %v2057 = vpop.f32.mrb[0].mxu0
      %v2058 = vadd.f32 0.0, %v2057
      %v2059 = vpop.f32.mrb[0].mxu0
      %2060 = vmatprep.mubr.f32.mxu0 0.0
      %2061 = vmatmul.mubr.f32.gmra.mrb[0].mxu0 %v1418
      %v2062 = vpop.f32.mrb[0].mxu0
      %v2063 = vadd.f32 0.0, %v2062
      %v2064 = vpop.f32.mrb[0].mxu0
      %2065 = vmatprep.mubr.f32.mxu0 0.0
      %2066 = vmatmul.mubr.f32.gmra.mrb[0].mxu0 %v1421
      %v2067 = vpop.f32.mrb[0].mxu0
      %v2068 = vadd.f32 0.0, %v2067
      %v2069 = vpop.f32.mrb[0].mxu0
      %2070 = vmatprep.mubr.f32.mxu0 0.0
      %2071 = vmatmul.mubr.f32.gmra.mrb[0].mxu0 %v1424
      %v2072 = vpop.f32.mrb[0].mxu0
      %v2073 = vadd.f32 0.0, %v2072
      %v2074 = vpop.f32.mrb[0].mxu0
      %2075 = vmatprep.mubr.f32.mxu0 0.0
      %2076 = vmatmul.mubr.f32.gmra.mrb[0].mxu0 %v1427
      %v2077 = vpop.f32.mrb[0].mxu0
      %v2078 = vadd.f32 0.0, %v2077
      %v2079 = vpop.f32.mrb[0].mxu0
      %2080 = vdwg.mxu0
      %v2082 = vlaneseq
      %v2083 = vshrl.u32 %v2082, 7
      %v2084 = vsub.s32 0, %v2083
      %v2085 = vrot.slane %v1759, %v2084
      %v2087 = vmul.f32 %v1748, %v2085
      %v2088 = vmul.f32 %v1749, %v2085
      %v2089 = vmul.f32 %v1750, %v2085
      %v2090 = vmul.f32 %v1751, %v2085
      %v2091 = vmul.f32 %v1752, %v2085
      %v2092 = vmul.f32 %v1753, %v2085
      %v2093 = vmul.f32 %v1754, %v2085
      %v2094 = vmul.f32 %v1755, %v2085
      %v2095 = vmul.f32 %v2087, 1.442695
      %v2096 = vpow.pop %v2095
      %v2097 = vmul.f32 %v2088, 1.442695
      %v2098 = vpow.pop %v2097
      %v2099 = vmul.f32 %v2089, 1.442695
      %v2100 = vpow.pop %v2099
      %v2101 = vmul.f32 %v2090, 1.442695
      %v2102 = vpow.pop %v2101
      %v2103 = vmul.f32 %v2091, 1.442695
      %v2104 = vpow.pop %v2103
      %v2105 = vmul.f32 %v2092, 1.442695
      %v2106 = vpow.pop %v2105
      %v2107 = vmul.f32 %v2093, 1.442695
      %v2108 = vpow.pop %v2107
      %v2109 = vmul.f32 %v2094, 1.442695
      %v2110 = vpow.pop %v2109
      %v2111 = vmul.f32 %v1748, %v2043
      %v2112 = vmul.f32 %v1749, %v2048
      %v2113 = vmul.f32 %v1750, %v2053
      %v2114 = vmul.f32 %v1751, %v2058
      %v2115 = vmul.f32 %v1752, %v2063
      %v2116 = vmul.f32 %v1753, %v2068
      %v2117 = vmul.f32 %v1754, %v2073
      %v2118 = vmul.f32 %v1755, %v2078
      %v2119 = vmul.f32 %v2111, %v1829
      %v2120 = vmul.f32 %v2112, %v1834
      %v2121 = vmul.f32 %v2113, %v1839
      %v2122 = vmul.f32 %v2114, %v1844
      %v2123 = vmul.f32 %v2115, %v1849
      %v2124 = vmul.f32 %v2116, %v1854
      %v2125 = vmul.f32 %v2117, %v1859
      %v2126 = vmul.f32 %v2118, %v1864
      %v2127 = vrot.slane %v2096, 7
      %v2128 = vrot.slane %v2098, 7
      %v2129 = vrot.slane %v2100, 7
      %v2130 = vrot.slane %v2102, 7
      %v2131 = vrot.slane %v2104, 7
      %v2132 = vrot.slane %v2106, 7
      %v2133 = vrot.slane %v2108, 7
      %v2134 = vrot.slane %v2110, 7
      %v2135 = vsel %vm1087, %v2133, %v2134
      %v2136 = vsel %vm1087, %v2132, %v2133
      %v2137 = vsel %vm1087, %v2131, %v2132
      %v2138 = vsel %vm1087, %v2130, %v2131
      %v2139 = vsel %vm1087, %v2129, %v2130
      %v2140 = vsel %vm1087, %v2128, %v2129
      %v2141 = vsel %vm1087, %v2127, %v2128
      %v2142 = vsel %vm1087, %v2134, %v2127
      %v2143 = vsel %vm1071, %v2142, 1.0
      %v2144 = vsel %vm1072, %v2141, 1.0
      %v2145 = vsel %vm1073, %v2140, 1.0
      %v2146 = vsel %vm1074, %v2139, 1.0
      %v2147 = vsel %vm1075, %v2138, 1.0
      %v2148 = vsel %vm1076, %v2137, 1.0
      %v2149 = vsel %vm1077, %v2136, 1.0
      %v2150 = vsel %vm1078, %v2135, 1.0
      %v2151 = vrot.slane %v2119, 7
      %v2152 = vrot.slane %v2120, 7
      %v2153 = vrot.slane %v2121, 7
      %v2154 = vrot.slane %v2122, 7
      %v2155 = vrot.slane %v2123, 7
      %v2156 = vrot.slane %v2124, 7
      %v2157 = vrot.slane %v2125, 7
      %v2158 = vrot.slane %v2126, 7
      %v2159 = vsel %vm1087, %v2157, %v2158
      %v2160 = vsel %vm1087, %v2156, %v2157
      %v2161 = vsel %vm1087, %v2155, %v2156
      %v2162 = vsel %vm1087, %v2154, %v2155
      %v2163 = vsel %vm1087, %v2153, %v2154
      %v2164 = vsel %vm1087, %v2152, %v2153
      %v2165 = vsel %vm1087, %v2151, %v2152
      %v2166 = vsel %vm1087, %v2158, %v2151
      %v2167 = vsel %vm1071, %v2166, 0.0
      %v2168 = vsel %vm1072, %v2165, 0.0
      %v2169 = vsel %vm1073, %v2164, 0.0
      %v2170 = vsel %vm1074, %v2163, 0.0
      %v2171 = vsel %vm1075, %v2162, 0.0
      %v2172 = vsel %vm1076, %v2161, 0.0
      %v2173 = vsel %vm1077, %v2160, 0.0
      %v2174 = vsel %vm1078, %v2159, 0.0
      %v2175 = vmul.f32 %v2096, %v2167
      %v2176 = vmul.f32 %v2098, %v2168
      %v2177 = vmul.f32 %v2100, %v2169
      %v2178 = vmul.f32 %v2102, %v2170
      %v2179 = vmul.f32 %v2104, %v2171
      %v2180 = vmul.f32 %v2106, %v2172
      %v2181 = vmul.f32 %v2108, %v2173
      %v2182 = vmul.f32 %v2110, %v2174
      %v2183 = vadd.f32 %v2175, %v2119
      %v2184 = vadd.f32 %v2176, %v2120
      %v2185 = vadd.f32 %v2177, %v2121
      %v2186 = vadd.f32 %v2178, %v2122
      %v2187 = vadd.f32 %v2179, %v2123
      %v2188 = vadd.f32 %v2180, %v2124
      %v2189 = vadd.f32 %v2181, %v2125
      %v2190 = vadd.f32 %v2182, %v2126
      %v2191 = vmul.f32 %v2096, %v2143
      %v2192 = vmul.f32 %v2098, %v2144
      %v2193 = vmul.f32 %v2100, %v2145
      %v2194 = vmul.f32 %v2102, %v2146
      %v2195 = vmul.f32 %v2104, %v2147
      %v2196 = vmul.f32 %v2106, %v2148
      %v2197 = vmul.f32 %v2108, %v2149
      %v2198 = vmul.f32 %v2110, %v2150
      %vm2199 = vcmp.ge.s32.totalorder %v1063, 2
      %vm2200 = vcmp.ge.s32.totalorder %v1064, 2
      %vm2201 = vcmp.ge.s32.totalorder %v1065, 2
      %vm2202 = vcmp.ge.s32.totalorder %v1066, 2
      %vm2203 = vcmp.ge.s32.totalorder %v1067, 2
      %vm2204 = vcmp.ge.s32.totalorder %v1068, 2
      %vm2205 = vcmp.ge.s32.totalorder %v1069, 2
      %vm2206 = vcmp.ge.s32.totalorder %v1070, 2
      %v2207 = vrot.slane %v2191, 6
      %v2208 = vrot.slane %v2192, 6
      %v2209 = vrot.slane %v2193, 6
      %v2210 = vrot.slane %v2194, 6
      %v2211 = vrot.slane %v2195, 6
      %v2212 = vrot.slane %v2196, 6
      %v2213 = vrot.slane %v2197, 6
      %v2214 = vrot.slane %v2198, 6
      %vm2215 = vcmp.lt.s32.totalorder %v1063, 2
      %v2216 = vsel %vm2215, %v2213, %v2214
      %v2217 = vsel %vm2215, %v2212, %v2213
      %v2218 = vsel %vm2215, %v2211, %v2212
      %v2219 = vsel %vm2215, %v2210, %v2211
      %v2220 = vsel %vm2215, %v2209, %v2210
      %v2221 = vsel %vm2215, %v2208, %v2209
      %v2222 = vsel %vm2215, %v2207, %v2208
      %v2223 = vsel %vm2215, %v2214, %v2207
      %v2224 = vsel %vm2199, %v2223, 1.0
      %v2225 = vsel %vm2200, %v2222, 1.0
      %v2226 = vsel %vm2201, %v2221, 1.0
      %v2227 = vsel %vm2202, %v2220, 1.0
      %v2228 = vsel %vm2203, %v2219, 1.0
      %v2229 = vsel %vm2204, %v2218, 1.0
      %v2230 = vsel %vm2205, %v2217, 1.0
      %v2231 = vsel %vm2206, %v2216, 1.0
      %v2232 = vrot.slane %v2183, 6
      %v2233 = vrot.slane %v2184, 6
      %v2234 = vrot.slane %v2185, 6
      %v2235 = vrot.slane %v2186, 6
      %v2236 = vrot.slane %v2187, 6
      %v2237 = vrot.slane %v2188, 6
      %v2238 = vrot.slane %v2189, 6
      %v2239 = vrot.slane %v2190, 6
      %v2240 = vsel %vm2215, %v2238, %v2239
      %v2241 = vsel %vm2215, %v2237, %v2238
      %v2242 = vsel %vm2215, %v2236, %v2237
      %v2243 = vsel %vm2215, %v2235, %v2236
      %v2244 = vsel %vm2215, %v2234, %v2235
      %v2245 = vsel %vm2215, %v2233, %v2234
      %v2246 = vsel %vm2215, %v2232, %v2233
      %v2247 = vsel %vm2215, %v2239, %v2232
      %v2248 = vsel %vm2199, %v2247, 0.0
      %v2249 = vsel %vm2200, %v2246, 0.0
      %v2250 = vsel %vm2201, %v2245, 0.0
      %v2251 = vsel %vm2202, %v2244, 0.0
      %v2252 = vsel %vm2203, %v2243, 0.0
      %v2253 = vsel %vm2204, %v2242, 0.0
      %v2254 = vsel %vm2205, %v2241, 0.0
      %v2255 = vsel %vm2206, %v2240, 0.0
      %v2256 = vmul.f32 %v2191, %v2248
      %v2257 = vmul.f32 %v2192, %v2249
      %v2258 = vmul.f32 %v2193, %v2250
      %v2259 = vmul.f32 %v2194, %v2251
      %v2260 = vmul.f32 %v2195, %v2252
      %v2261 = vmul.f32 %v2196, %v2253
      %v2262 = vmul.f32 %v2197, %v2254
      %v2263 = vmul.f32 %v2198, %v2255
      %v2264 = vadd.f32 %v2256, %v2183
      %v2265 = vadd.f32 %v2257, %v2184
      %v2266 = vadd.f32 %v2258, %v2185
      %v2267 = vadd.f32 %v2259, %v2186
      %v2268 = vadd.f32 %v2260, %v2187
      %v2269 = vadd.f32 %v2261, %v2188
      %v2270 = vadd.f32 %v2262, %v2189
      %v2271 = vadd.f32 %v2263, %v2190
      %v2272 = vmul.f32 %v2191, %v2224
      %v2273 = vmul.f32 %v2192, %v2225
      %v2274 = vmul.f32 %v2193, %v2226
      %v2275 = vmul.f32 %v2194, %v2227
      %v2276 = vmul.f32 %v2195, %v2228
      %v2277 = vmul.f32 %v2196, %v2229
      %v2278 = vmul.f32 %v2197, %v2230
      %v2279 = vmul.f32 %v2198, %v2231
      %vm2280 = vcmp.ge.s32.totalorder %v1063, 4
      %vm2281 = vcmp.ge.s32.totalorder %v1064, 4
      %vm2282 = vcmp.ge.s32.totalorder %v1065, 4
      %vm2283 = vcmp.ge.s32.totalorder %v1066, 4
      %vm2284 = vcmp.ge.s32.totalorder %v1067, 4
      %vm2285 = vcmp.ge.s32.totalorder %v1068, 4
      %vm2286 = vcmp.ge.s32.totalorder %v1069, 4
      %vm2287 = vcmp.ge.s32.totalorder %v1070, 4
      %v2288 = vrot.slane %v2272, 4
      %v2289 = vrot.slane %v2273, 4
      %v2290 = vrot.slane %v2274, 4
      %v2291 = vrot.slane %v2275, 4
      %v2292 = vrot.slane %v2276, 4
      %v2293 = vrot.slane %v2277, 4
      %v2294 = vrot.slane %v2278, 4
      %v2295 = vrot.slane %v2279, 4
      %vm2296 = vcmp.lt.s32.totalorder %v1063, 4
      %v2297 = vsel %vm2296, %v2294, %v2295
      %v2298 = vsel %vm2296, %v2293, %v2294
      %v2299 = vsel %vm2296, %v2292, %v2293
      %v2300 = vsel %vm2296, %v2291, %v2292
      %v2301 = vsel %vm2296, %v2290, %v2291
      %v2302 = vsel %vm2296, %v2289, %v2290
      %v2303 = vsel %vm2296, %v2288, %v2289
      %v2304 = vsel %vm2296, %v2295, %v2288
      %v2305 = vsel %vm2280, %v2304, 1.0
      %v2306 = vsel %vm2281, %v2303, 1.0
      %v2307 = vsel %vm2282, %v2302, 1.0
      %v2308 = vsel %vm2283, %v2301, 1.0
      %v2309 = vsel %vm2284, %v2300, 1.0
      %v2310 = vsel %vm2285, %v2299, 1.0
      %v2311 = vsel %vm2286, %v2298, 1.0
      %v2312 = vsel %vm2287, %v2297, 1.0
      %v2313 = vrot.slane %v2264, 4
      %v2314 = vrot.slane %v2265, 4
      %v2315 = vrot.slane %v2266, 4
      %v2316 = vrot.slane %v2267, 4
      %v2317 = vrot.slane %v2268, 4
      %v2318 = vrot.slane %v2269, 4
      %v2319 = vrot.slane %v2270, 4
      %v2320 = vrot.slane %v2271, 4
      %v2321 = vsel %vm2296, %v2319, %v2320
      %v2322 = vsel %vm2296, %v2318, %v2319
      %v2323 = vsel %vm2296, %v2317, %v2318
      %v2324 = vsel %vm2296, %v2316, %v2317
      %v2325 = vsel %vm2296, %v2315, %v2316
      %v2326 = vsel %vm2296, %v2314, %v2315
      %v2327 = vsel %vm2296, %v2313, %v2314
      %v2328 = vsel %vm2296, %v2320, %v2313
      %v2329 = vsel %vm2280, %v2328, 0.0
      %v2330 = vsel %vm2281, %v2327, 0.0
      %v2331 = vsel %vm2282, %v2326, 0.0
      %v2332 = vsel %vm2283, %v2325, 0.0
      %v2333 = vsel %vm2284, %v2324, 0.0
      %v2334 = vsel %vm2285, %v2323, 0.0
      %v2335 = vsel %vm2286, %v2322, 0.0
      %v2336 = vsel %vm2287, %v2321, 0.0
      %v2337 = vmul.f32 %v2272, %v2329
      %v2338 = vmul.f32 %v2273, %v2330
      %v2339 = vmul.f32 %v2274, %v2331
      %v2340 = vmul.f32 %v2275, %v2332
      %v2341 = vmul.f32 %v2276, %v2333
      %v2342 = vmul.f32 %v2277, %v2334
      %v2343 = vmul.f32 %v2278, %v2335
      %v2344 = vmul.f32 %v2279, %v2336
      %v2345 = vadd.f32 %v2337, %v2264
      %v2346 = vadd.f32 %v2338, %v2265
      %v2347 = vadd.f32 %v2339, %v2266
      %v2348 = vadd.f32 %v2340, %v2267
      %v2349 = vadd.f32 %v2341, %v2268
      %v2350 = vadd.f32 %v2342, %v2269
      %v2351 = vadd.f32 %v2343, %v2270
      %v2352 = vadd.f32 %v2344, %v2271
      %v2353 = vmul.f32 %v2272, %v2305
      %v2354 = vmul.f32 %v2273, %v2306
      %v2355 = vmul.f32 %v2274, %v2307
      %v2356 = vmul.f32 %v2275, %v2308
      %v2357 = vmul.f32 %v2276, %v2309
      %v2358 = vmul.f32 %v2277, %v2310
      %v2359 = vmul.f32 %v2278, %v2311
      %v2360 = vmul.f32 %v2279, %v2312
      %vm2361 = vcmp.ge.s32.totalorder %v1063, 8
      %vm2362 = vcmp.ge.s32.totalorder %v1064, 8
      %vm2363 = vcmp.ge.s32.totalorder %v1065, 8
      %vm2364 = vcmp.ge.s32.totalorder %v1066, 8
      %vm2365 = vcmp.ge.s32.totalorder %v1067, 8
      %vm2366 = vcmp.ge.s32.totalorder %v1068, 8
      %vm2367 = vcmp.ge.s32.totalorder %v1069, 8
      %vm2368 = vcmp.ge.s32.totalorder %v1070, 8
      %v2369 = vsel %vm2361, %v2360, 1.0
      %v2370 = vsel %vm2362, %v2353, 1.0
      %v2371 = vsel %vm2363, %v2354, 1.0
      %v2372 = vsel %vm2364, %v2355, 1.0
      %v2373 = vsel %vm2365, %v2356, 1.0
      %v2374 = vsel %vm2366, %v2357, 1.0
      %v2375 = vsel %vm2367, %v2358, 1.0
      %v2376 = vsel %vm2368, %v2359, 1.0
      %v2377 = vsel %vm2361, %v2352, 0.0
      %v2378 = vsel %vm2362, %v2345, 0.0
      %v2379 = vsel %vm2363, %v2346, 0.0
      %v2380 = vsel %vm2364, %v2347, 0.0
      %v2381 = vsel %vm2365, %v2348, 0.0
      %v2382 = vsel %vm2366, %v2349, 0.0
      %v2383 = vsel %vm2367, %v2350, 0.0
      %v2384 = vsel %vm2368, %v2351, 0.0
      %v2385 = vmul.f32 %v2353, %v2377
      %v2386 = vmul.f32 %v2354, %v2378
      %v2387 = vmul.f32 %v2355, %v2379
      %v2388 = vmul.f32 %v2356, %v2380
      %v2389 = vmul.f32 %v2357, %v2381
      %v2390 = vmul.f32 %v2358, %v2382
      %v2391 = vmul.f32 %v2359, %v2383
      %v2392 = vmul.f32 %v2360, %v2384
      %v2393 = vadd.f32 %v2385, %v2345
      %v2394 = vadd.f32 %v2386, %v2346
      %v2395 = vadd.f32 %v2387, %v2347
      %v2396 = vadd.f32 %v2388, %v2348
      %v2397 = vadd.f32 %v2389, %v2349
      %v2398 = vadd.f32 %v2390, %v2350
      %v2399 = vadd.f32 %v2391, %v2351
      %v2400 = vadd.f32 %v2392, %v2352
      %v2401 = vmul.f32 %v2353, %v2369
      %v2402 = vmul.f32 %v2354, %v2370
      %v2403 = vmul.f32 %v2355, %v2371
      %v2404 = vmul.f32 %v2356, %v2372
      %v2405 = vmul.f32 %v2357, %v2373
      %v2406 = vmul.f32 %v2358, %v2374
      %v2407 = vmul.f32 %v2359, %v2375
      %v2408 = vmul.f32 %v2360, %v2376
      %vm2409 = vcmp.ge.s32.totalorder %v1063, 16
      %vm2410 = vcmp.ge.s32.totalorder %v1064, 16
      %vm2411 = vcmp.ge.s32.totalorder %v1065, 16
      %vm2412 = vcmp.ge.s32.totalorder %v1066, 16
      %vm2413 = vcmp.ge.s32.totalorder %v1067, 16
      %vm2414 = vcmp.ge.s32.totalorder %v1068, 16
      %vm2415 = vcmp.ge.s32.totalorder %v1069, 16
      %vm2416 = vcmp.ge.s32.totalorder %v1070, 16
      %v2417 = vsel %vm2409, %v2407, 1.0
      %v2418 = vsel %vm2410, %v2408, 1.0
      %v2419 = vsel %vm2411, %v2401, 1.0
      %v2420 = vsel %vm2412, %v2402, 1.0
      %v2421 = vsel %vm2413, %v2403, 1.0
      %v2422 = vsel %vm2414, %v2404, 1.0
      %v2423 = vsel %vm2415, %v2405, 1.0
      %v2424 = vsel %vm2416, %v2406, 1.0
      %v2425 = vsel %vm2409, %v2399, 0.0
      %v2426 = vsel %vm2410, %v2400, 0.0
      %v2427 = vsel %vm2411, %v2393, 0.0
      %v2428 = vsel %vm2412, %v2394, 0.0
      %v2429 = vsel %vm2413, %v2395, 0.0
      %v2430 = vsel %vm2414, %v2396, 0.0
      %v2431 = vsel %vm2415, %v2397, 0.0
      %v2432 = vsel %vm2416, %v2398, 0.0
      %v2433 = vmul.f32 %v2401, %v2425
      %v2434 = vmul.f32 %v2402, %v2426
      %v2435 = vmul.f32 %v2403, %v2427
      %v2436 = vmul.f32 %v2404, %v2428
      %v2437 = vmul.f32 %v2405, %v2429
      %v2438 = vmul.f32 %v2406, %v2430
      %v2439 = vmul.f32 %v2407, %v2431
      %v2440 = vmul.f32 %v2408, %v2432
      %v2441 = vadd.f32 %v2433, %v2393
      %v2442 = vadd.f32 %v2434, %v2394
      %v2443 = vadd.f32 %v2435, %v2395
      %v2444 = vadd.f32 %v2436, %v2396
      %v2445 = vadd.f32 %v2437, %v2397
      %v2446 = vadd.f32 %v2438, %v2398
      %v2447 = vadd.f32 %v2439, %v2399
      %v2448 = vadd.f32 %v2440, %v2400
      %v2449 = vmul.f32 %v2401, %v2417
      %v2450 = vmul.f32 %v2402, %v2418
      %v2451 = vmul.f32 %v2403, %v2419
      %v2452 = vmul.f32 %v2404, %v2420
      %v2453 = vmul.f32 %v2405, %v2421
      %v2454 = vmul.f32 %v2406, %v2422
      %v2455 = vmul.f32 %v2407, %v2423
      %v2456 = vmul.f32 %v2408, %v2424
      %vm2457 = vcmp.ge.s32.totalorder %v1063, 32
      %vm2458 = vcmp.ge.s32.totalorder %v1064, 32
      %vm2459 = vcmp.ge.s32.totalorder %v1065, 32
      %vm2460 = vcmp.ge.s32.totalorder %v1066, 32
      %vm2461 = vcmp.ge.s32.totalorder %v1067, 32
      %vm2462 = vcmp.ge.s32.totalorder %v1068, 32
      %vm2463 = vcmp.ge.s32.totalorder %v1069, 32
      %vm2464 = vcmp.ge.s32.totalorder %v1070, 32
      %v2465 = vsel %vm2457, %v2445, 0.0
      %v2466 = vsel %vm2458, %v2446, 0.0
      %v2467 = vsel %vm2459, %v2447, 0.0
      %v2468 = vsel %vm2460, %v2448, 0.0
      %v2469 = vsel %vm2461, %v2441, 0.0
      %v2470 = vsel %vm2462, %v2442, 0.0
      %v2471 = vsel %vm2463, %v2443, 0.0
      %v2472 = vsel %vm2464, %v2444, 0.0
      %v2473 = vmul.f32 %v2449, %v2465
      %v2474 = vmul.f32 %v2450, %v2466
      %v2475 = vmul.f32 %v2451, %v2467
      %v2476 = vmul.f32 %v2452, %v2468
      %v2477 = vmul.f32 %v2453, %v2469
      %v2478 = vmul.f32 %v2454, %v2470
      %v2479 = vmul.f32 %v2455, %v2471
      %v2480 = vmul.f32 %v2456, %v2472
      %v2481 = vadd.f32 %v2473, %v2441
      %v2482 = vadd.f32 %v2474, %v2442
      %v2483 = vadd.f32 %v2475, %v2443
      %v2484 = vadd.f32 %v2476, %v2444
      %v2485 = vadd.f32 %v2477, %v2445
      %v2486 = vadd.f32 %v2478, %v2446
      %v2487 = vadd.f32 %v2479, %v2447
      %v2488 = vadd.f32 %v2480, %v2448
      %v2489 = vmul.f32 %v2481, %v1936
      %v2490 = vmul.f32 %v2482, %v1941
      %v2491 = vmul.f32 %v2483, %v1946
      %v2492 = vmul.f32 %v2484, %v1951
      %v2493 = vmul.f32 %v2485, %v1956
      %v2494 = vmul.f32 %v2486, %v1961
      %v2495 = vmul.f32 %v2487, %v1966
      %v2496 = vmul.f32 %v2488, %v1971
      %v2497 = vld [vmem:[%s14] sm:$0xff]
      %v2498 = vld [vmem:[%s14 + $0x8] sm:$0xff]
      %v2499 = vld [vmem:[%s14 + $0x10] sm:$0xff]
      %v2500 = vld [vmem:[%s14 + $0x18] sm:$0xff]
      %v2501 = vld [vmem:[%s14 + $0x20] sm:$0xff]
      %v2502 = vld [vmem:[%s14 + $0x28] sm:$0xff]
      %v2503 = vld [vmem:[%s14 + $0x30] sm:$0xff]
      %v2504 = vld [vmem:[%s14 + $0x38] sm:$0xff]
      %v2505 = vld [vmem:[%s14 + $0x40] sm:$0xff]
      %v2506 = vld [vmem:[%s14 + $0x48] sm:$0xff]
      %v2507 = vld [vmem:[%s14 + $0x50] sm:$0xff]
      %v2508 = vld [vmem:[%s14 + $0x58] sm:$0xff]
      %v2509 = vld [vmem:[%s14 + $0x60] sm:$0xff]
      %v2510 = vld [vmem:[%s14 + $0x68] sm:$0xff]
      %v2511 = vld [vmem:[%s14 + $0x70] sm:$0xff]
      %v2512 = vld [vmem:[%s14 + $0x78] sm:$0xff]
      %v2513 = vld [vmem:[%s15] sm:$0x1]
      %v2515 = vlaneseq
      %v2516 = vshrl.u32 %v2515, 7
      %v2517 = vsub.s32 0, %v2516
      %v2518 = vrot.slane %v2513, %v2517
      %v2520 = vmul.f32 %v2518, %v1237
      %v2521 = vmul.f32 %v2518, %v1238
      %v2522 = vmul.f32 %v2518, %v1239
      %v2523 = vmul.f32 %v2518, %v1240
      %v2524 = vmul.f32 %v2518, %v1241
      %v2525 = vmul.f32 %v2518, %v1242
      %v2526 = vmul.f32 %v2518, %v1243
      %v2527 = vmul.f32 %v2518, %v1244
      %2528 = vmatprep.subr.mxu0 0.0
      %2529 = vmatpush1.msra.mxu0 %v2497
      %2530 = vmatprep.subr.mxu0 0.0
      %2531 = vmatpush1.msra.mxu0 %v2498
      %2532 = vmatprep.subr.mxu0 0.0
      %2533 = vmatpush1.msra.mxu0 %v2499
      %2534 = vmatprep.subr.mxu0 0.0
      %2535 = vmatpush1.msra.mxu0 %v2500
      %2536 = vmatprep.subr.mxu0 0.0
      %2537 = vmatpush1.msra.mxu0 %v2501
      %2538 = vmatprep.subr.mxu0 0.0
      %2539 = vmatpush1.msra.mxu0 %v2502
      %2540 = vmatprep.subr.mxu0 0.0
      %2541 = vmatpush1.msra.mxu0 %v2503
      %2542 = vmatprep.subr.mxu0 0.0
      %2543 = vmatpush1.msra.mxu0 %v2504
      %2544 = vmatprep.subr.mxu0 0.0
      %2545 = vmatpush1.msra.mxu0 %v2505
      %2546 = vmatprep.subr.mxu0 0.0
      %2547 = vmatpush1.msra.mxu0 %v2506
      %2548 = vmatprep.subr.mxu0 0.0
      %2549 = vmatpush1.msra.mxu0 %v2507
      %2550 = vmatprep.subr.mxu0 0.0
      %2551 = vmatpush1.msra.mxu0 %v2508
      %2552 = vmatprep.subr.mxu0 0.0
      %2553 = vmatpush1.msra.mxu0 %v2509
      %2554 = vmatprep.subr.mxu0 0.0
      %2555 = vmatpush1.msra.mxu0 %v2510
      %2556 = vmatprep.subr.mxu0 0.0
      %2557 = vmatpush1.msra.mxu0 %v2511
      %2558 = vmatprep.subr.mxu0 0.0
      %2559 = vmatpush1.msra.mxu0 %v2512
      %2560 = vmatprep.subr.mxu0 0.0
      %2561 = vmatpush1.msra.mxu0 0.0
      %2562 = vmatprep.subr.mxu0 0.0
      %2563 = vmatpush1.msra.mxu0 0.0
      %2564 = vmatprep.subr.mxu0 0.0
      %2565 = vmatpush1.msra.mxu0 0.0
      %2566 = vmatprep.subr.mxu0 0.0
      %2567 = vmatpush1.msra.mxu0 0.0
      %2568 = vmatprep.subr.mxu0 0.0
      %2569 = vmatpush1.msra.mxu0 0.0
      %2570 = vmatprep.subr.mxu0 0.0
      %2571 = vmatpush1.msra.mxu0 0.0
      %2572 = vmatprep.subr.mxu0 0.0
      %2573 = vmatpush1.msra.mxu0 0.0
      %2574 = vmatprep.subr.mxu0 0.0
      %2575 = vmatpush1.msra.mxu0 0.0
      %2576 = vmatprep.subr.mxu0 0.0
      %2577 = vmatpush1.msra.mxu0 0.0
      %2578 = vmatprep.subr.mxu0 0.0
      %2579 = vmatpush1.msra.mxu0 0.0
      %2580 = vmatprep.subr.mxu0 0.0
      %2581 = vmatpush1.msra.mxu0 0.0
      %2582 = vmatprep.subr.mxu0 0.0
      %2583 = vmatpush1.msra.mxu0 0.0
      %2584 = vmatprep.subr.mxu0 0.0
      %2585 = vmatpush1.msra.mxu0 0.0
      %2586 = vmatprep.subr.mxu0 0.0
      %2587 = vmatpush1.msra.mxu0 0.0
      %2588 = vmatprep.subr.mxu0 0.0
      %2589 = vmatpush1.msra.mxu0 0.0
      %2590 = vmatprep.subr.mxu0 0.0
      %2591 = vmatpush1.msra.mxu0 0.0
      %2592 = vmatprep.mubr.f32.mxu0 0.0
      %2593 = vmatmul.mubr.f32.gmra.mrb[0].mxu0 %v2489
      %v2594 = vpop.f32.mrb[0].mxu0
      %v2595 = vadd.f32 %v2520, %v2594
      %v2596 = vpop.f32.mrb[0].mxu0
      %2597 = vmatprep.mubr.f32.mxu0 0.0
      %2598 = vmatmul.mubr.f32.gmra.mrb[0].mxu0 %v2490
      %v2599 = vpop.f32.mrb[0].mxu0
      %v2600 = vadd.f32 %v2521, %v2599
      %v2601 = vpop.f32.mrb[0].mxu0
      %2602 = vmatprep.mubr.f32.mxu0 0.0
      %2603 = vmatmul.mubr.f32.gmra.mrb[0].mxu0 %v2491
      %v2604 = vpop.f32.mrb[0].mxu0
      %v2605 = vadd.f32 %v2522, %v2604
      %v2606 = vpop.f32.mrb[0].mxu0
      %2607 = vmatprep.mubr.f32.mxu0 0.0
      %2608 = vmatmul.mubr.f32.gmra.mrb[0].mxu0 %v2492
      %v2609 = vpop.f32.mrb[0].mxu0
      %v2610 = vadd.f32 %v2523, %v2609
      %v2611 = vpop.f32.mrb[0].mxu0
      %2612 = vmatprep.mubr.f32.mxu0 0.0
      %2613 = vmatmul.mubr.f32.gmra.mrb[0].mxu0 %v2493
      %v2614 = vpop.f32.mrb[0].mxu0
      %v2615 = vadd.f32 %v2524, %v2614
      %v2616 = vpop.f32.mrb[0].mxu0
      %2617 = vmatprep.mubr.f32.mxu0 0.0
      %2618 = vmatmul.mubr.f32.gmra.mrb[0].mxu0 %v2494
      %v2619 = vpop.f32.mrb[0].mxu0
      %v2620 = vadd.f32 %v2525, %v2619
      %v2621 = vpop.f32.mrb[0].mxu0
      %2622 = vmatprep.mubr.f32.mxu0 0.0
      %2623 = vmatmul.mubr.f32.gmra.mrb[0].mxu0 %v2495
      %v2624 = vpop.f32.mrb[0].mxu0
      %v2625 = vadd.f32 %v2526, %v2624
      %v2626 = vpop.f32.mrb[0].mxu0
      %2627 = vmatprep.mubr.f32.mxu0 0.0
      %2628 = vmatmul.mubr.f32.gmra.mrb[0].mxu0 %v2496
      %v2629 = vpop.f32.mrb[0].mxu0
      %v2630 = vadd.f32 %v2527, %v2629
      %v2631 = vpop.f32.mrb[0].mxu0
      %2632 = vdwg.mxu0
      %v2633 = vpack.c.bf16 %v2600, %v2595
      %v2634 = vpack.c.bf16 %v2610, %v2605
      %v2635 = vpack.c.bf16 %v2620, %v2615
      %v2636 = vpack.c.bf16 %v2630, %v2625
      %v2637 = vld [vmem:[%s16] sm:$0xf]
      %v2638 = vld [vmem:[%s16 + $0x4] sm:$0xf]
      %v2639 = vpack.c.bf16 %v1395, %v1394
      %v2640 = vpack.c.bf16 %v1397, %v1396
      %v2641 = vpack.c.bf16 %v1399, %v1398
      %v2642 = vpack.c.bf16 %v1401, %v1400
      %v2643 = vld [vmem:[%s17] sm:$0xf]
      %v2644 = vld [vmem:[%s17 + $0x4] sm:$0xf]
      %v2647 = vunpack.c.l.b16 %v2643
      %v2648 = vunpack.c.l.b16 %v2644
      %v2649 = vpack.c.b16 %v2648, %v2647
      %v2652 = vsel %vm1404, %v2639, 0
      %v2655 = vsel %vm1404, %v2640, 0
      %v2658 = vsel %vm1404, %v2641, 0
      %v2661 = vsel %vm1404, %v2642, 0
      %2663 = vmatprep.subr.bf16.mxu0 0
      %2664 = vmatpush1.bf16.msra.mxu0 %v2649
      %2665 = vmatprep.subr.bf16.mxu0 0
      %2666 = vmatpush1.bf16.msra.mxu0 0
      %2667 = vmatprep.subr.bf16.mxu0 0
      %2668 = vmatpush1.bf16.msra.mxu0 0
      %2669 = vmatprep.subr.bf16.mxu0 0
      %2670 = vmatpush1.bf16.msra.mxu0 0
      %2671 = vmatprep.subr.bf16.mxu0 0
      %2672 = vmatpush1.bf16.msra.mxu0 0
      %2673 = vmatprep.subr.bf16.mxu0 0
      %2674 = vmatpush1.bf16.msra.mxu0 0
      %2675 = vmatprep.subr.bf16.mxu0 0
      %2676 = vmatpush1.bf16.msra.mxu0 0
      %2677 = vmatprep.subr.bf16.mxu0 0
      %2678 = vmatpush1.bf16.msra.mxu0 0
      %2679 = vmatprep.subr.bf16.mxu0 0
      %2680 = vmatpush1.bf16.msra.mxu0 0
      %2681 = vmatprep.subr.bf16.mxu0 0
      %2682 = vmatpush1.bf16.msra.mxu0 0
      %2683 = vmatprep.subr.bf16.mxu0 0
      %2684 = vmatpush1.bf16.msra.mxu0 0
      %2685 = vmatprep.subr.bf16.mxu0 0
      %2686 = vmatpush1.bf16.msra.mxu0 0
      %2687 = vmatprep.subr.bf16.mxu0 0
      %2688 = vmatpush1.bf16.msra.mxu0 0
      %2689 = vmatprep.subr.bf16.mxu0 0
      %2690 = vmatpush1.bf16.msra.mxu0 0
      %2691 = vmatprep.subr.bf16.mxu0 0
      %2692 = vmatpush1.bf16.msra.mxu0 0
      %2693 = vmatprep.subr.bf16.mxu0 0
      %2694 = vmatpush1.bf16.msra.mxu0 0
      %2695 = vmatprep.mubr.bf16.mxu0 0
      %2696 = vmatmul.mubr.bf16.gmra.mrb[0].mxu0 %v2652
      %v2697 = vpop.f32.mrb[0].mxu0
      %v2698 = vadd.f32 0.0, %v2697
      %v2699 = vpop.f32.mrb[0].mxu0
      %v2700 = vpop.f32.mrb[0].mxu0
      %v2701 = vadd.f32 0.0, %v2700
      %v2702 = vpop.f32.mrb[0].mxu0
      %2703 = vmatprep.mubr.bf16.mxu0 0
      %2704 = vmatmul.mubr.bf16.gmra.mrb[0].mxu0 %v2655
      %v2705 = vpop.f32.mrb[0].mxu0
      %v2706 = vadd.f32 0.0, %v2705
      %v2707 = vpop.f32.mrb[0].mxu0
      %v2708 = vpop.f32.mrb[0].mxu0
      %v2709 = vadd.f32 0.0, %v2708
      %v2710 = vpop.f32.mrb[0].mxu0
      %2711 = vmatprep.mubr.bf16.mxu0 0
      %2712 = vmatmul.mubr.bf16.gmra.mrb[0].mxu0 %v2658
      %v2713 = vpop.f32.mrb[0].mxu0
      %v2714 = vadd.f32 0.0, %v2713
      %v2715 = vpop.f32.mrb[0].mxu0
      %v2716 = vpop.f32.mrb[0].mxu0
      %v2717 = vadd.f32 0.0, %v2716
      %v2718 = vpop.f32.mrb[0].mxu0
      %2719 = vmatprep.mubr.bf16.mxu0 0
      %2720 = vmatmul.mubr.bf16.gmra.mrb[0].mxu0 %v2661
      %v2721 = vpop.f32.mrb[0].mxu0
      %v2722 = vadd.f32 0.0, %v2721
      %v2723 = vpop.f32.mrb[0].mxu0
      %v2724 = vpop.f32.mrb[0].mxu0
      %v2725 = vadd.f32 0.0, %v2724
      %v2726 = vpop.f32.mrb[0].mxu0
      %2727 = vdwg.mxu0
      %v2730 = vunpack.c.l.b16 %v2637
      %v2731 = vunpack.c.l.b16 %v2638
      %v2732 = vpack.c.b16 %v2731, %v2730
      %v2735 = vsel %vm1404, %v2633, 0
      %v2738 = vsel %vm1404, %v2634, 0
      %v2741 = vsel %vm1404, %v2635, 0
      %v2744 = vsel %vm1404, %v2636, 0
      %2746 = vmatprep.subr.bf16.mxu0 0
      %2747 = vmatpush1.bf16.msra.mxu0 %v2732
      %2748 = vmatprep.subr.bf16.mxu0 0
      %2749 = vmatpush1.bf16.msra.mxu0 0
      %2750 = vmatprep.subr.bf16.mxu0 0
      %2751 = vmatpush1.bf16.msra.mxu0 0
      %2752 = vmatprep.subr.bf16.mxu0 0
      %2753 = vmatpush1.bf16.msra.mxu0 0
      %2754 = vmatprep.subr.bf16.mxu0 0
      %2755 = vmatpush1.bf16.msra.mxu0 0
      %2756 = vmatprep.subr.bf16.mxu0 0
      %2757 = vmatpush1.bf16.msra.mxu0 0
      %2758 = vmatprep.subr.bf16.mxu0 0
      %2759 = vmatpush1.bf16.msra.mxu0 0
      %2760 = vmatprep.subr.bf16.mxu0 0
      %2761 = vmatpush1.bf16.msra.mxu0 0
      %2762 = vmatprep.subr.bf16.mxu0 0
      %2763 = vmatpush1.bf16.msra.mxu0 0
      %2764 = vmatprep.subr.bf16.mxu0 0
      %2765 = vmatpush1.bf16.msra.mxu0 0
      %2766 = vmatprep.subr.bf16.mxu0 0
      %2767 = vmatpush1.bf16.msra.mxu0 0
      %2768 = vmatprep.subr.bf16.mxu0 0
      %2769 = vmatpush1.bf16.msra.mxu0 0
      %2770 = vmatprep.subr.bf16.mxu0 0
      %2771 = vmatpush1.bf16.msra.mxu0 0
      %2772 = vmatprep.subr.bf16.mxu0 0
      %2773 = vmatpush1.bf16.msra.mxu0 0
      %2774 = vmatprep.subr.bf16.mxu0 0
      %2775 = vmatpush1.bf16.msra.mxu0 0
      %2776 = vmatprep.subr.bf16.mxu0 0
      %2777 = vmatpush1.bf16.msra.mxu0 0
      %2778 = vmatprep.mubr.bf16.mxu0 0
      %2779 = vmatmul.mubr.bf16.gmra.mrb[0].mxu0 %v2735
      %v2780 = vpop.f32.mrb[0].mxu0
      %v2781 = vadd.f32 %v2698, %v2780
      %v2782 = vpop.f32.mrb[0].mxu0
      %v2783 = vpop.f32.mrb[0].mxu0
      %v2784 = vadd.f32 %v2701, %v2783
      %v2785 = vpop.f32.mrb[0].mxu0
      %2786 = vmatprep.mubr.bf16.mxu0 0
      %2787 = vmatmul.mubr.bf16.gmra.mrb[0].mxu0 %v2738
      %v2788 = vpop.f32.mrb[0].mxu0
      %v2789 = vadd.f32 %v2706, %v2788
      %v2790 = vpop.f32.mrb[0].mxu0
      %v2791 = vpop.f32.mrb[0].mxu0
      %v2792 = vadd.f32 %v2709, %v2791
      %v2793 = vpop.f32.mrb[0].mxu0
      %2794 = vmatprep.mubr.bf16.mxu0 0
      %2795 = vmatmul.mubr.bf16.gmra.mrb[0].mxu0 %v2741
      %v2796 = vpop.f32.mrb[0].mxu0
      %v2797 = vadd.f32 %v2714, %v2796
      %v2798 = vpop.f32.mrb[0].mxu0
      %v2799 = vpop.f32.mrb[0].mxu0
      %v2800 = vadd.f32 %v2717, %v2799
      %v2801 = vpop.f32.mrb[0].mxu0
      %2802 = vmatprep.mubr.bf16.mxu0 0
      %2803 = vmatmul.mubr.bf16.gmra.mrb[0].mxu0 %v2744
      %v2804 = vpop.f32.mrb[0].mxu0
      %v2805 = vadd.f32 %v2722, %v2804
      %v2806 = vpop.f32.mrb[0].mxu0
      %v2807 = vpop.f32.mrb[0].mxu0
      %v2808 = vadd.f32 %v2725, %v2807
      %v2809 = vpop.f32.mrb[0].mxu0
      %2810 = vdwg.mxu0
      %v2811 = vadd.f32 %v739, %v2781
      %v2812 = vadd.f32 %v740, %v2784
      %v2813 = vadd.f32 %v741, %v2789
      %v2814 = vadd.f32 %v742, %v2792
      %v2815 = vadd.f32 %v743, %v2797
      %v2816 = vadd.f32 %v744, %v2800
      %v2817 = vadd.f32 %v745, %v2805
      %v2818 = vadd.f32 %v746, %v2808
      %v2819 = vld [vmem:[%s18] sm:$0x1]
      %v2820 = vld [vmem:[%s19] sm:$0x1]
      %v2821 = vsel %vm749, %v2811, 0.0
      %2822 = vadd.xlane.f32.xlu0 %v2821
      %v2823 = vpop.xlane.xlu0 %2822
      %v2824 = vsel %vm749, %v2812, 0.0
      %2825 = vadd.xlane.f32.xlu0 %v2824
      %v2826 = vpop.xlane.xlu0 %2825
      %v2827 = vsel %vm749, %v2813, 0.0
      %2828 = vadd.xlane.f32.xlu0 %v2827
      %v2829 = vpop.xlane.xlu0 %2828
      %v2830 = vsel %vm749, %v2814, 0.0
      %2831 = vadd.xlane.f32.xlu0 %v2830
      %v2832 = vpop.xlane.xlu0 %2831
      %v2833 = vsel %vm749, %v2815, 0.0
      %2834 = vadd.xlane.f32.xlu0 %v2833
      %v2835 = vpop.xlane.xlu0 %2834
      %v2836 = vsel %vm749, %v2816, 0.0
      %2837 = vadd.xlane.f32.xlu0 %v2836
      %v2838 = vpop.xlane.xlu0 %2837
      %v2839 = vsel %vm749, %v2817, 0.0
      %2840 = vadd.xlane.f32.xlu0 %v2839
      %v2841 = vpop.xlane.xlu0 %2840
      %v2842 = vsel %vm749, %v2818, 0.0
      %2843 = vadd.xlane.f32.xlu0 %v2842
      %v2844 = vpop.xlane.xlu0 %2843
      %v2845 = vmul.f32 %v2823, %v774
      %v2846 = vmul.f32 %v2826, %v774
      %v2847 = vmul.f32 %v2829, %v774
      %v2848 = vmul.f32 %v2832, %v774
      %v2849 = vmul.f32 %v2835, %v774
      %v2850 = vmul.f32 %v2838, %v774
      %v2851 = vmul.f32 %v2841, %v774
      %v2852 = vmul.f32 %v2844, %v774
      %v2853 = vsub.f32 %v2811, %v2845
      %v2854 = vsub.f32 %v2812, %v2846
      %v2855 = vsub.f32 %v2813, %v2847
      %v2856 = vsub.f32 %v2814, %v2848
      %v2857 = vsub.f32 %v2815, %v2849
      %v2858 = vsub.f32 %v2816, %v2850
      %v2859 = vsub.f32 %v2817, %v2851
      %v2860 = vsub.f32 %v2818, %v2852
      %v2861 = vmul.f32 %v2853, %v2853
      %v2862 = vmul.f32 %v2854, %v2854
      %v2863 = vmul.f32 %v2855, %v2855
      %v2864 = vmul.f32 %v2856, %v2856
      %v2865 = vmul.f32 %v2857, %v2857
      %v2866 = vmul.f32 %v2858, %v2858
      %v2867 = vmul.f32 %v2859, %v2859
      %v2868 = vmul.f32 %v2860, %v2860
      %v2869 = vsel %vm749, %v2861, 0.0
      %2870 = vadd.xlane.f32.xlu0 %v2869
      %v2871 = vpop.xlane.xlu0 %2870
      %v2872 = vsel %vm749, %v2862, 0.0
      %2873 = vadd.xlane.f32.xlu0 %v2872
      %v2874 = vpop.xlane.xlu0 %2873
      %v2875 = vsel %vm749, %v2863, 0.0
      %2876 = vadd.xlane.f32.xlu0 %v2875
      %v2877 = vpop.xlane.xlu0 %2876
      %v2878 = vsel %vm749, %v2864, 0.0
      %2879 = vadd.xlane.f32.xlu0 %v2878
      %v2880 = vpop.xlane.xlu0 %2879
      %v2881 = vsel %vm749, %v2865, 0.0
      %2882 = vadd.xlane.f32.xlu0 %v2881
      %v2883 = vpop.xlane.xlu0 %2882
      %v2884 = vsel %vm749, %v2866, 0.0
      %2885 = vadd.xlane.f32.xlu0 %v2884
      %v2886 = vpop.xlane.xlu0 %2885
      %v2887 = vsel %vm749, %v2867, 0.0
      %2888 = vadd.xlane.f32.xlu0 %v2887
      %v2889 = vpop.xlane.xlu0 %2888
      %v2890 = vsel %vm749, %v2868, 0.0
      %2891 = vadd.xlane.f32.xlu0 %v2890
      %v2892 = vpop.xlane.xlu0 %2891
      %v2893 = vmul.f32 %v2871, %v774
      %v2894 = vmul.f32 %v2874, %v774
      %v2895 = vmul.f32 %v2877, %v774
      %v2896 = vmul.f32 %v2880, %v774
      %v2897 = vmul.f32 %v2883, %v774
      %v2898 = vmul.f32 %v2886, %v774
      %v2899 = vmul.f32 %v2889, %v774
      %v2900 = vmul.f32 %v2892, %v774
      %v2901 = vadd.f32 %v2893, 1e-05
      %v2902 = vadd.f32 %v2894, 1e-05
      %v2903 = vadd.f32 %v2895, 1e-05
      %v2904 = vadd.f32 %v2896, 1e-05
      %v2905 = vadd.f32 %v2897, 1e-05
      %v2906 = vadd.f32 %v2898, 1e-05
      %v2907 = vadd.f32 %v2899, 1e-05
      %v2908 = vadd.f32 %v2900, 1e-05
      %v2909 = vrsqrt.pop %v2901
      %v2910 = vrsqrt.pop %v2902
      %v2911 = vrsqrt.pop %v2903
      %v2912 = vrsqrt.pop %v2904
      %v2913 = vrsqrt.pop %v2905
      %v2914 = vrsqrt.pop %v2906
      %v2915 = vrsqrt.pop %v2907
      %v2916 = vrsqrt.pop %v2908
      %v2917 = vmul.f32 %v2853, %v2909
      %v2918 = vmul.f32 %v2854, %v2910
      %v2919 = vmul.f32 %v2855, %v2911
      %v2920 = vmul.f32 %v2856, %v2912
      %v2921 = vmul.f32 %v2857, %v2913
      %v2922 = vmul.f32 %v2858, %v2914
      %v2923 = vmul.f32 %v2859, %v2915
      %v2924 = vmul.f32 %v2860, %v2916
      %v2926 = vlaneseq
      %v2927 = vshrl.u32 %v2926, 7
      %v2928 = vsub.s32 0, %v2927
      %v2929 = vrot.slane %v2819, %v2928
      %v2931 = vmul.f32 %v2917, %v2929
      %v2932 = vmul.f32 %v2918, %v2929
      %v2933 = vmul.f32 %v2919, %v2929
      %v2934 = vmul.f32 %v2920, %v2929
      %v2935 = vmul.f32 %v2921, %v2929
      %v2936 = vmul.f32 %v2922, %v2929
      %v2937 = vmul.f32 %v2923, %v2929
      %v2938 = vmul.f32 %v2924, %v2929
      %v2940 = vlaneseq
      %v2941 = vshrl.u32 %v2940, 7
      %v2942 = vsub.s32 0, %v2941
      %v2943 = vrot.slane %v2820, %v2942
      %v2945 = vadd.f32 %v2931, %v2943
      %v2946 = vadd.f32 %v2932, %v2943
      %v2947 = vadd.f32 %v2933, %v2943
      %v2948 = vadd.f32 %v2934, %v2943
      %v2949 = vadd.f32 %v2935, %v2943
      %v2950 = vadd.f32 %v2936, %v2943
      %v2951 = vadd.f32 %v2937, %v2943
      %v2952 = vadd.f32 %v2938, %v2943
      %v2953 = vld [vmem:[%s20] sm:$0xf]
      %v2954 = vld [vmem:[%s20 + $0x4] sm:$0xf]
      %v2955 = vld [vmem:[%s20 + $0x8] sm:$0xf]
      %v2956 = vld [vmem:[%s20 + $0xc] sm:$0xf]
      %v2957 = vld [vmem:[%s21] sm:$0x1]
      %v2958 = vld [vmem:[%s22] sm:$0xf]
      %v2959 = vld [vmem:[%s22 + $0x4] sm:$0xf]
      %v2960 = vld [vmem:[%s22 + $0x8] sm:$0xf]
      %v2961 = vld [vmem:[%s22 + $0xc] sm:$0xf]
      %v2962 = vld [vmem:[%s22 + $0x10] sm:$0xf]
      %v2963 = vld [vmem:[%s22 + $0x14] sm:$0xf]
      %v2964 = vld [vmem:[%s22 + $0x18] sm:$0xf]
      %v2965 = vld [vmem:[%s22 + $0x1c] sm:$0xf]
      %v2966 = vld [vmem:[%s22 + $0x20] sm:$0xf]
      %v2967 = vld [vmem:[%s22 + $0x24] sm:$0xf]
      %v2968 = vld [vmem:[%s22 + $0x28] sm:$0xf]
      %v2969 = vld [vmem:[%s22 + $0x2c] sm:$0xf]
      %v2970 = vld [vmem:[%s22 + $0x30] sm:$0xf]
      %v2971 = vld [vmem:[%s22 + $0x34] sm:$0xf]
      %v2972 = vld [vmem:[%s22 + $0x38] sm:$0xf]
      %v2973 = vld [vmem:[%s22 + $0x3c] sm:$0xf]
      %v2974 = vld [vmem:[%s23] sm:$0x1]
      %v2975 = vpack.c.bf16 %v2946, %v2945
      %v2976 = vpack.c.bf16 %v2948, %v2947
      %v2977 = vpack.c.bf16 %v2950, %v2949
      %v2978 = vpack.c.bf16 %v2952, %v2951
      %v2980 = vlaneseq
      %v2981 = vshrl.u32 %v2980, 7
      %v2982 = vsub.s32 0, %v2981
      %v2983 = vrot.slane %v2957, %v2982
      %v2989 = vunpack.c.l.b16 %v2953
      %v2990 = vunpack.c.l.b16 %v2954
      %v2991 = vunpack.c.l.b16 %v2955
      %v2992 = vunpack.c.l.b16 %v2956
      %v2993 = vpack.c.b16 %v2990, %v2989
      %v2994 = vpack.c.b16 %v2992, %v2991
      %v2998 = vsel %vm749, %v2975, 0
      %v3001 = vsel %vm749, %v2976, 0
      %v3004 = vsel %vm749, %v2977, 0
      %v3007 = vsel %vm749, %v2978, 0
      %3009 = vmatprep.subr.bf16.mxu0 0
      %3010 = vmatpush1.bf16.msra.mxu0 %v2993
      %3011 = vmatprep.subr.bf16.mxu0 0
      %3012 = vmatpush1.bf16.msra.mxu0 %v2994
      %3013 = vmatprep.subr.bf16.mxu0 0
      %3014 = vmatpush1.bf16.msra.mxu0 0
      %3015 = vmatprep.subr.bf16.mxu0 0
      %3016 = vmatpush1.bf16.msra.mxu0 0
      %3017 = vmatprep.subr.bf16.mxu0 0
      %3018 = vmatpush1.bf16.msra.mxu0 0
      %3019 = vmatprep.subr.bf16.mxu0 0
      %3020 = vmatpush1.bf16.msra.mxu0 0
      %3021 = vmatprep.subr.bf16.mxu0 0
      %3022 = vmatpush1.bf16.msra.mxu0 0
      %3023 = vmatprep.subr.bf16.mxu0 0
      %3024 = vmatpush1.bf16.msra.mxu0 0
      %3025 = vmatprep.subr.bf16.mxu0 0
      %3026 = vmatpush1.bf16.msra.mxu0 0
      %3027 = vmatprep.subr.bf16.mxu0 0
      %3028 = vmatpush1.bf16.msra.mxu0 0
      %3029 = vmatprep.subr.bf16.mxu0 0
      %3030 = vmatpush1.bf16.msra.mxu0 0
      %3031 = vmatprep.subr.bf16.mxu0 0
      %3032 = vmatpush1.bf16.msra.mxu0 0
      %3033 = vmatprep.subr.bf16.mxu0 0
      %3034 = vmatpush1.bf16.msra.mxu0 0
      %3035 = vmatprep.subr.bf16.mxu0 0
      %3036 = vmatpush1.bf16.msra.mxu0 0
      %3037 = vmatprep.subr.bf16.mxu0 0
      %3038 = vmatpush1.bf16.msra.mxu0 0
      %3039 = vmatprep.subr.bf16.mxu0 0
      %3040 = vmatpush1.bf16.msra.mxu0 0
      %3041 = vmatprep.mubr.bf16.mxu0 0
      %3042 = vmatmul.mubr.bf16.gmra.mrb[0].mxu0 %v2998
      %v3043 = vpop.f32.mrb[0].mxu0
      %v3044 = vadd.f32 %v2983, %v3043
      %v3045 = vpop.f32.mrb[0].mxu0
      %v3046 = vpop.f32.mrb[0].mxu0
      %v3047 = vadd.f32 %v2983, %v3046
      %v3048 = vpop.f32.mrb[0].mxu0
      %3049 = vmatprep.mubr.bf16.mxu0 0
      %3050 = vmatmul.mubr.bf16.gmra.mrb[0].mxu0 %v3001
      %v3051 = vpop.f32.mrb[0].mxu0
      %v3052 = vadd.f32 %v2983, %v3051
      %v3053 = vpop.f32.mrb[0].mxu0
      %v3054 = vpop.f32.mrb[0].mxu0
      %v3055 = vadd.f32 %v2983, %v3054
      %v3056 = vpop.f32.mrb[0].mxu0
      %3057 = vmatprep.mubr.bf16.mxu0 0
      %3058 = vmatmul.mubr.bf16.gmra.mrb[0].mxu0 %v3004
      %v3059 = vpop.f32.mrb[0].mxu0
      %v3060 = vadd.f32 %v2983, %v3059
      %v3061 = vpop.f32.mrb[0].mxu0
      %v3062 = vpop.f32.mrb[0].mxu0
      %v3063 = vadd.f32 %v2983, %v3062
      %v3064 = vpop.f32.mrb[0].mxu0
      %3065 = vmatprep.mubr.bf16.mxu0 0
      %3066 = vmatmul.mubr.bf16.gmra.mrb[0].mxu0 %v3007
      %v3067 = vpop.f32.mrb[0].mxu0
      %v3068 = vadd.f32 %v2983, %v3067
      %v3069 = vpop.f32.mrb[0].mxu0
      %v3070 = vpop.f32.mrb[0].mxu0
      %v3071 = vadd.f32 %v2983, %v3070
      %v3072 = vpop.f32.mrb[0].mxu0
      %3073 = vdwg.mxu0
      %v3074 = vmul.f32 %v3044, 0.5
      %v3075 = vmul.f32 %v3047, 0.5
      %v3076 = vmul.f32 %v3052, 0.5
      %v3077 = vmul.f32 %v3055, 0.5
      %v3078 = vmul.f32 %v3060, 0.5
      %v3079 = vmul.f32 %v3063, 0.5
      %v3080 = vmul.f32 %v3068, 0.5
      %v3081 = vmul.f32 %v3071, 0.5
      %v3082 = vmul.f32 %v3044, 0.044715
      %v3083 = vmul.f32 %v3047, 0.044715
      %v3084 = vmul.f32 %v3052, 0.044715
      %v3085 = vmul.f32 %v3055, 0.044715
      %v3086 = vmul.f32 %v3060, 0.044715
      %v3087 = vmul.f32 %v3063, 0.044715
      %v3088 = vmul.f32 %v3068, 0.044715
      %v3089 = vmul.f32 %v3071, 0.044715
      %v3090 = vmul.f32 %v3082, %v3044
      %v3091 = vmul.f32 %v3083, %v3047
      %v3092 = vmul.f32 %v3084, %v3052
      %v3093 = vmul.f32 %v3085, %v3055
      %v3094 = vmul.f32 %v3086, %v3060
      %v3095 = vmul.f32 %v3087, %v3063
      %v3096 = vmul.f32 %v3088, %v3068
      %v3097 = vmul.f32 %v3089, %v3071
      %v3098 = vmul.f32 %v3090, %v3044
      %v3099 = vmul.f32 %v3091, %v3047
      %v3100 = vmul.f32 %v3092, %v3052
      %v3101 = vmul.f32 %v3093, %v3055
      %v3102 = vmul.f32 %v3094, %v3060
      %v3103 = vmul.f32 %v3095, %v3063
      %v3104 = vmul.f32 %v3096, %v3068
      %v3105 = vmul.f32 %v3097, %v3071
      %v3106 = vadd.f32 %v3044, %v3098
      %v3107 = vadd.f32 %v3047, %v3099
      %v3108 = vadd.f32 %v3052, %v3100
      %v3109 = vadd.f32 %v3055, %v3101
      %v3110 = vadd.f32 %v3060, %v3102
      %v3111 = vadd.f32 %v3063, %v3103
      %v3112 = vadd.f32 %v3068, %v3104
      %v3113 = vadd.f32 %v3071, %v3105
      %v3114 = vmul.f32 %v3106, 0.7978846
      %v3115 = vmul.f32 %v3107, 0.7978846
      %v3116 = vmul.f32 %v3108, 0.7978846
      %v3117 = vmul.f32 %v3109, 0.7978846
      %v3118 = vmul.f32 %v3110, 0.7978846
      %v3119 = vmul.f32 %v3111, 0.7978846
      %v3120 = vmul.f32 %v3112, 0.7978846
      %v3121 = vmul.f32 %v3113, 0.7978846
      %v3122 = vtanh.pop %v3114
      %v3123 = vtanh.pop %v3115
      %v3124 = vtanh.pop %v3116
      %v3125 = vtanh.pop %v3117
      %v3126 = vtanh.pop %v3118
      %v3127 = vtanh.pop %v3119
      %v3128 = vtanh.pop %v3120
      %v3129 = vtanh.pop %v3121
      %v3130 = vadd.f32 %v3122, 1.0
      %v3131 = vadd.f32 %v3123, 1.0
      %v3132 = vadd.f32 %v3124, 1.0
      %v3133 = vadd.f32 %v3125, 1.0
      %v3134 = vadd.f32 %v3126, 1.0
      %v3135 = vadd.f32 %v3127, 1.0
      %v3136 = vadd.f32 %v3128, 1.0
      %v3137 = vadd.f32 %v3129, 1.0
      %v3138 = vmul.f32 %v3074, %v3130
      %v3139 = vmul.f32 %v3075, %v3131
      %v3140 = vmul.f32 %v3076, %v3132
      %v3141 = vmul.f32 %v3077, %v3133
      %v3142 = vmul.f32 %v3078, %v3134
      %v3143 = vmul.f32 %v3079, %v3135
      %v3144 = vmul.f32 %v3080, %v3136
      %v3145 = vmul.f32 %v3081, %v3137
      %v3146 = vpack.c.bf16 %v3139, %v3138
      %v3147 = vpack.c.bf16 %v3141, %v3140
      %v3148 = vpack.c.bf16 %v3143, %v3142
      %v3149 = vpack.c.bf16 %v3145, %v3144
      %v3151 = vlaneseq
      %v3152 = vshrl.u32 %v3151, 7
      %v3153 = vsub.s32 0, %v3152
      %v3154 = vrot.slane %v2974, %v3153
      %v3172 = vunpack.c.l.b16 %v2958
      %v3173 = vunpack.c.l.b16 %v2959
      %v3174 = vunpack.c.l.b16 %v2960
      %v3175 = vunpack.c.l.b16 %v2961
      %v3176 = vunpack.c.l.b16 %v2962
      %v3177 = vunpack.c.l.b16 %v2963
      %v3178 = vunpack.c.l.b16 %v2964
      %v3179 = vunpack.c.l.b16 %v2965
      %v3180 = vunpack.c.l.b16 %v2966
      %v3181 = vunpack.c.l.b16 %v2967
      %v3182 = vunpack.c.l.b16 %v2968
      %v3183 = vunpack.c.l.b16 %v2969
      %v3184 = vunpack.c.l.b16 %v2970
      %v3185 = vunpack.c.l.b16 %v2971
      %v3186 = vunpack.c.l.b16 %v2972
      %v3187 = vunpack.c.l.b16 %v2973
      %v3188 = vpack.c.b16 %v3173, %v3172
      %v3189 = vpack.c.b16 %v3175, %v3174
      %v3190 = vpack.c.b16 %v3177, %v3176
      %v3191 = vpack.c.b16 %v3179, %v3178
      %v3192 = vpack.c.b16 %v3181, %v3180
      %v3193 = vpack.c.b16 %v3183, %v3182
      %v3194 = vpack.c.b16 %v3185, %v3184
      %v3195 = vpack.c.b16 %v3187, %v3186
      %3204 = vmatprep.subr.bf16.mxu0 0
      %3205 = vmatpush1.bf16.msra.mxu0 %v3188
      %3206 = vmatprep.subr.bf16.mxu0 0
      %3207 = vmatpush1.bf16.msra.mxu0 %v3189
      %3208 = vmatprep.subr.bf16.mxu0 0
      %3209 = vmatpush1.bf16.msra.mxu0 %v3190
      %3210 = vmatprep.subr.bf16.mxu0 0
      %3211 = vmatpush1.bf16.msra.mxu0 %v3191
      %3212 = vmatprep.subr.bf16.mxu0 0
      %3213 = vmatpush1.bf16.msra.mxu0 %v3192
      %3214 = vmatprep.subr.bf16.mxu0 0
      %3215 = vmatpush1.bf16.msra.mxu0 %v3193
      %3216 = vmatprep.subr.bf16.mxu0 0
      %3217 = vmatpush1.bf16.msra.mxu0 %v3194
      %3218 = vmatprep.subr.bf16.mxu0 0
      %3219 = vmatpush1.bf16.msra.mxu0 %v3195
      %3220 = vmatprep.subr.bf16.mxu0 0
      %3221 = vmatpush1.bf16.msra.mxu0 0
      %3222 = vmatprep.subr.bf16.mxu0 0
      %3223 = vmatpush1.bf16.msra.mxu0 0
      %3224 = vmatprep.subr.bf16.mxu0 0
      %3225 = vmatpush1.bf16.msra.mxu0 0
      %3226 = vmatprep.subr.bf16.mxu0 0
      %3227 = vmatpush1.bf16.msra.mxu0 0
      %3228 = vmatprep.subr.bf16.mxu0 0
      %3229 = vmatpush1.bf16.msra.mxu0 0
      %3230 = vmatprep.subr.bf16.mxu0 0
      %3231 = vmatpush1.bf16.msra.mxu0 0
      %3232 = vmatprep.subr.bf16.mxu0 0
      %3233 = vmatpush1.bf16.msra.mxu0 0
      %3234 = vmatprep.subr.bf16.mxu0 0
      %3235 = vmatpush1.bf16.msra.mxu0 0
      %3236 = vmatprep.mubr.bf16.mxu0 0
      %3237 = vmatmul.mubr.bf16.gmra.mrb[0].mxu0 %v3146
      %v3238 = vpop.f32.mrb[0].mxu0
      %v3239 = vadd.f32 %v3154, %v3238
      %v3240 = vpop.f32.mrb[0].mxu0
      %v3241 = vpop.f32.mrb[0].mxu0
      %v3242 = vadd.f32 %v3154, %v3241
      %v3243 = vpop.f32.mrb[0].mxu0
      %3244 = vmatprep.mubr.bf16.mxu0 0
      %3245 = vmatmul.mubr.bf16.gmra.mrb[0].mxu0 %v3147
      %v3246 = vpop.f32.mrb[0].mxu0
      %v3247 = vadd.f32 %v3154, %v3246
      %v3248 = vpop.f32.mrb[0].mxu0
      %v3249 = vpop.f32.mrb[0].mxu0
      %v3250 = vadd.f32 %v3154, %v3249
      %v3251 = vpop.f32.mrb[0].mxu0
      %3252 = vmatprep.mubr.bf16.mxu0 0
      %3253 = vmatmul.mubr.bf16.gmra.mrb[0].mxu0 %v3148
      %v3254 = vpop.f32.mrb[0].mxu0
      %v3255 = vadd.f32 %v3154, %v3254
      %v3256 = vpop.f32.mrb[0].mxu0
      %v3257 = vpop.f32.mrb[0].mxu0
      %v3258 = vadd.f32 %v3154, %v3257
      %v3259 = vpop.f32.mrb[0].mxu0
      %3260 = vmatprep.mubr.bf16.mxu0 0
      %3261 = vmatmul.mubr.bf16.gmra.mrb[0].mxu0 %v3149
      %v3262 = vpop.f32.mrb[0].mxu0
      %v3263 = vadd.f32 %v3154, %v3262
      %v3264 = vpop.f32.mrb[0].mxu0
      %v3265 = vpop.f32.mrb[0].mxu0
      %v3266 = vadd.f32 %v3154, %v3265
      %v3267 = vpop.f32.mrb[0].mxu0
      %3268 = vdwg.mxu0
      %v3269 = vadd.f32 %v2811, %v3239
      %v3270 = vadd.f32 %v2812, %v3242
      %v3271 = vadd.f32 %v2813, %v3247
      %v3272 = vadd.f32 %v2814, %v3250
      %v3273 = vadd.f32 %v2815, %v3255
      %v3274 = vadd.f32 %v2816, %v3258
      %v3275 = vadd.f32 %v2817, %v3263
      %v3276 = vadd.f32 %v2818, %v3266
      %3277 = vst.msk [vmem:[%s737] sm:$0xff] %vm749, %v3269
      %3278 = vst.msk [vmem:[%s737 + $0x8] sm:$0xff] %vm749, %v3270
      %3279 = vst.msk [vmem:[%s737 + $0x10] sm:$0xff] %vm749, %v3271
      %3280 = vst.msk [vmem:[%s737 + $0x18] sm:$0xff] %vm749, %v3272
      %3281 = vst.msk [vmem:[%s737 + $0x20] sm:$0xff] %vm749, %v3273
      %3282 = vst.msk [vmem:[%s737 + $0x28] sm:$0xff] %vm749, %v3274
      %3283 = vst.msk [vmem:[%s737 + $0x30] sm:$0xff] %vm749, %v3275
      %3284 = vst.msk [vmem:[%s737 + $0x38] sm:$0xff] %vm749, %v3276
      %p3285 = scmp.lt.s32.totalorder %s35, 1
      %s3286 = scalar_select %p3285, %s35, 1
      %s3287 = smul.addr %s3286, 8
      %s3288 = smul.addr %s3287, 8
      %s3289 = scalar_lea.vmem %s24, %s3288
      // Predicated region
      $region117: #{tpu_custom_call.1} parent=115 // pred_check
        %p3290 = pneg %p562
      $region118: #{tpu_custom_call.1} parent=115 // pred_check_branch
        %3292 = sbr.rel (%p3290) target = $region120
      $region119: #{tpu_custom_call.1} parent=115 // pred_region
        _
      $region120: #{tpu_custom_call.1} parent=115 // pred_fallthru
        _
    $region116: #{tpu_custom_call.1} parent=5 // pred_fallthru
      _
    %p3293 = scmp.le.s32.totalorder 2, %s30
    // Predicated region
    $region121: #{tpu_custom_call.1} parent=5 // pred_check
      %p3294 = pneg %p3293
    $region122: #{tpu_custom_call.1} parent=5 // pred_check_branch
      %3296 = sbr.rel (%p3294) target = $region124
    $region123: #{tpu_custom_call.1} parent=5 // pred_region
      %s3297 = ssub.s32 %s30, 2
      // Predicated region
      $region125: #{tpu_custom_call.1} parent=123 // pred_check
        %p3298 = pneg %p568
      $region126: #{tpu_custom_call.1} parent=123 // pred_check_branch
        %3300 = sbr.rel (%p3298) target = $region128
      $region127: #{tpu_custom_call.1} parent=123 // pred_region
        %p3301 = scmp.lt.s32.totalorder %s36, 1
        %s3302 = scalar_select %p3301, %s36, 1
        %s3303 = smul.addr %s3302, 8
        %s3304 = smul.addr %s3303, 8
        %s3305 = scalar_lea.vmem %s24, %s3304
      $region128: #{tpu_custom_call.1} parent=123 // pred_fallthru
        _
    $region124: #{tpu_custom_call.1} parent=5 // pred_fallthru
      _
  $region6: #{tpu_custom_call.1} parent=0 // loop_footer
    %s34 = sadd.s32 1, %s30
  $region7: #{tpu_custom_call.1} parent=0 // loop_footer_branch
    %29 = sbr.rel target = $region3
  $region8: #{tpu_custom_call.1} parent=0 // loop_exit
    _

</llo_original>
